<compile_context>
chip_gen: v5e
topology: v5e:2x2
jax: 0.10.0
libtpu: 0.0.40
codegen_flags: <defaults>
</compile_context>

<pallas_src>
import jax
import jax.numpy as jnp
import numpy as np
from jax.experimental import pallas as pl
from jax.experimental.pallas import tpu as pltpu

# --- module hyperparameters (small, consistent with the module's structure) ---
FEAT_DIM = 64
HIDDEN_DIM = 32
REPARAM_DIM = 32
LATENT_DIM = 32
CLUSTER_EMBED_DIM = 32
NEIGHBOR_MAP_DIM = 101
CLUSTER_NUM = 27
TEMP = 0.5

LANE = 128          # padded width of every weight block / activation
TB = 256            # batch tile (fills MXU M on v6e/v7x; 2x the v5e MXU M)

# --- packed-slab indices (static) ---
# weights (each padded to a (128,128) block; real values top-left, zeros else)
W_L, W_RF, W_RN, W_RC, W_F = 0, 1, 2, 3, 4
W_C1, W_C2, W_C3, W_CD = 5, 6, 7, 8
W_EMB, W_C2N = 9, 10
W_ND, W_ND1, W_ND2, W_A0, W_A1, W_ND3 = 11, 12, 13, 14, 15, 16
NUM_W = 17
# biases (each padded to a 128-lane row)
B_L, B_RF, B_RN, B_RC, B_F = 0, 1, 2, 3, 4
B_C1, B_C2, B_C3, B_CD = 5, 6, 7, 8
B_C2N, B_ND, B_ND1, B_ND2, B_A0, B_A1, B_ND3 = 9, 10, 11, 12, 13, 14, 15
NUM_B = 16


def node_decoder_kernel(x_ref, w_ref, b_ref, out_ref):
    """x_ref: (TB, 256) = [z_pad(128) | onehot_pad(128)]
       w_ref: (NUM_W, 128, 128) packed weights (zero-padded)
       b_ref: (NUM_B, 128) packed biases (zero-padded)
       out_ref: (TB, 384) = [feat(128) | neighbor_map(128) | cluster(128)]"""
    f32 = jnp.float32
    relu = lambda v: jnp.maximum(v, 0.0)

    def lin(x, wi, bi):
        # (TB,128) @ (128,128) f32 MXU matmul; zero padding keeps semantics exact.
        return jnp.dot(x, w_ref[wi], preferred_element_type=f32) + b_ref[bi:bi + 1, :]

    x = x_ref[...]
    z = x[:, 0:LANE]            # latent, valid in first 32 lanes
    oh = x[:, LANE:2 * LANE]    # one-hot cluster index, valid in first 27 lanes

    z1 = relu(lin(z, W_L, B_L))                        # latent_decode
    feat_h = relu(lin(z1, W_RF, B_RF))                 # reparam_decode chunk 0
    nb_h = relu(lin(z1, W_RN, B_RN))                   # reparam_decode chunk 1
    clus_h = relu(lin(z1, W_RC, B_RC))                 # reparam_decode chunk 2

    # feat branch
    feat = jax.nn.sigmoid(lin(feat_h, W_F, B_F))

    # cluster branch
    c = relu(lin(clus_h, W_C1, B_C1))
    c = relu(lin(c, W_C2, B_C2))
    c = relu(lin(c, W_C3, B_C3))
    c = jax.nn.sigmoid(lin(c, W_CD, B_CD) * (1.0 / TEMP))

    # neighbor branch (training path); embedding lookup = one-hot matmul
    emb = jnp.dot(oh, w_ref[W_EMB], preferred_element_type=f32)
    c2n = relu(lin(emb, W_C2N, B_C2N))
    n = relu(lin(nb_h + c2n, W_ND, B_ND))
    n = relu(lin(n, W_ND1, B_ND1))
    n = relu(lin(n, W_ND2, B_ND2))
    n = relu(lin(n, W_A0, B_A0))
    n = relu(lin(n, W_A1, B_A1))
    n = lin(n, W_ND3, B_ND3)
    nmap = jax.nn.sigmoid(n * (1.0 / TEMP))

    # lane-dense, lane-aligned unmasked stores
    out_ref[:, 0:LANE] = feat
    out_ref[:, LANE:2 * LANE] = nmap
    out_ref[:, 2 * LANE:3 * LANE] = c


# ----------------------------------------------------------------------------
# parameter construction / packing
# ----------------------------------------------------------------------------
def init_params(key):
    """Deterministic synthetic parameters.  Linear weights stored as (in, out)."""
    p = {}

    def lin_params(k, din, dout):
        kw, kb = jax.random.split(k)
        scale = 1.0 / np.sqrt(din)
        w = jax.random.uniform(kw, (din, dout), jnp.float32, -scale, scale)
        b = jax.random.uniform(kb, (1, dout), jnp.float32, -scale, scale)
        return w, b

    keys = jax.random.split(key, 16)
    p['wl'], p['bl'] = lin_params(keys[0], LATENT_DIM, REPARAM_DIM)
    p['wr'], p['br'] = lin_params(keys[1], REPARAM_DIM, HIDDEN_DIM * 3)
    p['wf'], p['bf'] = lin_params(keys[2], HIDDEN_DIM, FEAT_DIM)
    p['wc1'], p['bc1'] = lin_params(keys[3], HIDDEN_DIM, HIDDEN_DIM)
    p['wc2'], p['bc2'] = lin_params(keys[4], HIDDEN_DIM, HIDDEN_DIM)
    p['wc3'], p['bc3'] = lin_params(keys[5], HIDDEN_DIM, HIDDEN_DIM)
    p['wcd'], p['bcd'] = lin_params(keys[6], HIDDEN_DIM, CLUSTER_NUM)
    p['emb'] = jax.random.normal(keys[7], (CLUSTER_NUM, CLUSTER_EMBED_DIM), jnp.float32)
    p['wc2n'], p['bc2n'] = lin_params(keys[8], CLUSTER_EMBED_DIM, HIDDEN_DIM)
    p['wnd'], p['bnd'] = lin_params(keys[9], HIDDEN_DIM, HIDDEN_DIM * 2)
    p['wnd1'], p['bnd1'] = lin_params(keys[10], HIDDEN_DIM * 2, HIDDEN_DIM * 2)
    p['wnd2'], p['bnd2'] = lin_params(keys[11], HIDDEN_DIM * 2, HIDDEN_DIM * 2)
    p['wa0'], p['ba0'] = lin_params(keys[12], HIDDEN_DIM * 2, HIDDEN_DIM * 4)
    p['wa1'], p['ba1'] = lin_params(keys[13], HIDDEN_DIM * 4, HIDDEN_DIM * 2)
    p['wnd3'], p['bnd3'] = lin_params(keys[14], HIDDEN_DIM * 2, NEIGHBOR_MAP_DIM)
    return p


def _pad_w(w):
    return jnp.zeros((LANE, LANE), jnp.float32).at[:w.shape[0], :w.shape[1]].set(w)


def _pad_b(b):
    return jnp.zeros((LANE,), jnp.float32).at[:b.shape[1]].set(b[0])


def pack_params(p):
    h = HIDDEN_DIM
    weights = [
        p['wl'],
        p['wr'][:, 0:h], p['wr'][:, h:2 * h], p['wr'][:, 2 * h:3 * h],
        p['wf'],
        p['wc1'], p['wc2'], p['wc3'], p['wcd'],
        p['emb'], p['wc2n'],
        p['wnd'], p['wnd1'], p['wnd2'], p['wa0'], p['wa1'], p['wnd3'],
    ]
    biases = [
        p['bl'],
        p['br'][:, 0:h], p['br'][:, h:2 * h], p['br'][:, 2 * h:3 * h],
        p['bf'],
        p['bc1'], p['bc2'], p['bc3'], p['bcd'],
        p['bc2n'],
        p['bnd'], p['bnd1'], p['bnd2'], p['ba0'], p['ba1'], p['bnd3'],
    ]
    w_slab = jnp.stack([_pad_w(w) for w in weights])   # (17, 128, 128)
    b_slab = jnp.stack([_pad_b(b) for b in biases])    # (16, 128)
    return w_slab, b_slab


# ----------------------------------------------------------------------------
# forward wrapper
# ----------------------------------------------------------------------------
def node_decoder_forward(z, cluster_ind_of_neighbors, p, tb=TB):
    B = z.shape[0]
    Bp = ((B + tb - 1) // tb) * tb

    w_slab, b_slab = pack_params(p)

    # lane-padded activation slab: [z(128) | one-hot(128)]
    z_pad = jnp.zeros((Bp, LANE), jnp.float32).at[:B, :z.shape[1]].set(z)
    onehot = jax.nn.one_hot(cluster_ind_of_neighbors, LANE, dtype=jnp.float32)
    oh_pad = jnp.zeros((Bp, LANE), jnp.float32).at[:B, :].set(onehot)
    x = jnp.concatenate([z_pad, oh_pad], axis=1)       # (Bp, 256)

    grid = (Bp // tb,)
    out = pl.pallas_call(
        node_decoder_kernel,
        grid=grid,
        in_specs=[
            pl.BlockSpec((tb, 2 * LANE), lambda i: (i, 0)),
            pl.BlockSpec((NUM_W, LANE, LANE), lambda i: (0, 0, 0)),  # resident
            pl.BlockSpec((NUM_B, LANE), lambda i: (0, 0)),           # resident
        ],
        out_specs=pl.BlockSpec((tb, 3 * LANE), lambda i: (i, 0)),
        out_shape=jax.ShapeDtypeStruct((Bp, 3 * LANE), jnp.float32),
        compiler_params=pltpu.CompilerParams(
            dimension_semantics=("parallel",)),
    )(x, w_slab, b_slab)

    feat = out[:B, 0:FEAT_DIM]
    nmap = out[:B, LANE:LANE + NEIGHBOR_MAP_DIM]
    clus = out[:B, 2 * LANE:2 * LANE + CLUSTER_NUM]
    return feat, nmap, clus, 1


def node_decoder_reference(z, cluster_ind, p):
    """Pure-JAX reference mirroring the PyTorch training-mode forward."""
    relu = lambda x: jnp.maximum(x, 0.0)
    lin = lambda x, w, b: x @ w + b
    h = HIDDEN_DIM
    z1 = relu(lin(z, p['wl'], p['bl']))
    z2 = relu(lin(z1, p['wr'], p['br']))
    feat_h, nb_h, clus_h = z2[:, :h], z2[:, h:2 * h], z2[:, 2 * h:]
    feat = jax.nn.sigmoid(lin(feat_h, p['wf'], p['bf']))
    c = relu(lin(clus_h, p['wc1'], p['bc1']))
    c = relu(lin(c, p['wc2'], p['bc2']))
    c = relu(lin(c, p['wc3'], p['bc3']))
    c = jax.nn.sigmoid(lin(c, p['wcd'], p['bcd']) / TEMP)
    emb = p['emb'][cluster_ind]
    c2n = relu(lin(emb, p['wc2n'], p['bc2n']))
    n = relu(lin(nb_h + c2n, p['wnd'], p['bnd']))
    n = relu(lin(n, p['wnd1'], p['bnd1']))
    n = relu(lin(n, p['wnd2'], p['bnd2']))
    n = relu(lin(n, p['wa0'], p['ba0']))
    n = relu(lin(n, p['wa1'], p['ba1']))
    n = lin(n, p['wnd3'], p['bnd3'])
    nmap = jax.nn.sigmoid(n / TEMP)
    return feat, nmap, c


if __name__ == "__main__":
    key = jax.random.PRNGKey(0)
    kp, kz, kc = jax.random.split(key, 3)
    params = init_params(kp)

    BATCH = 512  # number of nodes; tiled into grid=(BATCH // TB,) batch tiles
    z = jax.random.normal(kz, (BATCH, LATENT_DIM), jnp.float32)
    cluster_ind = jax.random.randint(kc, (BATCH,), 0, CLUSTER_NUM, jnp.int32)

    feat, nmap, clus, flag = node_decoder_forward(z, cluster_ind, params)
    jax.block_until_ready((feat, nmap, clus))

    # sanity vs. pure-JAX reference
    feat_r, nmap_r, clus_r = node_decoder_reference(z, cluster_ind, params)
    assert feat.shape == (BATCH, FEAT_DIM)
    assert nmap.shape == (BATCH, NEIGHBOR_MAP_DIM)
    assert clus.shape == (BATCH, CLUSTER_NUM)
    assert flag == 1
    np.testing.assert_allclose(np.asarray(feat), np.asarray(feat_r), atol=2e-3)
    np.testing.assert_allclose(np.asarray(nmap), np.asarray(nmap_r), atol=2e-3)
    np.testing.assert_allclose(np.asarray(clus), np.asarray(clus_r), atol=2e-3)

    print("KERNEL_OK")
</pallas_src>

<mosaic_0001>
module attributes {stable_mosaic.version = 11 : i64} {
  func.func @node_decoder_kernel(%arg0: i32, %arg1: memref<256x256xf32, #tpu.memory_space<vmem>>, %arg2: memref<17x128x128xf32, #tpu.memory_space<vmem>>, %arg3: memref<16x128xf32, #tpu.memory_space<vmem>>, %arg4: memref<256x384xf32, #tpu.memory_space<vmem>>) attributes {dimension_semantics = [#tpu.dimension_semantics<parallel>], iteration_bounds = array<i64: 2>, scalar_prefetch = 0 : i64, scratch_operands = 0 : i64, tpu.core_type = #tpu.core_type<tc>, window_params = [{transform_indices = @transform_0, window_bounds = array<i64: 256, 256>}, {pipeline_mode = #tpu.pipeline_mode<synchronous>, transform_indices = @transform_1, window_bounds = array<i64: 17, 128, 128>}, {pipeline_mode = #tpu.pipeline_mode<synchronous>, transform_indices = @transform_2, window_bounds = array<i64: 16, 128>}, {transform_indices = @transform_3, window_bounds = array<i64: 256, 384>}]} {
    %c0 = arith.constant 0 : index
    %c0_0 = arith.constant 0 : index
    %0 = vector.load %arg1[%c0, %c0_0] : memref<256x256xf32, #tpu.memory_space<vmem>>, vector<256x256xf32>
    %1 = vector.extract_strided_slice %0 {offsets = [0, 0], sizes = [256, 128], strides = [1, 1]} : vector<256x256xf32> to vector<256x128xf32>
    %2 = vector.extract_strided_slice %0 {offsets = [0, 128], sizes = [256, 128], strides = [1, 1]} : vector<256x256xf32> to vector<256x128xf32>
    %c0_1 = arith.constant 0 : index
    %c0_2 = arith.constant 0 : index
    %c0_3 = arith.constant 0 : index
    %3 = vector.load %arg2[%c0_1, %c0_2, %c0_3] : memref<17x128x128xf32, #tpu.memory_space<vmem>>, vector<1x128x128xf32>
    %4 = vector.shape_cast %3 : vector<1x128x128xf32> to vector<128x128xf32>
    %cst = arith.constant dense<0.000000e+00> : vector<256x128xf32>
    %5 = tpu.matmul %1, %4, %cst {dimension_numbers = #tpu.dot_dimension_numbers<[1], [0], [0], [1], [0, 0, 1, 1], [], []>} : vector<256x128xf32>, vector<128x128xf32>, vector<256x128xf32> -> vector<256x128xf32>
    %c0_4 = arith.constant 0 : index
    %c0_5 = arith.constant 0 : index
    %6 = vector.load %arg3[%c0_4, %c0_5] : memref<16x128xf32, #tpu.memory_space<vmem>>, vector<1x128xf32>
    %7 = vector.broadcast %6 : vector<1x128xf32> to vector<256x128xf32>
    %8 = arith.addf %5, %7 : vector<256x128xf32>
    %cst_6 = arith.constant 0.000000e+00 : f32
    %9 = vector.broadcast %cst_6 : f32 to vector<256x128xf32>
    %10 = arith.maximumf %8, %9 : vector<256x128xf32>
    %c1 = arith.constant 1 : index
    %c0_7 = arith.constant 0 : index
    %c0_8 = arith.constant 0 : index
    %11 = vector.load %arg2[%c1, %c0_7, %c0_8] : memref<17x128x128xf32, #tpu.memory_space<vmem>>, vector<1x128x128xf32>
    %12 = vector.shape_cast %11 : vector<1x128x128xf32> to vector<128x128xf32>
    %cst_9 = arith.constant dense<0.000000e+00> : vector<256x128xf32>
    %13 = tpu.matmul %10, %12, %cst_9 {dimension_numbers = #tpu.dot_dimension_numbers<[1], [0], [0], [1], [0, 0, 1, 1], [], []>} : vector<256x128xf32>, vector<128x128xf32>, vector<256x128xf32> -> vector<256x128xf32>
    %c1_10 = arith.constant 1 : index
    %c0_11 = arith.constant 0 : index
    %14 = vector.load %arg3[%c1_10, %c0_11] : memref<16x128xf32, #tpu.memory_space<vmem>>, vector<1x128xf32>
    %15 = vector.broadcast %14 : vector<1x128xf32> to vector<256x128xf32>
    %16 = arith.addf %13, %15 : vector<256x128xf32>
    %cst_12 = arith.constant 0.000000e+00 : f32
    %17 = vector.broadcast %cst_12 : f32 to vector<256x128xf32>
    %18 = arith.maximumf %16, %17 : vector<256x128xf32>
    %c2 = arith.constant 2 : index
    %c0_13 = arith.constant 0 : index
    %c0_14 = arith.constant 0 : index
    %19 = vector.load %arg2[%c2, %c0_13, %c0_14] : memref<17x128x128xf32, #tpu.memory_space<vmem>>, vector<1x128x128xf32>
    %20 = vector.shape_cast %19 : vector<1x128x128xf32> to vector<128x128xf32>
    %cst_15 = arith.constant dense<0.000000e+00> : vector<256x128xf32>
    %21 = tpu.matmul %10, %20, %cst_15 {dimension_numbers = #tpu.dot_dimension_numbers<[1], [0], [0], [1], [0, 0, 1, 1], [], []>} : vector<256x128xf32>, vector<128x128xf32>, vector<256x128xf32> -> vector<256x128xf32>
    %c2_16 = arith.constant 2 : index
    %c0_17 = arith.constant 0 : index
    %22 = vector.load %arg3[%c2_16, %c0_17] : memref<16x128xf32, #tpu.memory_space<vmem>>, vector<1x128xf32>
    %23 = vector.broadcast %22 : vector<1x128xf32> to vector<256x128xf32>
    %24 = arith.addf %21, %23 : vector<256x128xf32>
    %cst_18 = arith.constant 0.000000e+00 : f32
    %25 = vector.broadcast %cst_18 : f32 to vector<256x128xf32>
    %26 = arith.maximumf %24, %25 : vector<256x128xf32>
    %c3 = arith.constant 3 : index
    %c0_19 = arith.constant 0 : index
    %c0_20 = arith.constant 0 : index
    %27 = vector.load %arg2[%c3, %c0_19, %c0_20] : memref<17x128x128xf32, #tpu.memory_space<vmem>>, vector<1x128x128xf32>
    %28 = vector.shape_cast %27 : vector<1x128x128xf32> to vector<128x128xf32>
    %cst_21 = arith.constant dense<0.000000e+00> : vector<256x128xf32>
    %29 = tpu.matmul %10, %28, %cst_21 {dimension_numbers = #tpu.dot_dimension_numbers<[1], [0], [0], [1], [0, 0, 1, 1], [], []>} : vector<256x128xf32>, vector<128x128xf32>, vector<256x128xf32> -> vector<256x128xf32>
    %c3_22 = arith.constant 3 : index
    %c0_23 = arith.constant 0 : index
    %30 = vector.load %arg3[%c3_22, %c0_23] : memref<16x128xf32, #tpu.memory_space<vmem>>, vector<1x128xf32>
    %31 = vector.broadcast %30 : vector<1x128xf32> to vector<256x128xf32>
    %32 = arith.addf %29, %31 : vector<256x128xf32>
    %cst_24 = arith.constant 0.000000e+00 : f32
    %33 = vector.broadcast %cst_24 : f32 to vector<256x128xf32>
    %34 = arith.maximumf %32, %33 : vector<256x128xf32>
    %c4 = arith.constant 4 : index
    %c0_25 = arith.constant 0 : index
    %c0_26 = arith.constant 0 : index
    %35 = vector.load %arg2[%c4, %c0_25, %c0_26] : memref<17x128x128xf32, #tpu.memory_space<vmem>>, vector<1x128x128xf32>
    %36 = vector.shape_cast %35 : vector<1x128x128xf32> to vector<128x128xf32>
    %cst_27 = arith.constant dense<0.000000e+00> : vector<256x128xf32>
    %37 = tpu.matmul %18, %36, %cst_27 {dimension_numbers = #tpu.dot_dimension_numbers<[1], [0], [0], [1], [0, 0, 1, 1], [], []>} : vector<256x128xf32>, vector<128x128xf32>, vector<256x128xf32> -> vector<256x128xf32>
    %c4_28 = arith.constant 4 : index
    %c0_29 = arith.constant 0 : index
    %38 = vector.load %arg3[%c4_28, %c0_29] : memref<16x128xf32, #tpu.memory_space<vmem>>, vector<1x128xf32>
    %39 = vector.broadcast %38 : vector<1x128xf32> to vector<256x128xf32>
    %40 = arith.addf %37, %39 : vector<256x128xf32>
    %41 = arith.negf %40 : vector<256x128xf32>
    %42 = math.exp %41 : vector<256x128xf32>
    %cst_30 = arith.constant 1.000000e+00 : f32
    %43 = vector.broadcast %cst_30 : f32 to vector<256x128xf32>
    %44 = arith.addf %43, %42 : vector<256x128xf32>
    %45 = arith.divf %43, %44 : vector<256x128xf32>
    %c5 = arith.constant 5 : index
    %c0_31 = arith.constant 0 : index
    %c0_32 = arith.constant 0 : index
    %46 = vector.load %arg2[%c5, %c0_31, %c0_32] : memref<17x128x128xf32, #tpu.memory_space<vmem>>, vector<1x128x128xf32>
    %47 = vector.shape_cast %46 : vector<1x128x128xf32> to vector<128x128xf32>
    %cst_33 = arith.constant dense<0.000000e+00> : vector<256x128xf32>
    %48 = tpu.matmul %34, %47, %cst_33 {dimension_numbers = #tpu.dot_dimension_numbers<[1], [0], [0], [1], [0, 0, 1, 1], [], []>} : vector<256x128xf32>, vector<128x128xf32>, vector<256x128xf32> -> vector<256x128xf32>
    %c5_34 = arith.constant 5 : index
    %c0_35 = arith.constant 0 : index
    %49 = vector.load %arg3[%c5_34, %c0_35] : memref<16x128xf32, #tpu.memory_space<vmem>>, vector<1x128xf32>
    %50 = vector.broadcast %49 : vector<1x128xf32> to vector<256x128xf32>
    %51 = arith.addf %48, %50 : vector<256x128xf32>
    %cst_36 = arith.constant 0.000000e+00 : f32
    %52 = vector.broadcast %cst_36 : f32 to vector<256x128xf32>
    %53 = arith.maximumf %51, %52 : vector<256x128xf32>
    %c6 = arith.constant 6 : index
    %c0_37 = arith.constant 0 : index
    %c0_38 = arith.constant 0 : index
    %54 = vector.load %arg2[%c6, %c0_37, %c0_38] : memref<17x128x128xf32, #tpu.memory_space<vmem>>, vector<1x128x128xf32>
    %55 = vector.shape_cast %54 : vector<1x128x128xf32> to vector<128x128xf32>
    %cst_39 = arith.constant dense<0.000000e+00> : vector<256x128xf32>
    %56 = tpu.matmul %53, %55, %cst_39 {dimension_numbers = #tpu.dot_dimension_numbers<[1], [0], [0], [1], [0, 0, 1, 1], [], []>} : vector<256x128xf32>, vector<128x128xf32>, vector<256x128xf32> -> vector<256x128xf32>
    %c6_40 = arith.constant 6 : index
    %c0_41 = arith.constant 0 : index
    %57 = vector.load %arg3[%c6_40, %c0_41] : memref<16x128xf32, #tpu.memory_space<vmem>>, vector<1x128xf32>
    %58 = vector.broadcast %57 : vector<1x128xf32> to vector<256x128xf32>
    %59 = arith.addf %56, %58 : vector<256x128xf32>
    %cst_42 = arith.constant 0.000000e+00 : f32
    %60 = vector.broadcast %cst_42 : f32 to vector<256x128xf32>
    %61 = arith.maximumf %59, %60 : vector<256x128xf32>
    %c7 = arith.constant 7 : index
    %c0_43 = arith.constant 0 : index
    %c0_44 = arith.constant 0 : index
    %62 = vector.load %arg2[%c7, %c0_43, %c0_44] : memref<17x128x128xf32, #tpu.memory_space<vmem>>, vector<1x128x128xf32>
    %63 = vector.shape_cast %62 : vector<1x128x128xf32> to vector<128x128xf32>
    %cst_45 = arith.constant dense<0.000000e+00> : vector<256x128xf32>
    %64 = tpu.matmul %61, %63, %cst_45 {dimension_numbers = #tpu.dot_dimension_numbers<[1], [0], [0], [1], [0, 0, 1, 1], [], []>} : vector<256x128xf32>, vector<128x128xf32>, vector<256x128xf32> -> vector<256x128xf32>
    %c7_46 = arith.constant 7 : index
    %c0_47 = arith.constant 0 : index
    %65 = vector.load %arg3[%c7_46, %c0_47] : memref<16x128xf32, #tpu.memory_space<vmem>>, vector<1x128xf32>
    %66 = vector.broadcast %65 : vector<1x128xf32> to vector<256x128xf32>
    %67 = arith.addf %64, %66 : vector<256x128xf32>
    %cst_48 = arith.constant 0.000000e+00 : f32
    %68 = vector.broadcast %cst_48 : f32 to vector<256x128xf32>
    %69 = arith.maximumf %67, %68 : vector<256x128xf32>
    %c8 = arith.constant 8 : index
    %c0_49 = arith.constant 0 : index
    %c0_50 = arith.constant 0 : index
    %70 = vector.load %arg2[%c8, %c0_49, %c0_50] : memref<17x128x128xf32, #tpu.memory_space<vmem>>, vector<1x128x128xf32>
    %71 = vector.shape_cast %70 : vector<1x128x128xf32> to vector<128x128xf32>
    %cst_51 = arith.constant dense<0.000000e+00> : vector<256x128xf32>
    %72 = tpu.matmul %69, %71, %cst_51 {dimension_numbers = #tpu.dot_dimension_numbers<[1], [0], [0], [1], [0, 0, 1, 1], [], []>} : vector<256x128xf32>, vector<128x128xf32>, vector<256x128xf32> -> vector<256x128xf32>
    %c8_52 = arith.constant 8 : index
    %c0_53 = arith.constant 0 : index
    %73 = vector.load %arg3[%c8_52, %c0_53] : memref<16x128xf32, #tpu.memory_space<vmem>>, vector<1x128xf32>
    %74 = vector.broadcast %73 : vector<1x128xf32> to vector<256x128xf32>
    %75 = arith.addf %72, %74 : vector<256x128xf32>
    %cst_54 = arith.constant 2.000000e+00 : f32
    %76 = vector.broadcast %cst_54 : f32 to vector<256x128xf32>
    %77 = arith.mulf %75, %76 : vector<256x128xf32>
    %78 = arith.negf %77 : vector<256x128xf32>
    %79 = math.exp %78 : vector<256x128xf32>
    %cst_55 = arith.constant 1.000000e+00 : f32
    %80 = vector.broadcast %cst_55 : f32 to vector<256x128xf32>
    %81 = arith.addf %80, %79 : vector<256x128xf32>
    %82 = arith.divf %80, %81 : vector<256x128xf32>
    %c9 = arith.constant 9 : index
    %c0_56 = arith.constant 0 : index
    %c0_57 = arith.constant 0 : index
    %83 = vector.load %arg2[%c9, %c0_56, %c0_57] : memref<17x128x128xf32, #tpu.memory_space<vmem>>, vector<1x128x128xf32>
    %84 = vector.shape_cast %83 : vector<1x128x128xf32> to vector<128x128xf32>
    %cst_58 = arith.constant dense<0.000000e+00> : vector<256x128xf32>
    %85 = tpu.matmul %2, %84, %cst_58 {dimension_numbers = #tpu.dot_dimension_numbers<[1], [0], [0], [1], [0, 0, 1, 1], [], []>} : vector<256x128xf32>, vector<128x128xf32>, vector<256x128xf32> -> vector<256x128xf32>
    %c10 = arith.constant 10 : index
    %c0_59 = arith.constant 0 : index
    %c0_60 = arith.constant 0 : index
    %86 = vector.load %arg2[%c10, %c0_59, %c0_60] : memref<17x128x128xf32, #tpu.memory_space<vmem>>, vector<1x128x128xf32>
    %87 = vector.shape_cast %86 : vector<1x128x128xf32> to vector<128x128xf32>
    %cst_61 = arith.constant dense<0.000000e+00> : vector<256x128xf32>
    %88 = tpu.matmul %85, %87, %cst_61 {dimension_numbers = #tpu.dot_dimension_numbers<[1], [0], [0], [1], [0, 0, 1, 1], [], []>} : vector<256x128xf32>, vector<128x128xf32>, vector<256x128xf32> -> vector<256x128xf32>
    %c9_62 = arith.constant 9 : index
    %c0_63 = arith.constant 0 : index
    %89 = vector.load %arg3[%c9_62, %c0_63] : memref<16x128xf32, #tpu.memory_space<vmem>>, vector<1x128xf32>
    %90 = vector.broadcast %89 : vector<1x128xf32> to vector<256x128xf32>
    %91 = arith.addf %88, %90 : vector<256x128xf32>
    %cst_64 = arith.constant 0.000000e+00 : f32
    %92 = vector.broadcast %cst_64 : f32 to vector<256x128xf32>
    %93 = arith.maximumf %91, %92 : vector<256x128xf32>
    %94 = arith.addf %26, %93 : vector<256x128xf32>
    %c11 = arith.constant 11 : index
    %c0_65 = arith.constant 0 : index
    %c0_66 = arith.constant 0 : index
    %95 = vector.load %arg2[%c11, %c0_65, %c0_66] : memref<17x128x128xf32, #tpu.memory_space<vmem>>, vector<1x128x128xf32>
    %96 = vector.shape_cast %95 : vector<1x128x128xf32> to vector<128x128xf32>
    %cst_67 = arith.constant dense<0.000000e+00> : vector<256x128xf32>
    %97 = tpu.matmul %94, %96, %cst_67 {dimension_numbers = #tpu.dot_dimension_numbers<[1], [0], [0], [1], [0, 0, 1, 1], [], []>} : vector<256x128xf32>, vector<128x128xf32>, vector<256x128xf32> -> vector<256x128xf32>
    %c10_68 = arith.constant 10 : index
    %c0_69 = arith.constant 0 : index
    %98 = vector.load %arg3[%c10_68, %c0_69] : memref<16x128xf32, #tpu.memory_space<vmem>>, vector<1x128xf32>
    %99 = vector.broadcast %98 : vector<1x128xf32> to vector<256x128xf32>
    %100 = arith.addf %97, %99 : vector<256x128xf32>
    %cst_70 = arith.constant 0.000000e+00 : f32
    %101 = vector.broadcast %cst_70 : f32 to vector<256x128xf32>
    %102 = arith.maximumf %100, %101 : vector<256x128xf32>
    %c12 = arith.constant 12 : index
    %c0_71 = arith.constant 0 : index
    %c0_72 = arith.constant 0 : index
    %103 = vector.load %arg2[%c12, %c0_71, %c0_72] : memref<17x128x128xf32, #tpu.memory_space<vmem>>, vector<1x128x128xf32>
    %104 = vector.shape_cast %103 : vector<1x128x128xf32> to vector<128x128xf32>
    %cst_73 = arith.constant dense<0.000000e+00> : vector<256x128xf32>
    %105 = tpu.matmul %102, %104, %cst_73 {dimension_numbers = #tpu.dot_dimension_numbers<[1], [0], [0], [1], [0, 0, 1, 1], [], []>} : vector<256x128xf32>, vector<128x128xf32>, vector<256x128xf32> -> vector<256x128xf32>
    %c11_74 = arith.constant 11 : index
    %c0_75 = arith.constant 0 : index
    %106 = vector.load %arg3[%c11_74, %c0_75] : memref<16x128xf32, #tpu.memory_space<vmem>>, vector<1x128xf32>
    %107 = vector.broadcast %106 : vector<1x128xf32> to vector<256x128xf32>
    %108 = arith.addf %105, %107 : vector<256x128xf32>
    %cst_76 = arith.constant 0.000000e+00 : f32
    %109 = vector.broadcast %cst_76 : f32 to vector<256x128xf32>
    %110 = arith.maximumf %108, %109 : vector<256x128xf32>
    %c13 = arith.constant 13 : index
    %c0_77 = arith.constant 0 : index
    %c0_78 = arith.constant 0 : index
    %111 = vector.load %arg2[%c13, %c0_77, %c0_78] : memref<17x128x128xf32, #tpu.memory_space<vmem>>, vector<1x128x128xf32>
    %112 = vector.shape_cast %111 : vector<1x128x128xf32> to vector<128x128xf32>
    %cst_79 = arith.constant dense<0.000000e+00> : vector<256x128xf32>
    %113 = tpu.matmul %110, %112, %cst_79 {dimension_numbers = #tpu.dot_dimension_numbers<[1], [0], [0], [1], [0, 0, 1, 1], [], []>} : vector<256x128xf32>, vector<128x128xf32>, vector<256x128xf32> -> vector<256x128xf32>
    %c12_80 = arith.constant 12 : index
    %c0_81 = arith.constant 0 : index
    %114 = vector.load %arg3[%c12_80, %c0_81] : memref<16x128xf32, #tpu.memory_space<vmem>>, vector<1x128xf32>
    %115 = vector.broadcast %114 : vector<1x128xf32> to vector<256x128xf32>
    %116 = arith.addf %113, %115 : vector<256x128xf32>
    %cst_82 = arith.constant 0.000000e+00 : f32
    %117 = vector.broadcast %cst_82 : f32 to vector<256x128xf32>
    %118 = arith.maximumf %116, %117 : vector<256x128xf32>
    %c14 = arith.constant 14 : index
    %c0_83 = arith.constant 0 : index
    %c0_84 = arith.constant 0 : index
    %119 = vector.load %arg2[%c14, %c0_83, %c0_84] : memref<17x128x128xf32, #tpu.memory_space<vmem>>, vector<1x128x128xf32>
    %120 = vector.shape_cast %119 : vector<1x128x128xf32> to vector<128x128xf32>
    %cst_85 = arith.constant dense<0.000000e+00> : vector<256x128xf32>
    %121 = tpu.matmul %118, %120, %cst_85 {dimension_numbers = #tpu.dot_dimension_numbers<[1], [0], [0], [1], [0, 0, 1, 1], [], []>} : vector<256x128xf32>, vector<128x128xf32>, vector<256x128xf32> -> vector<256x128xf32>
    %c13_86 = arith.constant 13 : index
    %c0_87 = arith.constant 0 : index
    %122 = vector.load %arg3[%c13_86, %c0_87] : memref<16x128xf32, #tpu.memory_space<vmem>>, vector<1x128xf32>
    %123 = vector.broadcast %122 : vector<1x128xf32> to vector<256x128xf32>
    %124 = arith.addf %121, %123 : vector<256x128xf32>
    %cst_88 = arith.constant 0.000000e+00 : f32
    %125 = vector.broadcast %cst_88 : f32 to vector<256x128xf32>
    %126 = arith.maximumf %124, %125 : vector<256x128xf32>
    %c15 = arith.constant 15 : index
    %c0_89 = arith.constant 0 : index
    %c0_90 = arith.constant 0 : index
    %127 = vector.load %arg2[%c15, %c0_89, %c0_90] : memref<17x128x128xf32, #tpu.memory_space<vmem>>, vector<1x128x128xf32>
    %128 = vector.shape_cast %127 : vector<1x128x128xf32> to vector<128x128xf32>
    %cst_91 = arith.constant dense<0.000000e+00> : vector<256x128xf32>
    %129 = tpu.matmul %126, %128, %cst_91 {dimension_numbers = #tpu.dot_dimension_numbers<[1], [0], [0], [1], [0, 0, 1, 1], [], []>} : vector<256x128xf32>, vector<128x128xf32>, vector<256x128xf32> -> vector<256x128xf32>
    %c14_92 = arith.constant 14 : index
    %c0_93 = arith.constant 0 : index
    %130 = vector.load %arg3[%c14_92, %c0_93] : memref<16x128xf32, #tpu.memory_space<vmem>>, vector<1x128xf32>
    %131 = vector.broadcast %130 : vector<1x128xf32> to vector<256x128xf32>
    %132 = arith.addf %129, %131 : vector<256x128xf32>
    %cst_94 = arith.constant 0.000000e+00 : f32
    %133 = vector.broadcast %cst_94 : f32 to vector<256x128xf32>
    %134 = arith.maximumf %132, %133 : vector<256x128xf32>
    %c16 = arith.constant 16 : index
    %c0_95 = arith.constant 0 : index
    %c0_96 = arith.constant 0 : index
    %135 = vector.load %arg2[%c16, %c0_95, %c0_96] : memref<17x128x128xf32, #tpu.memory_space<vmem>>, vector<1x128x128xf32>
    %136 = vector.shape_cast %135 : vector<1x128x128xf32> to vector<128x128xf32>
    %cst_97 = arith.constant dense<0.000000e+00> : vector<256x128xf32>
    %137 = tpu.matmul %134, %136, %cst_97 {dimension_numbers = #tpu.dot_dimension_numbers<[1], [0], [0], [1], [0, 0, 1, 1], [], []>} : vector<256x128xf32>, vector<128x128xf32>, vector<256x128xf32> -> vector<256x128xf32>
    %c15_98 = arith.constant 15 : index
    %c0_99 = arith.constant 0 : index
    %138 = vector.load %arg3[%c15_98, %c0_99] : memref<16x128xf32, #tpu.memory_space<vmem>>, vector<1x128xf32>
    %139 = vector.broadcast %138 : vector<1x128xf32> to vector<256x128xf32>
    %140 = arith.addf %137, %139 : vector<256x128xf32>
    %cst_100 = arith.constant 2.000000e+00 : f32
    %141 = vector.broadcast %cst_100 : f32 to vector<256x128xf32>
    %142 = arith.mulf %140, %141 : vector<256x128xf32>
    %143 = arith.negf %142 : vector<256x128xf32>
    %144 = math.exp %143 : vector<256x128xf32>
    %cst_101 = arith.constant 1.000000e+00 : f32
    %145 = vector.broadcast %cst_101 : f32 to vector<256x128xf32>
    %146 = arith.addf %145, %144 : vector<256x128xf32>
    %147 = arith.divf %145, %146 : vector<256x128xf32>
    %c0_102 = arith.constant 0 : index
    %c0_103 = arith.constant 0 : index
    %148 = vector.load %arg4[%c0_102, %c0_103] : memref<256x384xf32, #tpu.memory_space<vmem>>, vector<256x128xf32>
    tpu.vector_store %arg4[%c0_102, %c0_103], %45 {strides = array<i32>} : memref<256x384xf32, #tpu.memory_space<vmem>>, vector<256x128xf32>,
    %c0_104 = arith.constant 0 : index
    %c128 = arith.constant 128 : index
    %149 = vector.load %arg4[%c0_104, %c128] : memref<256x384xf32, #tpu.memory_space<vmem>>, vector<256x128xf32>
    tpu.vector_store %arg4[%c0_104, %c128], %147 {strides = array<i32>} : memref<256x384xf32, #tpu.memory_space<vmem>>, vector<256x128xf32>,
    %c0_105 = arith.constant 0 : index
    %c256 = arith.constant 256 : index
    %150 = vector.load %arg4[%c0_105, %c256] : memref<256x384xf32, #tpu.memory_space<vmem>>, vector<256x128xf32>
    tpu.vector_store %arg4[%c0_105, %c256], %82 {strides = array<i32>} : memref<256x384xf32, #tpu.memory_space<vmem>>, vector<256x128xf32>,
    return
  }
  func.func @transform_0(%arg0: i32) -> (i32, i32) {
    %c0_i32 = arith.constant 0 : i32
    %c0_i32_0 = arith.constant 0 : i32
    return %arg0, %c0_i32 : i32, i32
  }
  func.func @transform_1(%arg0: i32) -> (i32, i32, i32) {
    %c0_i32 = arith.constant 0 : i32
    %c0_i32_0 = arith.constant 0 : i32
    %c0_i32_1 = arith.constant 0 : i32
    %c0_i32_2 = arith.constant 0 : i32
    return %c0_i32, %c0_i32_0, %c0_i32_1 : i32, i32, i32
  }
  func.func @transform_2(%arg0: i32) -> (i32, i32) {
    %c0_i32 = arith.constant 0 : i32
    %c0_i32_0 = arith.constant 0 : i32
    %c0_i32_1 = arith.constant 0 : i32
    return %c0_i32, %c0_i32_0 : i32, i32
  }
  func.func @transform_3(%arg0: i32) -> (i32, i32) {
    %c0_i32 = arith.constant 0 : i32
    %c0_i32_0 = arith.constant 0 : i32
    return %arg0, %c0_i32 : i32, i32
  }
}

</mosaic_0001>

<llo_original>
// kernel: tpu_custom_call.1
$region0: #{tpu_custom_call.1}
  #allocation0 [shape = 'u32[]', space=smem, size = 0x4, offset = 0x4, fixed_abs, tag = 'smem constant byte address 0x4 - core index']
  #allocation1 [shape = 'u32[72,128]{1,0:T(1,128)}', space=vmem, size = 0x9000, scoped, tag = 'internal scratch']
  %s0 = inlined_call_operand.hbm [shape: f32[512,256], index: 0, kind: input, shape index: {}]
  %s1 = inlined_call_operand.hbm [shape: f32[17,128,128], index: 1, kind: input, shape index: {}]
  %s2 = inlined_call_operand.hbm [shape: f32[16,128], index: 2, kind: input, shape index: {}]
  %s3 = inlined_call_operand.hbm [shape: f32[512,384], index: 3, kind: output, shape index: {}]
  %s4 = sld [smem:[#allocation0]]
  $region57: #{tpu_custom_call.1} parent=0
    _
  %s6 = ssub.s32 1, %s4
  %s7 = scalar_select 0, %s6, %s4
  $region1: #{tpu_custom_call.1} parent=0
    #allocation2 [shape = 'u8[524288]{0}', space=vmem, size = 0x80000, scoped, tag = 'input window, operand 0']
    #allocation3 [shape = 's32[2]{0}', space=sflag, size = 0x8, scoped, tag = 'scoped memory for tpu_custom_call.1']
    #allocation4 [shape = 's32[2]{0}', space=sflag, size = 0x8, scoped, tag = 'scoped memory for tpu_custom_call.1']
    #allocation5 [shape = 'u8[1114112]{0}', space=vmem, size = 0x110000, scoped, tag = 'input window, operand 1, single buffered']
    #allocation6 [shape = 's32[1]{0}', space=sflag, size = 0x4, scoped, tag = 'scoped memory for tpu_custom_call.1']
    #allocation7 [shape = 'u8[8192]{0}', space=vmem, size = 0x2000, scoped, tag = 'input window, operand 2, single buffered']
    #allocation8 [shape = 'u8[786432]{0}', space=vmem, size = 0xc0000, scoped, tag = 'output window, operand 0']
    %8 = vsyncpa [#allocation3], 0
    %s9 = scalar_lea.sflag [#allocation3], 1
    %10 = vsyncpa %s9, 0
    %11 = vsyncpa [#allocation6], 0
    %12 = vsyncpa [#allocation4], 0
    %s13 = scalar_lea.sflag [#allocation4], 1
    %14 = vsyncpa %s13, 0
    loop: start=0, step=1, limit=4
    $region2: #{tpu_custom_call.1} parent=1 // loop_pre_header
      _
    $region3: #{tpu_custom_call.1} parent=1 // loop_header
      %s16 = sphi 0, %s20
      %p17 = scmp.ge.s32.totalorder %s16, 4
      %s26 = sphi 0, %s28
      %s29 = sphi 0, %s26
      %s30 = sphi 0, %s29
      %s46 = sphi 0, %s30
      %s50 = sphi 0, %s50
      %s52 = sphi 0, %s50
      %s53 = sphi 0, %s52
      %s67 = sphi 0, %s53
      %s71 = sphi 0, %s71
      %s73 = sphi 0, %s71
      %s74 = sphi 0, %s73
      %s88 = sphi 0, %s74
      %s94 = sphi 0, %s96
      %s97 = sphi 0, %s94
      %s98 = sphi 0, %s97
      %s114 = sphi 0, %s98
    $region4: #{tpu_custom_call.1} parent=1 // loop_header_branch
      %19 = sbr.rel (%p17) target = $region8
    $region5: #{tpu_custom_call.1} parent=1 // loop_body
      %s21 = ssub.s32 %s16, 1
      %s22 = ssub.s32 %s16, 2
      %s23 = sadd.s32 %s16, 1
      %s24 = ssub.s32 %s16, %s23
      %p25 = scmp.eq.s32.totalorder %s24, 0
      %s27 = sadd.s32 %s26, 1
      %s28 = scalar_select %p25, %s26, %s27
      %p31 = pneg %p25
      %p32 = scmp.eq.s32.totalorder %s16, 1
      %p33 = por %p31, %p32
      %p34 = scmp.ne.s32.totalorder %s26, %s29
      %p35 = scmp.eq.s32.totalorder %s16, 0
      %p36 = por %p34, %p35
      %p37 = scmp.ne.s32.totalorder %s26, %s29
      %p38 = scmp.eq.s32.totalorder %s21, 1
      %p39 = por %p37, %p38
      %p40 = scmp.ne.s32.totalorder %s29, %s30
      %p41 = scmp.eq.s32.totalorder %s21, 0
      %p42 = por %p40, %p41
      %p43 = scmp.ne.s32.totalorder %s29, %s30
      %p44 = scmp.eq.s32.totalorder %s22, 1
      %p45 = por %p43, %p44
      %p47 = scmp.ne.s32.totalorder %s30, %s46
      %p48 = scmp.eq.s32.totalorder %s22, 0
      %p49 = por %p47, %p48
      %s51 = sadd.s32 %s50, 1
      %p54 = scmp.eq.s32.totalorder %s16, 1
      %p55 = scmp.ne.s32.totalorder %s50, %s52
      %p56 = scmp.eq.s32.totalorder %s16, 0
      %p57 = por %p55, %p56
      %p58 = scmp.ne.s32.totalorder %s50, %s52
      %p59 = scmp.eq.s32.totalorder %s21, 1
      %p60 = por %p58, %p59
      %p61 = scmp.ne.s32.totalorder %s52, %s53
      %p62 = scmp.eq.s32.totalorder %s21, 0
      %p63 = por %p61, %p62
      %p64 = scmp.ne.s32.totalorder %s52, %s53
      %p65 = scmp.eq.s32.totalorder %s22, 1
      %p66 = por %p64, %p65
      %p68 = scmp.ne.s32.totalorder %s53, %s67
      %p69 = scmp.eq.s32.totalorder %s22, 0
      %p70 = por %p68, %p69
      %s72 = sadd.s32 %s71, 1
      %p75 = scmp.eq.s32.totalorder %s16, 1
      %p76 = scmp.ne.s32.totalorder %s71, %s73
      %p77 = scmp.eq.s32.totalorder %s16, 0
      %p78 = por %p76, %p77
      %p79 = scmp.ne.s32.totalorder %s71, %s73
      %p80 = scmp.eq.s32.totalorder %s21, 1
      %p81 = por %p79, %p80
      %p82 = scmp.ne.s32.totalorder %s73, %s74
      %p83 = scmp.eq.s32.totalorder %s21, 0
      %p84 = por %p82, %p83
      %p85 = scmp.ne.s32.totalorder %s73, %s74
      %p86 = scmp.eq.s32.totalorder %s22, 1
      %p87 = por %p85, %p86
      %p89 = scmp.ne.s32.totalorder %s74, %s88
      %p90 = scmp.eq.s32.totalorder %s22, 0
      %p91 = por %p89, %p90
      %s92 = ssub.s32 %s16, %s23
      %p93 = scmp.eq.s32.totalorder %s92, 0
      %s95 = sadd.s32 %s94, 1
      %s96 = scalar_select %p93, %s94, %s95
      %p99 = pneg %p93
      %p100 = scmp.eq.s32.totalorder %s16, 1
      %p101 = por %p99, %p100
      %p102 = scmp.ne.s32.totalorder %s94, %s97
      %p103 = scmp.eq.s32.totalorder %s16, 0
      %p104 = por %p102, %p103
      %p105 = scmp.ne.s32.totalorder %s94, %s97
      %p106 = scmp.eq.s32.totalorder %s21, 1
      %p107 = por %p105, %p106
      %p108 = scmp.ne.s32.totalorder %s97, %s98
      %p109 = scmp.eq.s32.totalorder %s21, 0
      %p110 = por %p108, %p109
      %p111 = scmp.ne.s32.totalorder %s97, %s98
      %p112 = scmp.eq.s32.totalorder %s22, 1
      %p113 = por %p111, %p112
      %p115 = scmp.ne.s32.totalorder %s98, %s114
      %p116 = scmp.eq.s32.totalorder %s22, 0
      %p117 = por %p115, %p116
      %p118 = scmp.le.s32.totalorder 1, %s16
      %p119 = scmp.lt.s32.totalorder %s16, 3
      %p120 = pnand %p118, %p119
      %p121 = pneg %p120
      // Predicated region
      $region9: #{tpu_custom_call.1} parent=5 // pred_check
        _
      $region10: #{tpu_custom_call.1} parent=5 // pred_check_branch
        %123 = sbr.rel (%p120) target = $region12
      $region11: #{tpu_custom_call.1} parent=5 // pred_region
        %s124 = ssub.s32 %s16, 1
        // Predicated region
        $region13: #{tpu_custom_call.1} parent=11 // pred_check
          %p125 = pneg %p63
        $region14: #{tpu_custom_call.1} parent=11 // pred_check_branch
          %127 = sbr.rel (%p125) target = $region16
        $region15: #{tpu_custom_call.1} parent=11 // pred_region
          %129 = vsyncadd [#allocation6], 0
          %s130 = sshll.u32 %s1, 4
          %s131 = int_to_ptr.hbm [resolvable:$true] %s130
          %s132 = sshll.u32 [#allocation5], 4
          %s133 = int_to_ptr.vmem [resolvable:$true] %s132
          %138 = dma.hbm_to_vmem [thread:$0]  %s131, 34816, %s133, [#allocation6], 128, 128, 8
        $region16: #{tpu_custom_call.1} parent=11 // pred_fallthru
          _
        // Predicated region
        $region17: #{tpu_custom_call.1} parent=11 // pred_check
          %p139 = pneg %p84
        $region18: #{tpu_custom_call.1} parent=11 // pred_check_branch
          %141 = sbr.rel (%p139) target = $region20
        $region19: #{tpu_custom_call.1} parent=11 // pred_region
          %143 = vsyncadd [#allocation6], 0
          %s144 = sshll.u32 %s2, 4
          %s145 = int_to_ptr.hbm [resolvable:$true] %s144
          %s146 = sshll.u32 [#allocation7], 4
          %s147 = int_to_ptr.vmem [resolvable:$true] %s146
          %152 = dma.hbm_to_vmem [thread:$0]  %s145, 256, %s147, [#allocation6], 128, 128, 8
        $region20: #{tpu_custom_call.1} parent=11 // pred_fallthru
          _
      $region12: #{tpu_custom_call.1} parent=5 // pred_fallthru
        _
      %p153 = scmp.lt.s32.totalorder %s16, 2
      // Predicated region
      $region21: #{tpu_custom_call.1} parent=5 // pred_check
        %p154 = pneg %p153
      $region22: #{tpu_custom_call.1} parent=5 // pred_check_branch
        %156 = sbr.rel (%p154) target = $region24
      $region23: #{tpu_custom_call.1} parent=5 // pred_region
        // Predicated region
        $region25: #{tpu_custom_call.1} parent=23 // pred_check
          %p157 = pneg %p36
        $region26: #{tpu_custom_call.1} parent=23 // pred_check_branch
          %159 = sbr.rel (%p157) target = $region28
        $region27: #{tpu_custom_call.1} parent=23 // pred_region
          %s160 = sand.u32 %s26, 1
          %s161 = scalar_lea.sflag [#allocation3], %s160
          %s162 = sand.u32 %s26, 1
          %s163 = smul.addr %s162, 512
          %s164 = scalar_lea.vmem [#allocation2], %s163
          %s165 = smul.u32 32, %s16
          %167 = vsyncadd %s161, 0
          %s168 = smul.addr %s165, 2
          %s169 = smul.addr %s168, 8
          %s170 = scalar_lea.hbm %s0, %s169
          %s171 = sshll.u32 %s170, 4
          %s172 = int_to_ptr.hbm [resolvable:$true] %s171
          %s173 = sshll.u32 %s164, 4
          %s174 = int_to_ptr.vmem [resolvable:$true] %s173
          %179 = dma.hbm_to_vmem [thread:$0]  %s172, 8192, %s174, %s161, 256, 256, 16
        $region28: #{tpu_custom_call.1} parent=23 // pred_fallthru
          _
      $region24: #{tpu_custom_call.1} parent=5 // pred_fallthru
        _
      %p180 = scmp.le.s32.totalorder 1, %s16
      %p181 = scmp.lt.s32.totalorder %s16, 3
      %p182 = pnand %p180, %p181
      %p183 = pneg %p182
      // Predicated region
      $region29: #{tpu_custom_call.1} parent=5 // pred_check
        _
      $region30: #{tpu_custom_call.1} parent=5 // pred_check_branch
        %185 = sbr.rel (%p182) target = $region32
      $region31: #{tpu_custom_call.1} parent=5 // pred_region
        %s186 = ssub.s32 %s16, 1
        %s187 = sand.u32 %s29, 1
        %s188 = scalar_lea.sflag [#allocation3], %s187
        %s189 = sand.u32 %s29, 1
        %s190 = smul.addr %s189, 512
        %s191 = scalar_lea.vmem [#allocation2], %s190
        // Predicated region
        $region33: #{tpu_custom_call.1} parent=31 // pred_check
          %p192 = pneg %p42
        $region34: #{tpu_custom_call.1} parent=31 // pred_check_branch
          %194 = sbr.rel (%p192) target = $region36
        $region35: #{tpu_custom_call.1} parent=31 // pred_region
          %196 = dma.done %s188, 8192
        $region36: #{tpu_custom_call.1} parent=31 // pred_fallthru
          _
        // Predicated region
        $region37: #{tpu_custom_call.1} parent=31 // pred_check
          %p197 = pneg %p63
        $region38: #{tpu_custom_call.1} parent=31 // pred_check_branch
          %199 = sbr.rel (%p197) target = $region40
        $region39: #{tpu_custom_call.1} parent=31 // pred_region
          %201 = dma.done [#allocation6], 34816
        $region40: #{tpu_custom_call.1} parent=31 // pred_fallthru
          _
        // Predicated region
        $region41: #{tpu_custom_call.1} parent=31 // pred_check
          %p202 = pneg %p84
        $region42: #{tpu_custom_call.1} parent=31 // pred_check_branch
          %204 = sbr.rel (%p202) target = $region44
        $region43: #{tpu_custom_call.1} parent=31 // pred_region
          %206 = dma.done [#allocation6], 256
        $region44: #{tpu_custom_call.1} parent=31 // pred_fallthru
          _
        %s207 = sand.u32 %s29, 1
        %s208 = scalar_lea.sflag [#allocation3], %s207
        %s209 = sand.u32 %s29, 1
        %s210 = smul.addr %s209, 512
        %s211 = scalar_lea.vmem [#allocation2], %s210
        %p212 = pneg %p42
        %p213 = pneg %p39
        %p214 = pneg %p63
        %p215 = pneg %p60
        %p216 = pneg %p84
        %p217 = pneg %p81
        %p218 = pneg %p110
        %p219 = pneg %p107
        %s220 = sand.u32 %s97, 1
        %s221 = scalar_lea.sflag [#allocation4], %s220
        %s222 = sand.u32 %s97, 1
        %s223 = smul.addr %s222, 768
        %s224 = scalar_lea.vmem [#allocation8], %s223
        %s225 = smul.u32 32, %s21
        %s226 = smul.u32 32, %s21
        %v227 = vld [vmem:[%s191] sm:$0xff]
        %v228 = vld [vmem:[%s191 + $0x8] sm:$0xff]
        %v229 = vld [vmem:[%s191 + $0x10] sm:$0xff]
        %v230 = vld [vmem:[%s191 + $0x18] sm:$0xff]
        %v231 = vld [vmem:[%s191 + $0x20] sm:$0xff]
        %v232 = vld [vmem:[%s191 + $0x28] sm:$0xff]
        %v233 = vld [vmem:[%s191 + $0x30] sm:$0xff]
        %v234 = vld [vmem:[%s191 + $0x38] sm:$0xff]
        %v235 = vld [vmem:[%s191 + $0x40] sm:$0xff]
        %v236 = vld [vmem:[%s191 + $0x48] sm:$0xff]
        %v237 = vld [vmem:[%s191 + $0x50] sm:$0xff]
        %v238 = vld [vmem:[%s191 + $0x58] sm:$0xff]
        %v239 = vld [vmem:[%s191 + $0x60] sm:$0xff]
        %v240 = vld [vmem:[%s191 + $0x68] sm:$0xff]
        %v241 = vld [vmem:[%s191 + $0x70] sm:$0xff]
        %v242 = vld [vmem:[%s191 + $0x78] sm:$0xff]
        %v243 = vld [vmem:[%s191 + $0x80] sm:$0xff]
        %v244 = vld [vmem:[%s191 + $0x88] sm:$0xff]
        %v245 = vld [vmem:[%s191 + $0x90] sm:$0xff]
        %v246 = vld [vmem:[%s191 + $0x98] sm:$0xff]
        %v247 = vld [vmem:[%s191 + $0xa0] sm:$0xff]
        %v248 = vld [vmem:[%s191 + $0xa8] sm:$0xff]
        %v249 = vld [vmem:[%s191 + $0xb0] sm:$0xff]
        %v250 = vld [vmem:[%s191 + $0xb8] sm:$0xff]
        %v251 = vld [vmem:[%s191 + $0xc0] sm:$0xff]
        %v252 = vld [vmem:[%s191 + $0xc8] sm:$0xff]
        %v253 = vld [vmem:[%s191 + $0xd0] sm:$0xff]
        %v254 = vld [vmem:[%s191 + $0xd8] sm:$0xff]
        %v255 = vld [vmem:[%s191 + $0xe0] sm:$0xff]
        %v256 = vld [vmem:[%s191 + $0xe8] sm:$0xff]
        %v257 = vld [vmem:[%s191 + $0xf0] sm:$0xff]
        %v258 = vld [vmem:[%s191 + $0xf8] sm:$0xff]
        %v259 = vld [vmem:[%s191 + $0x100] sm:$0xff]
        %v260 = vld [vmem:[%s191 + $0x108] sm:$0xff]
        %v261 = vld [vmem:[%s191 + $0x110] sm:$0xff]
        %v262 = vld [vmem:[%s191 + $0x118] sm:$0xff]
        %v263 = vld [vmem:[%s191 + $0x120] sm:$0xff]
        %v264 = vld [vmem:[%s191 + $0x128] sm:$0xff]
        %v265 = vld [vmem:[%s191 + $0x130] sm:$0xff]
        %v266 = vld [vmem:[%s191 + $0x138] sm:$0xff]
        %v267 = vld [vmem:[%s191 + $0x140] sm:$0xff]
        %v268 = vld [vmem:[%s191 + $0x148] sm:$0xff]
        %v269 = vld [vmem:[%s191 + $0x150] sm:$0xff]
        %v270 = vld [vmem:[%s191 + $0x158] sm:$0xff]
        %v271 = vld [vmem:[%s191 + $0x160] sm:$0xff]
        %v272 = vld [vmem:[%s191 + $0x168] sm:$0xff]
        %v273 = vld [vmem:[%s191 + $0x170] sm:$0xff]
        %v274 = vld [vmem:[%s191 + $0x178] sm:$0xff]
        %v275 = vld [vmem:[%s191 + $0x180] sm:$0xff]
        %v276 = vld [vmem:[%s191 + $0x188] sm:$0xff]
        %v277 = vld [vmem:[%s191 + $0x190] sm:$0xff]
        %v278 = vld [vmem:[%s191 + $0x198] sm:$0xff]
        %v279 = vld [vmem:[%s191 + $0x1a0] sm:$0xff]
        %v280 = vld [vmem:[%s191 + $0x1a8] sm:$0xff]
        %v281 = vld [vmem:[%s191 + $0x1b0] sm:$0xff]
        %v282 = vld [vmem:[%s191 + $0x1b8] sm:$0xff]
        %v283 = vld [vmem:[%s191 + $0x1c0] sm:$0xff]
        %v284 = vld [vmem:[%s191 + $0x1c8] sm:$0xff]
        %v285 = vld [vmem:[%s191 + $0x1d0] sm:$0xff]
        %v286 = vld [vmem:[%s191 + $0x1d8] sm:$0xff]
        %v287 = vld [vmem:[%s191 + $0x1e0] sm:$0xff]
        %v288 = vld [vmem:[%s191 + $0x1e8] sm:$0xff]
        %v289 = vld [vmem:[%s191 + $0x1f0] sm:$0xff]
        %v290 = vld [vmem:[%s191 + $0x1f8] sm:$0xff]
        %v291 = vld [vmem:[#allocation5] sm:$0xff]
        %v292 = vld [vmem:[#allocation5 + $0x8] sm:$0xff]
        %v293 = vld [vmem:[#allocation5 + $0x10] sm:$0xff]
        %v294 = vld [vmem:[#allocation5 + $0x18] sm:$0xff]
        %v295 = vld [vmem:[#allocation5 + $0x20] sm:$0xff]
        %v296 = vld [vmem:[#allocation5 + $0x28] sm:$0xff]
        %v297 = vld [vmem:[#allocation5 + $0x30] sm:$0xff]
        %v298 = vld [vmem:[#allocation5 + $0x38] sm:$0xff]
        %v299 = vld [vmem:[#allocation5 + $0x40] sm:$0xff]
        %v300 = vld [vmem:[#allocation5 + $0x48] sm:$0xff]
        %v301 = vld [vmem:[#allocation5 + $0x50] sm:$0xff]
        %v302 = vld [vmem:[#allocation5 + $0x58] sm:$0xff]
        %v303 = vld [vmem:[#allocation5 + $0x60] sm:$0xff]
        %v304 = vld [vmem:[#allocation5 + $0x68] sm:$0xff]
        %v305 = vld [vmem:[#allocation5 + $0x70] sm:$0xff]
        %v306 = vld [vmem:[#allocation5 + $0x78] sm:$0xff]
        %v307 = vld [vmem:[#allocation7] sm:$0x1]
        %v308 = vperm.slane %v307, 0
        %309 = vmatpush.msra.mxu0 %v306
        %310 = vmatpush.msra.mxu0 %v305
        %311 = vmatpush.msra.mxu0 %v304
        %312 = vmatpush.msra.mxu0 %v303
        %313 = vmatpush.msra.mxu0 %v302
        %314 = vmatpush.msra.mxu0 %v301
        %315 = vmatpush.msra.mxu0 %v300
        %316 = vmatpush.msra.mxu0 %v299
        %317 = vmatpush.msra.mxu0 %v298
        %318 = vmatpush.msra.mxu0 %v297
        %319 = vmatpush.msra.mxu0 %v296
        %320 = vmatpush.msra.mxu0 %v295
        %321 = vmatpush.msra.mxu0 %v294
        %322 = vmatpush.msra.mxu0 %v293
        %323 = vmatpush.msra.mxu0 %v292
        %324 = vmatpush.msra.mxu0 %v291
        %325 = vmatmul.f32.gmra.mxu0 %v227
        %v326 = vpop.f32.mrf.mxu0
        %v327 = vadd.f32 %v308, %v326
        %328 = vmatmul.f32.gmra.mxu0 %v229
        %v329 = vpop.f32.mrf.mxu0
        %v330 = vadd.f32 %v308, %v329
        %331 = vmatmul.f32.gmra.mxu0 %v231
        %v332 = vpop.f32.mrf.mxu0
        %v333 = vadd.f32 %v308, %v332
        %334 = vmatmul.f32.gmra.mxu0 %v233
        %v335 = vpop.f32.mrf.mxu0
        %v336 = vadd.f32 %v308, %v335
        %337 = vmatmul.f32.gmra.mxu0 %v235
        %v338 = vpop.f32.mrf.mxu0
        %v339 = vadd.f32 %v308, %v338
        %340 = vmatmul.f32.gmra.mxu0 %v237
        %v341 = vpop.f32.mrf.mxu0
        %v342 = vadd.f32 %v308, %v341
        %343 = vmatmul.f32.gmra.mxu0 %v239
        %v344 = vpop.f32.mrf.mxu0
        %v345 = vadd.f32 %v308, %v344
        %346 = vmatmul.f32.gmra.mxu0 %v241
        %v347 = vpop.f32.mrf.mxu0
        %v348 = vadd.f32 %v308, %v347
        %349 = vmatmul.f32.gmra.mxu0 %v243
        %v350 = vpop.f32.mrf.mxu0
        %v351 = vadd.f32 %v308, %v350
        %352 = vmatmul.f32.gmra.mxu0 %v245
        %v353 = vpop.f32.mrf.mxu0
        %v354 = vadd.f32 %v308, %v353
        %355 = vmatmul.f32.gmra.mxu0 %v247
        %v356 = vpop.f32.mrf.mxu0
        %v357 = vadd.f32 %v308, %v356
        %358 = vmatmul.f32.gmra.mxu0 %v249
        %v359 = vpop.f32.mrf.mxu0
        %v360 = vadd.f32 %v308, %v359
        %361 = vmatmul.f32.gmra.mxu0 %v251
        %v362 = vpop.f32.mrf.mxu0
        %v363 = vadd.f32 %v308, %v362
        %364 = vmatmul.f32.gmra.mxu0 %v253
        %v365 = vpop.f32.mrf.mxu0
        %v366 = vadd.f32 %v308, %v365
        %367 = vmatmul.f32.gmra.mxu0 %v255
        %v368 = vpop.f32.mrf.mxu0
        %v369 = vadd.f32 %v308, %v368
        %370 = vmatmul.f32.gmra.mxu0 %v257
        %v371 = vpop.f32.mrf.mxu0
        %v372 = vadd.f32 %v308, %v371
        %373 = vmatmul.f32.gmra.mxu0 %v259
        %v374 = vpop.f32.mrf.mxu0
        %v375 = vadd.f32 %v308, %v374
        %376 = vmatmul.f32.gmra.mxu0 %v261
        %v377 = vpop.f32.mrf.mxu0
        %v378 = vadd.f32 %v308, %v377
        %379 = vmatmul.f32.gmra.mxu0 %v263
        %v380 = vpop.f32.mrf.mxu0
        %v381 = vadd.f32 %v308, %v380
        %382 = vmatmul.f32.gmra.mxu0 %v265
        %v383 = vpop.f32.mrf.mxu0
        %v384 = vadd.f32 %v308, %v383
        %385 = vmatmul.f32.gmra.mxu0 %v267
        %v386 = vpop.f32.mrf.mxu0
        %v387 = vadd.f32 %v308, %v386
        %388 = vmatmul.f32.gmra.mxu0 %v269
        %v389 = vpop.f32.mrf.mxu0
        %v390 = vadd.f32 %v308, %v389
        %391 = vmatmul.f32.gmra.mxu0 %v271
        %v392 = vpop.f32.mrf.mxu0
        %v393 = vadd.f32 %v308, %v392
        %394 = vmatmul.f32.gmra.mxu0 %v273
        %v395 = vpop.f32.mrf.mxu0
        %v396 = vadd.f32 %v308, %v395
        %397 = vmatmul.f32.gmra.mxu0 %v275
        %v398 = vpop.f32.mrf.mxu0
        %v399 = vadd.f32 %v308, %v398
        %400 = vmatmul.f32.gmra.mxu0 %v277
        %v401 = vpop.f32.mrf.mxu0
        %v402 = vadd.f32 %v308, %v401
        %403 = vmatmul.f32.gmra.mxu0 %v279
        %v404 = vpop.f32.mrf.mxu0
        %v405 = vadd.f32 %v308, %v404
        %406 = vmatmul.f32.gmra.mxu0 %v281
        %v407 = vpop.f32.mrf.mxu0
        %v408 = vadd.f32 %v308, %v407
        %409 = vmatmul.f32.gmra.mxu0 %v283
        %v410 = vpop.f32.mrf.mxu0
        %v411 = vadd.f32 %v308, %v410
        %412 = vmatmul.f32.gmra.mxu0 %v285
        %v413 = vpop.f32.mrf.mxu0
        %v414 = vadd.f32 %v308, %v413
        %415 = vmatmul.f32.gmra.mxu0 %v287
        %v416 = vpop.f32.mrf.mxu0
        %v417 = vadd.f32 %v308, %v416
        %418 = vmatmul.f32.gmra.mxu0 %v289
        %v419 = vpop.f32.mrf.mxu0
        %v420 = vadd.f32 %v308, %v419
        %421 = vdwg.mxu0
        %v422 = vmax.f32 %v327, 0.0
        %v423 = vmax.f32 %v330, 0.0
        %v424 = vmax.f32 %v333, 0.0
        %v425 = vmax.f32 %v336, 0.0
        %v426 = vmax.f32 %v339, 0.0
        %v427 = vmax.f32 %v342, 0.0
        %v428 = vmax.f32 %v345, 0.0
        %v429 = vmax.f32 %v348, 0.0
        %v430 = vmax.f32 %v351, 0.0
        %v431 = vmax.f32 %v354, 0.0
        %v432 = vmax.f32 %v357, 0.0
        %v433 = vmax.f32 %v360, 0.0
        %v434 = vmax.f32 %v363, 0.0
        %v435 = vmax.f32 %v366, 0.0
        %v436 = vmax.f32 %v369, 0.0
        %v437 = vmax.f32 %v372, 0.0
        %v438 = vmax.f32 %v375, 0.0
        %v439 = vmax.f32 %v378, 0.0
        %v440 = vmax.f32 %v381, 0.0
        %v441 = vmax.f32 %v384, 0.0
        %v442 = vmax.f32 %v387, 0.0
        %v443 = vmax.f32 %v390, 0.0
        %v444 = vmax.f32 %v393, 0.0
        %v445 = vmax.f32 %v396, 0.0
        %v446 = vmax.f32 %v399, 0.0
        %v447 = vmax.f32 %v402, 0.0
        %v448 = vmax.f32 %v405, 0.0
        %v449 = vmax.f32 %v408, 0.0
        %v450 = vmax.f32 %v411, 0.0
        %v451 = vmax.f32 %v414, 0.0
        %v452 = vmax.f32 %v417, 0.0
        %v453 = vmax.f32 %v420, 0.0
        %s454 = scalar_lea.vmem [#allocation5], 128
        %v455 = vld [vmem:[%s454] sm:$0xff]
        %v456 = vld [vmem:[%s454 + $0x8] sm:$0xff]
        %v457 = vld [vmem:[%s454 + $0x10] sm:$0xff]
        %v458 = vld [vmem:[%s454 + $0x18] sm:$0xff]
        %v459 = vld [vmem:[%s454 + $0x20] sm:$0xff]
        %v460 = vld [vmem:[%s454 + $0x28] sm:$0xff]
        %v461 = vld [vmem:[%s454 + $0x30] sm:$0xff]
        %v462 = vld [vmem:[%s454 + $0x38] sm:$0xff]
        %v463 = vld [vmem:[%s454 + $0x40] sm:$0xff]
        %v464 = vld [vmem:[%s454 + $0x48] sm:$0xff]
        %v465 = vld [vmem:[%s454 + $0x50] sm:$0xff]
        %v466 = vld [vmem:[%s454 + $0x58] sm:$0xff]
        %v467 = vld [vmem:[%s454 + $0x60] sm:$0xff]
        %v468 = vld [vmem:[%s454 + $0x68] sm:$0xff]
        %v469 = vld [vmem:[%s454 + $0x70] sm:$0xff]
        %v470 = vld [vmem:[%s454 + $0x78] sm:$0xff]
        %v471 = vld [vmem:[#allocation7 + $0x1] sm:$0x1]
        %v472 = vperm.slane %v471, 0
        %473 = vmatpush.msra.mxu0 %v470
        %474 = vmatpush.msra.mxu0 %v469
        %475 = vmatpush.msra.mxu0 %v468
        %476 = vmatpush.msra.mxu0 %v467
        %477 = vmatpush.msra.mxu0 %v466
        %478 = vmatpush.msra.mxu0 %v465
        %479 = vmatpush.msra.mxu0 %v464
        %480 = vmatpush.msra.mxu0 %v463
        %481 = vmatpush.msra.mxu0 %v462
        %482 = vmatpush.msra.mxu0 %v461
        %483 = vmatpush.msra.mxu0 %v460
        %484 = vmatpush.msra.mxu0 %v459
        %485 = vmatpush.msra.mxu0 %v458
        %486 = vmatpush.msra.mxu0 %v457
        %487 = vmatpush.msra.mxu0 %v456
        %488 = vmatpush.msra.mxu0 %v455
        %489 = vmatmul.f32.gmra.mxu0 %v422
        %v490 = vpop.f32.mrf.mxu0
        %v491 = vadd.f32 %v472, %v490
        %492 = vmatmul.f32.gmra.mxu0 %v423
        %v493 = vpop.f32.mrf.mxu0
        %v494 = vadd.f32 %v472, %v493
        %495 = vmatmul.f32.gmra.mxu0 %v424
        %v496 = vpop.f32.mrf.mxu0
        %v497 = vadd.f32 %v472, %v496
        %498 = vmatmul.f32.gmra.mxu0 %v425
        %v499 = vpop.f32.mrf.mxu0
        %v500 = vadd.f32 %v472, %v499
        %501 = vmatmul.f32.gmra.mxu0 %v426
        %v502 = vpop.f32.mrf.mxu0
        %v503 = vadd.f32 %v472, %v502
        %504 = vmatmul.f32.gmra.mxu0 %v427
        %v505 = vpop.f32.mrf.mxu0
        %v506 = vadd.f32 %v472, %v505
        %507 = vmatmul.f32.gmra.mxu0 %v428
        %v508 = vpop.f32.mrf.mxu0
        %v509 = vadd.f32 %v472, %v508
        %510 = vmatmul.f32.gmra.mxu0 %v429
        %v511 = vpop.f32.mrf.mxu0
        %v512 = vadd.f32 %v472, %v511
        %513 = vmatmul.f32.gmra.mxu0 %v430
        %v514 = vpop.f32.mrf.mxu0
        %v515 = vadd.f32 %v472, %v514
        %516 = vmatmul.f32.gmra.mxu0 %v431
        %v517 = vpop.f32.mrf.mxu0
        %v518 = vadd.f32 %v472, %v517
        %519 = vmatmul.f32.gmra.mxu0 %v432
        %v520 = vpop.f32.mrf.mxu0
        %v521 = vadd.f32 %v472, %v520
        %522 = vmatmul.f32.gmra.mxu0 %v433
        %v523 = vpop.f32.mrf.mxu0
        %v524 = vadd.f32 %v472, %v523
        %525 = vmatmul.f32.gmra.mxu0 %v434
        %v526 = vpop.f32.mrf.mxu0
        %v527 = vadd.f32 %v472, %v526
        %528 = vmatmul.f32.gmra.mxu0 %v435
        %v529 = vpop.f32.mrf.mxu0
        %v530 = vadd.f32 %v472, %v529
        %531 = vmatmul.f32.gmra.mxu0 %v436
        %v532 = vpop.f32.mrf.mxu0
        %v533 = vadd.f32 %v472, %v532
        %534 = vmatmul.f32.gmra.mxu0 %v437
        %v535 = vpop.f32.mrf.mxu0
        %v536 = vadd.f32 %v472, %v535
        %537 = vmatmul.f32.gmra.mxu0 %v438
        %v538 = vpop.f32.mrf.mxu0
        %v539 = vadd.f32 %v472, %v538
        %540 = vmatmul.f32.gmra.mxu0 %v439
        %v541 = vpop.f32.mrf.mxu0
        %v542 = vadd.f32 %v472, %v541
        %543 = vmatmul.f32.gmra.mxu0 %v440
        %v544 = vpop.f32.mrf.mxu0
        %v545 = vadd.f32 %v472, %v544
        %546 = vmatmul.f32.gmra.mxu0 %v441
        %v547 = vpop.f32.mrf.mxu0
        %v548 = vadd.f32 %v472, %v547
        %549 = vmatmul.f32.gmra.mxu0 %v442
        %v550 = vpop.f32.mrf.mxu0
        %v551 = vadd.f32 %v472, %v550
        %552 = vmatmul.f32.gmra.mxu0 %v443
        %v553 = vpop.f32.mrf.mxu0
        %v554 = vadd.f32 %v472, %v553
        %555 = vmatmul.f32.gmra.mxu0 %v444
        %v556 = vpop.f32.mrf.mxu0
        %v557 = vadd.f32 %v472, %v556
        %558 = vmatmul.f32.gmra.mxu0 %v445
        %v559 = vpop.f32.mrf.mxu0
        %v560 = vadd.f32 %v472, %v559
        %561 = vmatmul.f32.gmra.mxu0 %v446
        %v562 = vpop.f32.mrf.mxu0
        %v563 = vadd.f32 %v472, %v562
        %564 = vmatmul.f32.gmra.mxu0 %v447
        %v565 = vpop.f32.mrf.mxu0
        %v566 = vadd.f32 %v472, %v565
        %567 = vmatmul.f32.gmra.mxu0 %v448
        %v568 = vpop.f32.mrf.mxu0
        %v569 = vadd.f32 %v472, %v568
        %570 = vmatmul.f32.gmra.mxu0 %v449
        %v571 = vpop.f32.mrf.mxu0
        %v572 = vadd.f32 %v472, %v571
        %573 = vmatmul.f32.gmra.mxu0 %v450
        %v574 = vpop.f32.mrf.mxu0
        %v575 = vadd.f32 %v472, %v574
        %576 = vmatmul.f32.gmra.mxu0 %v451
        %v577 = vpop.f32.mrf.mxu0
        %v578 = vadd.f32 %v472, %v577
        %579 = vmatmul.f32.gmra.mxu0 %v452
        %v580 = vpop.f32.mrf.mxu0
        %v581 = vadd.f32 %v472, %v580
        %582 = vmatmul.f32.gmra.mxu0 %v453
        %v583 = vpop.f32.mrf.mxu0
        %v584 = vadd.f32 %v472, %v583
        %585 = vdwg.mxu0
        %v586 = vmax.f32 %v491, 0.0
        %v587 = vmax.f32 %v494, 0.0
        %v588 = vmax.f32 %v497, 0.0
        %v589 = vmax.f32 %v500, 0.0
        %v590 = vmax.f32 %v503, 0.0
        %v591 = vmax.f32 %v506, 0.0
        %v592 = vmax.f32 %v509, 0.0
        %v593 = vmax.f32 %v512, 0.0
        %v594 = vmax.f32 %v515, 0.0
        %v595 = vmax.f32 %v518, 0.0
        %v596 = vmax.f32 %v521, 0.0
        %v597 = vmax.f32 %v524, 0.0
        %v598 = vmax.f32 %v527, 0.0
        %v599 = vmax.f32 %v530, 0.0
        %v600 = vmax.f32 %v533, 0.0
        %v601 = vmax.f32 %v536, 0.0
        %v602 = vmax.f32 %v539, 0.0
        %v603 = vmax.f32 %v542, 0.0
        %v604 = vmax.f32 %v545, 0.0
        %v605 = vmax.f32 %v548, 0.0
        %v606 = vmax.f32 %v551, 0.0
        %v607 = vmax.f32 %v554, 0.0
        %v608 = vmax.f32 %v557, 0.0
        %v609 = vmax.f32 %v560, 0.0
        %v610 = vmax.f32 %v563, 0.0
        %v611 = vmax.f32 %v566, 0.0
        %v612 = vmax.f32 %v569, 0.0
        %v613 = vmax.f32 %v572, 0.0
        %v614 = vmax.f32 %v575, 0.0
        %v615 = vmax.f32 %v578, 0.0
        %v616 = vmax.f32 %v581, 0.0
        %v617 = vmax.f32 %v584, 0.0
        %s618 = scalar_lea.vmem [#allocation5], 256
        %v619 = vld [vmem:[%s618] sm:$0xff]
        %v620 = vld [vmem:[%s618 + $0x8] sm:$0xff]
        %v621 = vld [vmem:[%s618 + $0x10] sm:$0xff]
        %v622 = vld [vmem:[%s618 + $0x18] sm:$0xff]
        %v623 = vld [vmem:[%s618 + $0x20] sm:$0xff]
        %v624 = vld [vmem:[%s618 + $0x28] sm:$0xff]
        %v625 = vld [vmem:[%s618 + $0x30] sm:$0xff]
        %v626 = vld [vmem:[%s618 + $0x38] sm:$0xff]
        %v627 = vld [vmem:[%s618 + $0x40] sm:$0xff]
        %v628 = vld [vmem:[%s618 + $0x48] sm:$0xff]
        %v629 = vld [vmem:[%s618 + $0x50] sm:$0xff]
        %v630 = vld [vmem:[%s618 + $0x58] sm:$0xff]
        %v631 = vld [vmem:[%s618 + $0x60] sm:$0xff]
        %v632 = vld [vmem:[%s618 + $0x68] sm:$0xff]
        %v633 = vld [vmem:[%s618 + $0x70] sm:$0xff]
        %v634 = vld [vmem:[%s618 + $0x78] sm:$0xff]
        %v635 = vld [vmem:[#allocation7 + $0x2] sm:$0x1]
        %v636 = vperm.slane %v635, 0
        %637 = vmatpush.msra.mxu0 %v634
        %638 = vmatpush.msra.mxu0 %v633
        %639 = vmatpush.msra.mxu0 %v632
        %640 = vmatpush.msra.mxu0 %v631
        %641 = vmatpush.msra.mxu0 %v630
        %642 = vmatpush.msra.mxu0 %v629
        %643 = vmatpush.msra.mxu0 %v628
        %644 = vmatpush.msra.mxu0 %v627
        %645 = vmatpush.msra.mxu0 %v626
        %646 = vmatpush.msra.mxu0 %v625
        %647 = vmatpush.msra.mxu0 %v624
        %648 = vmatpush.msra.mxu0 %v623
        %649 = vmatpush.msra.mxu0 %v622
        %650 = vmatpush.msra.mxu0 %v621
        %651 = vmatpush.msra.mxu0 %v620
        %652 = vmatpush.msra.mxu0 %v619
        %653 = vmatmul.f32.gmra.mxu0 %v422
        %v654 = vpop.f32.mrf.mxu0
        %v655 = vadd.f32 %v636, %v654
        %656 = vmatmul.f32.gmra.mxu0 %v423
        %v657 = vpop.f32.mrf.mxu0
        %v658 = vadd.f32 %v636, %v657
        %659 = vmatmul.f32.gmra.mxu0 %v424
        %v660 = vpop.f32.mrf.mxu0
        %v661 = vadd.f32 %v636, %v660
        %662 = vmatmul.f32.gmra.mxu0 %v425
        %v663 = vpop.f32.mrf.mxu0
        %v664 = vadd.f32 %v636, %v663
        %665 = vmatmul.f32.gmra.mxu0 %v426
        %v666 = vpop.f32.mrf.mxu0
        %v667 = vadd.f32 %v636, %v666
        %668 = vmatmul.f32.gmra.mxu0 %v427
        %v669 = vpop.f32.mrf.mxu0
        %v670 = vadd.f32 %v636, %v669
        %671 = vmatmul.f32.gmra.mxu0 %v428
        %v672 = vpop.f32.mrf.mxu0
        %v673 = vadd.f32 %v636, %v672
        %674 = vmatmul.f32.gmra.mxu0 %v429
        %v675 = vpop.f32.mrf.mxu0
        %v676 = vadd.f32 %v636, %v675
        %677 = vmatmul.f32.gmra.mxu0 %v430
        %v678 = vpop.f32.mrf.mxu0
        %v679 = vadd.f32 %v636, %v678
        %680 = vmatmul.f32.gmra.mxu0 %v431
        %v681 = vpop.f32.mrf.mxu0
        %v682 = vadd.f32 %v636, %v681
        %683 = vmatmul.f32.gmra.mxu0 %v432
        %v684 = vpop.f32.mrf.mxu0
        %v685 = vadd.f32 %v636, %v684
        %686 = vmatmul.f32.gmra.mxu0 %v433
        %v687 = vpop.f32.mrf.mxu0
        %v688 = vadd.f32 %v636, %v687
        %689 = vmatmul.f32.gmra.mxu0 %v434
        %v690 = vpop.f32.mrf.mxu0
        %v691 = vadd.f32 %v636, %v690
        %692 = vmatmul.f32.gmra.mxu0 %v435
        %v693 = vpop.f32.mrf.mxu0
        %v694 = vadd.f32 %v636, %v693
        %695 = vmatmul.f32.gmra.mxu0 %v436
        %v696 = vpop.f32.mrf.mxu0
        %v697 = vadd.f32 %v636, %v696
        %698 = vmatmul.f32.gmra.mxu0 %v437
        %v699 = vpop.f32.mrf.mxu0
        %v700 = vadd.f32 %v636, %v699
        %701 = vmatmul.f32.gmra.mxu0 %v438
        %v702 = vpop.f32.mrf.mxu0
        %v703 = vadd.f32 %v636, %v702
        %704 = vmatmul.f32.gmra.mxu0 %v439
        %v705 = vpop.f32.mrf.mxu0
        %v706 = vadd.f32 %v636, %v705
        %707 = vmatmul.f32.gmra.mxu0 %v440
        %v708 = vpop.f32.mrf.mxu0
        %v709 = vadd.f32 %v636, %v708
        %710 = vmatmul.f32.gmra.mxu0 %v441
        %v711 = vpop.f32.mrf.mxu0
        %v712 = vadd.f32 %v636, %v711
        %713 = vmatmul.f32.gmra.mxu0 %v442
        %v714 = vpop.f32.mrf.mxu0
        %v715 = vadd.f32 %v636, %v714
        %716 = vmatmul.f32.gmra.mxu0 %v443
        %v717 = vpop.f32.mrf.mxu0
        %v718 = vadd.f32 %v636, %v717
        %719 = vmatmul.f32.gmra.mxu0 %v444
        %v720 = vpop.f32.mrf.mxu0
        %v721 = vadd.f32 %v636, %v720
        %722 = vmatmul.f32.gmra.mxu0 %v445
        %v723 = vpop.f32.mrf.mxu0
        %v724 = vadd.f32 %v636, %v723
        %725 = vmatmul.f32.gmra.mxu0 %v446
        %v726 = vpop.f32.mrf.mxu0
        %v727 = vadd.f32 %v636, %v726
        %728 = vmatmul.f32.gmra.mxu0 %v447
        %v729 = vpop.f32.mrf.mxu0
        %v730 = vadd.f32 %v636, %v729
        %731 = vmatmul.f32.gmra.mxu0 %v448
        %v732 = vpop.f32.mrf.mxu0
        %v733 = vadd.f32 %v636, %v732
        %734 = vmatmul.f32.gmra.mxu0 %v449
        %v735 = vpop.f32.mrf.mxu0
        %v736 = vadd.f32 %v636, %v735
        %737 = vmatmul.f32.gmra.mxu0 %v450
        %v738 = vpop.f32.mrf.mxu0
        %v739 = vadd.f32 %v636, %v738
        %740 = vmatmul.f32.gmra.mxu0 %v451
        %v741 = vpop.f32.mrf.mxu0
        %v742 = vadd.f32 %v636, %v741
        %743 = vmatmul.f32.gmra.mxu0 %v452
        %v744 = vpop.f32.mrf.mxu0
        %v745 = vadd.f32 %v636, %v744
        %746 = vmatmul.f32.gmra.mxu0 %v453
        %v747 = vpop.f32.mrf.mxu0
        %v748 = vadd.f32 %v636, %v747
        %749 = vdwg.mxu0
        %v750 = vmax.f32 %v655, 0.0
        %v751 = vmax.f32 %v658, 0.0
        %v752 = vmax.f32 %v661, 0.0
        %v753 = vmax.f32 %v664, 0.0
        %v754 = vmax.f32 %v667, 0.0
        %v755 = vmax.f32 %v670, 0.0
        %v756 = vmax.f32 %v673, 0.0
        %v757 = vmax.f32 %v676, 0.0
        %v758 = vmax.f32 %v679, 0.0
        %v759 = vmax.f32 %v682, 0.0
        %v760 = vmax.f32 %v685, 0.0
        %v761 = vmax.f32 %v688, 0.0
        %v762 = vmax.f32 %v691, 0.0
        %v763 = vmax.f32 %v694, 0.0
        %v764 = vmax.f32 %v697, 0.0
        %v765 = vmax.f32 %v700, 0.0
        %v766 = vmax.f32 %v703, 0.0
        %v767 = vmax.f32 %v706, 0.0
        %v768 = vmax.f32 %v709, 0.0
        %v769 = vmax.f32 %v712, 0.0
        %v770 = vmax.f32 %v715, 0.0
        %v771 = vmax.f32 %v718, 0.0
        %v772 = vmax.f32 %v721, 0.0
        %v773 = vmax.f32 %v724, 0.0
        %v774 = vmax.f32 %v727, 0.0
        %v775 = vmax.f32 %v730, 0.0
        %v776 = vmax.f32 %v733, 0.0
        %v777 = vmax.f32 %v736, 0.0
        %v778 = vmax.f32 %v739, 0.0
        %v779 = vmax.f32 %v742, 0.0
        %v780 = vmax.f32 %v745, 0.0
        %v781 = vmax.f32 %v748, 0.0
        %s782 = scalar_lea.vmem [#allocation5], 384
        %v783 = vld [vmem:[%s782] sm:$0xff]
        %v784 = vld [vmem:[%s782 + $0x8] sm:$0xff]
        %v785 = vld [vmem:[%s782 + $0x10] sm:$0xff]
        %v786 = vld [vmem:[%s782 + $0x18] sm:$0xff]
        %v787 = vld [vmem:[%s782 + $0x20] sm:$0xff]
        %v788 = vld [vmem:[%s782 + $0x28] sm:$0xff]
        %v789 = vld [vmem:[%s782 + $0x30] sm:$0xff]
        %v790 = vld [vmem:[%s782 + $0x38] sm:$0xff]
        %v791 = vld [vmem:[%s782 + $0x40] sm:$0xff]
        %v792 = vld [vmem:[%s782 + $0x48] sm:$0xff]
        %v793 = vld [vmem:[%s782 + $0x50] sm:$0xff]
        %v794 = vld [vmem:[%s782 + $0x58] sm:$0xff]
        %v795 = vld [vmem:[%s782 + $0x60] sm:$0xff]
        %v796 = vld [vmem:[%s782 + $0x68] sm:$0xff]
        %v797 = vld [vmem:[%s782 + $0x70] sm:$0xff]
        %v798 = vld [vmem:[%s782 + $0x78] sm:$0xff]
        %v799 = vld [vmem:[#allocation7 + $0x3] sm:$0x1]
        %v800 = vperm.slane %v799, 0
        %801 = vmatpush.msra.mxu0 %v798
        %802 = vmatpush.msra.mxu0 %v797
        %803 = vmatpush.msra.mxu0 %v796
        %804 = vmatpush.msra.mxu0 %v795
        %805 = vmatpush.msra.mxu0 %v794
        %806 = vmatpush.msra.mxu0 %v793
        %807 = vmatpush.msra.mxu0 %v792
        %808 = vmatpush.msra.mxu0 %v791
        %809 = vmatpush.msra.mxu0 %v790
        %810 = vmatpush.msra.mxu0 %v789
        %811 = vmatpush.msra.mxu0 %v788
        %812 = vmatpush.msra.mxu0 %v787
        %813 = vmatpush.msra.mxu0 %v786
        %814 = vmatpush.msra.mxu0 %v785
        %815 = vmatpush.msra.mxu0 %v784
        %816 = vmatpush.msra.mxu0 %v783
        %817 = vmatmul.f32.gmra.mxu0 %v422
        %v818 = vpop.f32.mrf.mxu0
        %v819 = vadd.f32 %v800, %v818
        %820 = vmatmul.f32.gmra.mxu0 %v423
        %v821 = vpop.f32.mrf.mxu0
        %v822 = vadd.f32 %v800, %v821
        %823 = vmatmul.f32.gmra.mxu0 %v424
        %v824 = vpop.f32.mrf.mxu0
        %v825 = vadd.f32 %v800, %v824
        %826 = vmatmul.f32.gmra.mxu0 %v425
        %v827 = vpop.f32.mrf.mxu0
        %v828 = vadd.f32 %v800, %v827
        %829 = vmatmul.f32.gmra.mxu0 %v426
        %v830 = vpop.f32.mrf.mxu0
        %v831 = vadd.f32 %v800, %v830
        %832 = vmatmul.f32.gmra.mxu0 %v427
        %v833 = vpop.f32.mrf.mxu0
        %v834 = vadd.f32 %v800, %v833
        %835 = vmatmul.f32.gmra.mxu0 %v428
        %v836 = vpop.f32.mrf.mxu0
        %v837 = vadd.f32 %v800, %v836
        %838 = vmatmul.f32.gmra.mxu0 %v429
        %v839 = vpop.f32.mrf.mxu0
        %v840 = vadd.f32 %v800, %v839
        %841 = vmatmul.f32.gmra.mxu0 %v430
        %v842 = vpop.f32.mrf.mxu0
        %v843 = vadd.f32 %v800, %v842
        %844 = vmatmul.f32.gmra.mxu0 %v431
        %v845 = vpop.f32.mrf.mxu0
        %v846 = vadd.f32 %v800, %v845
        %847 = vmatmul.f32.gmra.mxu0 %v432
        %v848 = vpop.f32.mrf.mxu0
        %v849 = vadd.f32 %v800, %v848
        %850 = vmatmul.f32.gmra.mxu0 %v433
        %v851 = vpop.f32.mrf.mxu0
        %v852 = vadd.f32 %v800, %v851
        %853 = vmatmul.f32.gmra.mxu0 %v434
        %v854 = vpop.f32.mrf.mxu0
        %v855 = vadd.f32 %v800, %v854
        %856 = vmatmul.f32.gmra.mxu0 %v435
        %v857 = vpop.f32.mrf.mxu0
        %v858 = vadd.f32 %v800, %v857
        %859 = vmatmul.f32.gmra.mxu0 %v436
        %v860 = vpop.f32.mrf.mxu0
        %v861 = vadd.f32 %v800, %v860
        %862 = vmatmul.f32.gmra.mxu0 %v437
        %v863 = vpop.f32.mrf.mxu0
        %v864 = vadd.f32 %v800, %v863
        %865 = vmatmul.f32.gmra.mxu0 %v438
        %v866 = vpop.f32.mrf.mxu0
        %v867 = vadd.f32 %v800, %v866
        %868 = vmatmul.f32.gmra.mxu0 %v439
        %v869 = vpop.f32.mrf.mxu0
        %v870 = vadd.f32 %v800, %v869
        %871 = vmatmul.f32.gmra.mxu0 %v440
        %v872 = vpop.f32.mrf.mxu0
        %v873 = vadd.f32 %v800, %v872
        %874 = vmatmul.f32.gmra.mxu0 %v441
        %v875 = vpop.f32.mrf.mxu0
        %v876 = vadd.f32 %v800, %v875
        %877 = vmatmul.f32.gmra.mxu0 %v442
        %v878 = vpop.f32.mrf.mxu0
        %v879 = vadd.f32 %v800, %v878
        %880 = vmatmul.f32.gmra.mxu0 %v443
        %v881 = vpop.f32.mrf.mxu0
        %v882 = vadd.f32 %v800, %v881
        %883 = vmatmul.f32.gmra.mxu0 %v444
        %v884 = vpop.f32.mrf.mxu0
        %v885 = vadd.f32 %v800, %v884
        %886 = vmatmul.f32.gmra.mxu0 %v445
        %v887 = vpop.f32.mrf.mxu0
        %v888 = vadd.f32 %v800, %v887
        %889 = vmatmul.f32.gmra.mxu0 %v446
        %v890 = vpop.f32.mrf.mxu0
        %v891 = vadd.f32 %v800, %v890
        %892 = vmatmul.f32.gmra.mxu0 %v447
        %v893 = vpop.f32.mrf.mxu0
        %v894 = vadd.f32 %v800, %v893
        %895 = vmatmul.f32.gmra.mxu0 %v448
        %v896 = vpop.f32.mrf.mxu0
        %v897 = vadd.f32 %v800, %v896
        %898 = vmatmul.f32.gmra.mxu0 %v449
        %v899 = vpop.f32.mrf.mxu0
        %v900 = vadd.f32 %v800, %v899
        %901 = vmatmul.f32.gmra.mxu0 %v450
        %v902 = vpop.f32.mrf.mxu0
        %v903 = vadd.f32 %v800, %v902
        %904 = vmatmul.f32.gmra.mxu0 %v451
        %v905 = vpop.f32.mrf.mxu0
        %v906 = vadd.f32 %v800, %v905
        %907 = vmatmul.f32.gmra.mxu0 %v452
        %v908 = vpop.f32.mrf.mxu0
        %v909 = vadd.f32 %v800, %v908
        %910 = vmatmul.f32.gmra.mxu0 %v453
        %v911 = vpop.f32.mrf.mxu0
        %v912 = vadd.f32 %v800, %v911
        %913 = vdwg.mxu0
        %v914 = vmax.f32 %v819, 0.0
        %v915 = vmax.f32 %v822, 0.0
        %v916 = vmax.f32 %v825, 0.0
        %v917 = vmax.f32 %v828, 0.0
        %v918 = vmax.f32 %v831, 0.0
        %v919 = vmax.f32 %v834, 0.0
        %v920 = vmax.f32 %v837, 0.0
        %v921 = vmax.f32 %v840, 0.0
        %v922 = vmax.f32 %v843, 0.0
        %v923 = vmax.f32 %v846, 0.0
        %v924 = vmax.f32 %v849, 0.0
        %v925 = vmax.f32 %v852, 0.0
        %v926 = vmax.f32 %v855, 0.0
        %v927 = vmax.f32 %v858, 0.0
        %v928 = vmax.f32 %v861, 0.0
        %v929 = vmax.f32 %v864, 0.0
        %v930 = vmax.f32 %v867, 0.0
        %v931 = vmax.f32 %v870, 0.0
        %v932 = vmax.f32 %v873, 0.0
        %v933 = vmax.f32 %v876, 0.0
        %v934 = vmax.f32 %v879, 0.0
        %v935 = vmax.f32 %v882, 0.0
        %v936 = vmax.f32 %v885, 0.0
        %v937 = vmax.f32 %v888, 0.0
        %v938 = vmax.f32 %v891, 0.0
        %v939 = vmax.f32 %v894, 0.0
        %v940 = vmax.f32 %v897, 0.0
        %v941 = vmax.f32 %v900, 0.0
        %v942 = vmax.f32 %v903, 0.0
        %v943 = vmax.f32 %v906, 0.0
        %v944 = vmax.f32 %v909, 0.0
        %v945 = vmax.f32 %v912, 0.0
        %s946 = scalar_lea.vmem [#allocation5], 512
        %v947 = vld [vmem:[%s946] sm:$0xff]
        %v948 = vld [vmem:[%s946 + $0x8] sm:$0xff]
        %v949 = vld [vmem:[%s946 + $0x10] sm:$0xff]
        %v950 = vld [vmem:[%s946 + $0x18] sm:$0xff]
        %v951 = vld [vmem:[%s946 + $0x20] sm:$0xff]
        %v952 = vld [vmem:[%s946 + $0x28] sm:$0xff]
        %v953 = vld [vmem:[%s946 + $0x30] sm:$0xff]
        %v954 = vld [vmem:[%s946 + $0x38] sm:$0xff]
        %v955 = vld [vmem:[%s946 + $0x40] sm:$0xff]
        %v956 = vld [vmem:[%s946 + $0x48] sm:$0xff]
        %v957 = vld [vmem:[%s946 + $0x50] sm:$0xff]
        %v958 = vld [vmem:[%s946 + $0x58] sm:$0xff]
        %v959 = vld [vmem:[%s946 + $0x60] sm:$0xff]
        %v960 = vld [vmem:[%s946 + $0x68] sm:$0xff]
        %v961 = vld [vmem:[%s946 + $0x70] sm:$0xff]
        %v962 = vld [vmem:[%s946 + $0x78] sm:$0xff]
        %v963 = vld [vmem:[#allocation7 + $0x4] sm:$0x1]
        %v964 = vperm.slane %v963, 0
        %965 = vmatpush.msra.mxu0 %v962
        %966 = vmatpush.msra.mxu0 %v961
        %967 = vmatpush.msra.mxu0 %v960
        %968 = vmatpush.msra.mxu0 %v959
        %969 = vmatpush.msra.mxu0 %v958
        %970 = vmatpush.msra.mxu0 %v957
        %971 = vmatpush.msra.mxu0 %v956
        %972 = vmatpush.msra.mxu0 %v955
        %973 = vmatpush.msra.mxu0 %v954
        %974 = vmatpush.msra.mxu0 %v953
        %975 = vmatpush.msra.mxu0 %v952
        %976 = vmatpush.msra.mxu0 %v951
        %977 = vmatpush.msra.mxu0 %v950
        %978 = vmatpush.msra.mxu0 %v949
        %979 = vmatpush.msra.mxu0 %v948
        %980 = vmatpush.msra.mxu0 %v947
        %981 = vmatmul.f32.gmra.mxu0 %v586
        %v982 = vpop.f32.mrf.mxu0
        %v983 = vadd.f32 %v964, %v982
        %984 = vmatmul.f32.gmra.mxu0 %v587
        %v985 = vpop.f32.mrf.mxu0
        %v986 = vadd.f32 %v964, %v985
        %987 = vmatmul.f32.gmra.mxu0 %v588
        %v988 = vpop.f32.mrf.mxu0
        %v989 = vadd.f32 %v964, %v988
        %990 = vmatmul.f32.gmra.mxu0 %v589
        %v991 = vpop.f32.mrf.mxu0
        %v992 = vadd.f32 %v964, %v991
        %993 = vmatmul.f32.gmra.mxu0 %v590
        %v994 = vpop.f32.mrf.mxu0
        %v995 = vadd.f32 %v964, %v994
        %996 = vmatmul.f32.gmra.mxu0 %v591
        %v997 = vpop.f32.mrf.mxu0
        %v998 = vadd.f32 %v964, %v997
        %999 = vmatmul.f32.gmra.mxu0 %v592
        %v1000 = vpop.f32.mrf.mxu0
        %v1001 = vadd.f32 %v964, %v1000
        %1002 = vmatmul.f32.gmra.mxu0 %v593
        %v1003 = vpop.f32.mrf.mxu0
        %v1004 = vadd.f32 %v964, %v1003
        %1005 = vmatmul.f32.gmra.mxu0 %v594
        %v1006 = vpop.f32.mrf.mxu0
        %v1007 = vadd.f32 %v964, %v1006
        %1008 = vmatmul.f32.gmra.mxu0 %v595
        %v1009 = vpop.f32.mrf.mxu0
        %v1010 = vadd.f32 %v964, %v1009
        %1011 = vmatmul.f32.gmra.mxu0 %v596
        %v1012 = vpop.f32.mrf.mxu0
        %v1013 = vadd.f32 %v964, %v1012
        %1014 = vmatmul.f32.gmra.mxu0 %v597
        %v1015 = vpop.f32.mrf.mxu0
        %v1016 = vadd.f32 %v964, %v1015
        %1017 = vmatmul.f32.gmra.mxu0 %v598
        %v1018 = vpop.f32.mrf.mxu0
        %v1019 = vadd.f32 %v964, %v1018
        %1020 = vmatmul.f32.gmra.mxu0 %v599
        %v1021 = vpop.f32.mrf.mxu0
        %v1022 = vadd.f32 %v964, %v1021
        %1023 = vmatmul.f32.gmra.mxu0 %v600
        %v1024 = vpop.f32.mrf.mxu0
        %v1025 = vadd.f32 %v964, %v1024
        %1026 = vmatmul.f32.gmra.mxu0 %v601
        %v1027 = vpop.f32.mrf.mxu0
        %v1028 = vadd.f32 %v964, %v1027
        %1029 = vmatmul.f32.gmra.mxu0 %v602
        %v1030 = vpop.f32.mrf.mxu0
        %v1031 = vadd.f32 %v964, %v1030
        %1032 = vmatmul.f32.gmra.mxu0 %v603
        %v1033 = vpop.f32.mrf.mxu0
        %v1034 = vadd.f32 %v964, %v1033
        %1035 = vmatmul.f32.gmra.mxu0 %v604
        %v1036 = vpop.f32.mrf.mxu0
        %v1037 = vadd.f32 %v964, %v1036
        %1038 = vmatmul.f32.gmra.mxu0 %v605
        %v1039 = vpop.f32.mrf.mxu0
        %v1040 = vadd.f32 %v964, %v1039
        %1041 = vmatmul.f32.gmra.mxu0 %v606
        %v1042 = vpop.f32.mrf.mxu0
        %v1043 = vadd.f32 %v964, %v1042
        %1044 = vmatmul.f32.gmra.mxu0 %v607
        %v1045 = vpop.f32.mrf.mxu0
        %v1046 = vadd.f32 %v964, %v1045
        %1047 = vmatmul.f32.gmra.mxu0 %v608
        %v1048 = vpop.f32.mrf.mxu0
        %v1049 = vadd.f32 %v964, %v1048
        %1050 = vmatmul.f32.gmra.mxu0 %v609
        %v1051 = vpop.f32.mrf.mxu0
        %v1052 = vadd.f32 %v964, %v1051
        %1053 = vmatmul.f32.gmra.mxu0 %v610
        %v1054 = vpop.f32.mrf.mxu0
        %v1055 = vadd.f32 %v964, %v1054
        %1056 = vmatmul.f32.gmra.mxu0 %v611
        %v1057 = vpop.f32.mrf.mxu0
        %v1058 = vadd.f32 %v964, %v1057
        %1059 = vmatmul.f32.gmra.mxu0 %v612
        %v1060 = vpop.f32.mrf.mxu0
        %v1061 = vadd.f32 %v964, %v1060
        %1062 = vmatmul.f32.gmra.mxu0 %v613
        %v1063 = vpop.f32.mrf.mxu0
        %v1064 = vadd.f32 %v964, %v1063
        %1065 = vmatmul.f32.gmra.mxu0 %v614
        %v1066 = vpop.f32.mrf.mxu0
        %v1067 = vadd.f32 %v964, %v1066
        %1068 = vmatmul.f32.gmra.mxu0 %v615
        %v1069 = vpop.f32.mrf.mxu0
        %v1070 = vadd.f32 %v964, %v1069
        %1071 = vmatmul.f32.gmra.mxu0 %v616
        %v1072 = vpop.f32.mrf.mxu0
        %v1073 = vadd.f32 %v964, %v1072
        %1074 = vmatmul.f32.gmra.mxu0 %v617
        %v1075 = vpop.f32.mrf.mxu0
        %v1076 = vadd.f32 %v964, %v1075
        %1077 = vdwg.mxu0
        %v1078 = vxor.u32 %v983, 2147483648
        %v1079 = vxor.u32 %v986, 2147483648
        %v1080 = vxor.u32 %v989, 2147483648
        %v1081 = vxor.u32 %v992, 2147483648
        %v1082 = vxor.u32 %v995, 2147483648
        %v1083 = vxor.u32 %v998, 2147483648
        %v1084 = vxor.u32 %v1001, 2147483648
        %v1085 = vxor.u32 %v1004, 2147483648
        %v1086 = vxor.u32 %v1007, 2147483648
        %v1087 = vxor.u32 %v1010, 2147483648
        %v1088 = vxor.u32 %v1013, 2147483648
        %v1089 = vxor.u32 %v1016, 2147483648
        %v1090 = vxor.u32 %v1019, 2147483648
        %v1091 = vxor.u32 %v1022, 2147483648
        %v1092 = vxor.u32 %v1025, 2147483648
        %v1093 = vxor.u32 %v1028, 2147483648
        %v1094 = vxor.u32 %v1031, 2147483648
        %v1095 = vxor.u32 %v1034, 2147483648
        %v1096 = vxor.u32 %v1037, 2147483648
        %v1097 = vxor.u32 %v1040, 2147483648
        %v1098 = vxor.u32 %v1043, 2147483648
        %v1099 = vxor.u32 %v1046, 2147483648
        %v1100 = vxor.u32 %v1049, 2147483648
        %v1101 = vxor.u32 %v1052, 2147483648
        %v1102 = vxor.u32 %v1055, 2147483648
        %v1103 = vxor.u32 %v1058, 2147483648
        %v1104 = vxor.u32 %v1061, 2147483648
        %v1105 = vxor.u32 %v1064, 2147483648
        %v1106 = vxor.u32 %v1067, 2147483648
        %v1107 = vxor.u32 %v1070, 2147483648
        %v1108 = vxor.u32 %v1073, 2147483648
        %v1109 = vxor.u32 %v1076, 2147483648
        %v1110 = vmul.f32 %v1078, 1.442695
        %v1111 = vpow.pop %v1110
        %v1112 = vmul.f32 %v1079, 1.442695
        %v1113 = vpow.pop %v1112
        %v1114 = vmul.f32 %v1080, 1.442695
        %v1115 = vpow.pop %v1114
        %v1116 = vmul.f32 %v1081, 1.442695
        %v1117 = vpow.pop %v1116
        %v1118 = vmul.f32 %v1082, 1.442695
        %v1119 = vpow.pop %v1118
        %v1120 = vmul.f32 %v1083, 1.442695
        %v1121 = vpow.pop %v1120
        %v1122 = vmul.f32 %v1084, 1.442695
        %v1123 = vpow.pop %v1122
        %v1124 = vmul.f32 %v1085, 1.442695
        %v1125 = vpow.pop %v1124
        %v1126 = vmul.f32 %v1086, 1.442695
        %v1127 = vpow.pop %v1126
        %v1128 = vmul.f32 %v1087, 1.442695
        %v1129 = vpow.pop %v1128
        %v1130 = vmul.f32 %v1088, 1.442695
        %v1131 = vpow.pop %v1130
        %v1132 = vmul.f32 %v1089, 1.442695
        %v1133 = vpow.pop %v1132
        %v1134 = vmul.f32 %v1090, 1.442695
        %v1135 = vpow.pop %v1134
        %v1136 = vmul.f32 %v1091, 1.442695
        %v1137 = vpow.pop %v1136
        %v1138 = vmul.f32 %v1092, 1.442695
        %v1139 = vpow.pop %v1138
        %v1140 = vmul.f32 %v1093, 1.442695
        %v1141 = vpow.pop %v1140
        %v1142 = vmul.f32 %v1094, 1.442695
        %v1143 = vpow.pop %v1142
        %v1144 = vmul.f32 %v1095, 1.442695
        %v1145 = vpow.pop %v1144
        %v1146 = vmul.f32 %v1096, 1.442695
        %v1147 = vpow.pop %v1146
        %v1148 = vmul.f32 %v1097, 1.442695
        %v1149 = vpow.pop %v1148
        %v1150 = vmul.f32 %v1098, 1.442695
        %v1151 = vpow.pop %v1150
        %v1152 = vmul.f32 %v1099, 1.442695
        %v1153 = vpow.pop %v1152
        %v1154 = vmul.f32 %v1100, 1.442695
        %v1155 = vpow.pop %v1154
        %v1156 = vmul.f32 %v1101, 1.442695
        %v1157 = vpow.pop %v1156
        %v1158 = vmul.f32 %v1102, 1.442695
        %v1159 = vpow.pop %v1158
        %v1160 = vmul.f32 %v1103, 1.442695
        %v1161 = vpow.pop %v1160
        %v1162 = vmul.f32 %v1104, 1.442695
        %v1163 = vpow.pop %v1162
        %v1164 = vmul.f32 %v1105, 1.442695
        %v1165 = vpow.pop %v1164
        %v1166 = vmul.f32 %v1106, 1.442695
        %v1167 = vpow.pop %v1166
        %v1168 = vmul.f32 %v1107, 1.442695
        %v1169 = vpow.pop %v1168
        %v1170 = vmul.f32 %v1108, 1.442695
        %v1171 = vpow.pop %v1170
        %v1172 = vmul.f32 %v1109, 1.442695
        %v1173 = vpow.pop %v1172
        %v1174 = vadd.f32 %v1111, 1.0
        %v1175 = vadd.f32 %v1113, 1.0
        %v1176 = vadd.f32 %v1115, 1.0
        %v1177 = vadd.f32 %v1117, 1.0
        %v1178 = vadd.f32 %v1119, 1.0
        %v1179 = vadd.f32 %v1121, 1.0
        %v1180 = vadd.f32 %v1123, 1.0
        %v1181 = vadd.f32 %v1125, 1.0
        %v1182 = vadd.f32 %v1127, 1.0
        %v1183 = vadd.f32 %v1129, 1.0
        %v1184 = vadd.f32 %v1131, 1.0
        %v1185 = vadd.f32 %v1133, 1.0
        %v1186 = vadd.f32 %v1135, 1.0
        %v1187 = vadd.f32 %v1137, 1.0
        %v1188 = vadd.f32 %v1139, 1.0
        %v1189 = vadd.f32 %v1141, 1.0
        %v1190 = vadd.f32 %v1143, 1.0
        %v1191 = vadd.f32 %v1145, 1.0
        %v1192 = vadd.f32 %v1147, 1.0
        %v1193 = vadd.f32 %v1149, 1.0
        %v1194 = vadd.f32 %v1151, 1.0
        %v1195 = vadd.f32 %v1153, 1.0
        %v1196 = vadd.f32 %v1155, 1.0
        %v1197 = vadd.f32 %v1157, 1.0
        %v1198 = vadd.f32 %v1159, 1.0
        %v1199 = vadd.f32 %v1161, 1.0
        %v1200 = vadd.f32 %v1163, 1.0
        %v1201 = vadd.f32 %v1165, 1.0
        %v1202 = vadd.f32 %v1167, 1.0
        %v1203 = vadd.f32 %v1169, 1.0
        %v1204 = vadd.f32 %v1171, 1.0
        %v1205 = vadd.f32 %v1173, 1.0
        %v1206 = vrcp.pop %v1174
        %v1207 = vmul.f32 %v1174, %v1206
        %v1208 = vsub.f32 1.0, %v1207
        %v1209 = vmul.f32 %v1206, %v1208
        %v1210 = vadd.f32 %v1206, %v1209
        %vm1211 = vweird.f32 %v1174
        %vm1212 = vweird.f32 %v1206
        %vm1213 = vmor %vm1211, %vm1212
        %v1214 = vsel %vm1213, %v1206, %v1210
        %v1215 = vand.u32 2147483647, %v1174
        %vm1216 = vcmp.eq.f32.partialorder %v1215, 8.507059e+37
        %v1217 = vand.u32 %v1174, 2147483648
        %v1218 = vor.u32 1.1754944e-38, %v1217
        %v1219 = vsel %vm1216, %v1218, %v1214
        %v1220 = vmul.f32 1.0, %v1219
        %v1221 = vrcp.pop %v1175
        %v1222 = vmul.f32 %v1175, %v1221
        %v1223 = vsub.f32 1.0, %v1222
        %v1224 = vmul.f32 %v1221, %v1223
        %v1225 = vadd.f32 %v1221, %v1224
        %vm1226 = vweird.f32 %v1175
        %vm1227 = vweird.f32 %v1221
        %vm1228 = vmor %vm1226, %vm1227
        %v1229 = vsel %vm1228, %v1221, %v1225
        %v1230 = vand.u32 2147483647, %v1175
        %vm1231 = vcmp.eq.f32.partialorder %v1230, 8.507059e+37
        %v1232 = vand.u32 %v1175, 2147483648
        %v1233 = vor.u32 1.1754944e-38, %v1232
        %v1234 = vsel %vm1231, %v1233, %v1229
        %v1235 = vmul.f32 1.0, %v1234
        %v1236 = vrcp.pop %v1176
        %v1237 = vmul.f32 %v1176, %v1236
        %v1238 = vsub.f32 1.0, %v1237
        %v1239 = vmul.f32 %v1236, %v1238
        %v1240 = vadd.f32 %v1236, %v1239
        %vm1241 = vweird.f32 %v1176
        %vm1242 = vweird.f32 %v1236
        %vm1243 = vmor %vm1241, %vm1242
        %v1244 = vsel %vm1243, %v1236, %v1240
        %v1245 = vand.u32 2147483647, %v1176
        %vm1246 = vcmp.eq.f32.partialorder %v1245, 8.507059e+37
        %v1247 = vand.u32 %v1176, 2147483648
        %v1248 = vor.u32 1.1754944e-38, %v1247
        %v1249 = vsel %vm1246, %v1248, %v1244
        %v1250 = vmul.f32 1.0, %v1249
        %v1251 = vrcp.pop %v1177
        %v1252 = vmul.f32 %v1177, %v1251
        %v1253 = vsub.f32 1.0, %v1252
        %v1254 = vmul.f32 %v1251, %v1253
        %v1255 = vadd.f32 %v1251, %v1254
        %vm1256 = vweird.f32 %v1177
        %vm1257 = vweird.f32 %v1251
        %vm1258 = vmor %vm1256, %vm1257
        %v1259 = vsel %vm1258, %v1251, %v1255
        %v1260 = vand.u32 2147483647, %v1177
        %vm1261 = vcmp.eq.f32.partialorder %v1260, 8.507059e+37
        %v1262 = vand.u32 %v1177, 2147483648
        %v1263 = vor.u32 1.1754944e-38, %v1262
        %v1264 = vsel %vm1261, %v1263, %v1259
        %v1265 = vmul.f32 1.0, %v1264
        %v1266 = vrcp.pop %v1178
        %v1267 = vmul.f32 %v1178, %v1266
        %v1268 = vsub.f32 1.0, %v1267
        %v1269 = vmul.f32 %v1266, %v1268
        %v1270 = vadd.f32 %v1266, %v1269
        %vm1271 = vweird.f32 %v1178
        %vm1272 = vweird.f32 %v1266
        %vm1273 = vmor %vm1271, %vm1272
        %v1274 = vsel %vm1273, %v1266, %v1270
        %v1275 = vand.u32 2147483647, %v1178
        %vm1276 = vcmp.eq.f32.partialorder %v1275, 8.507059e+37
        %v1277 = vand.u32 %v1178, 2147483648
        %v1278 = vor.u32 1.1754944e-38, %v1277
        %v1279 = vsel %vm1276, %v1278, %v1274
        %v1280 = vmul.f32 1.0, %v1279
        %v1281 = vrcp.pop %v1179
        %v1282 = vmul.f32 %v1179, %v1281
        %v1283 = vsub.f32 1.0, %v1282
        %v1284 = vmul.f32 %v1281, %v1283
        %v1285 = vadd.f32 %v1281, %v1284
        %vm1286 = vweird.f32 %v1179
        %vm1287 = vweird.f32 %v1281
        %vm1288 = vmor %vm1286, %vm1287
        %v1289 = vsel %vm1288, %v1281, %v1285
        %v1290 = vand.u32 2147483647, %v1179
        %vm1291 = vcmp.eq.f32.partialorder %v1290, 8.507059e+37
        %v1292 = vand.u32 %v1179, 2147483648
        %v1293 = vor.u32 1.1754944e-38, %v1292
        %v1294 = vsel %vm1291, %v1293, %v1289
        %v1295 = vmul.f32 1.0, %v1294
        %v1296 = vrcp.pop %v1180
        %v1297 = vmul.f32 %v1180, %v1296
        %v1298 = vsub.f32 1.0, %v1297
        %v1299 = vmul.f32 %v1296, %v1298
        %v1300 = vadd.f32 %v1296, %v1299
        %vm1301 = vweird.f32 %v1180
        %vm1302 = vweird.f32 %v1296
        %vm1303 = vmor %vm1301, %vm1302
        %v1304 = vsel %vm1303, %v1296, %v1300
        %v1305 = vand.u32 2147483647, %v1180
        %vm1306 = vcmp.eq.f32.partialorder %v1305, 8.507059e+37
        %v1307 = vand.u32 %v1180, 2147483648
        %v1308 = vor.u32 1.1754944e-38, %v1307
        %v1309 = vsel %vm1306, %v1308, %v1304
        %v1310 = vmul.f32 1.0, %v1309
        %v1311 = vrcp.pop %v1181
        %v1312 = vmul.f32 %v1181, %v1311
        %v1313 = vsub.f32 1.0, %v1312
        %v1314 = vmul.f32 %v1311, %v1313
        %v1315 = vadd.f32 %v1311, %v1314
        %vm1316 = vweird.f32 %v1181
        %vm1317 = vweird.f32 %v1311
        %vm1318 = vmor %vm1316, %vm1317
        %v1319 = vsel %vm1318, %v1311, %v1315
        %v1320 = vand.u32 2147483647, %v1181
        %vm1321 = vcmp.eq.f32.partialorder %v1320, 8.507059e+37
        %v1322 = vand.u32 %v1181, 2147483648
        %v1323 = vor.u32 1.1754944e-38, %v1322
        %v1324 = vsel %vm1321, %v1323, %v1319
        %v1325 = vmul.f32 1.0, %v1324
        %v1326 = vrcp.pop %v1182
        %v1327 = vmul.f32 %v1182, %v1326
        %v1328 = vsub.f32 1.0, %v1327
        %v1329 = vmul.f32 %v1326, %v1328
        %v1330 = vadd.f32 %v1326, %v1329
        %vm1331 = vweird.f32 %v1182
        %vm1332 = vweird.f32 %v1326
        %vm1333 = vmor %vm1331, %vm1332
        %v1334 = vsel %vm1333, %v1326, %v1330
        %v1335 = vand.u32 2147483647, %v1182
        %vm1336 = vcmp.eq.f32.partialorder %v1335, 8.507059e+37
        %v1337 = vand.u32 %v1182, 2147483648
        %v1338 = vor.u32 1.1754944e-38, %v1337
        %v1339 = vsel %vm1336, %v1338, %v1334
        %v1340 = vmul.f32 1.0, %v1339
        %v1341 = vrcp.pop %v1183
        %v1342 = vmul.f32 %v1183, %v1341
        %v1343 = vsub.f32 1.0, %v1342
        %v1344 = vmul.f32 %v1341, %v1343
        %v1345 = vadd.f32 %v1341, %v1344
        %vm1346 = vweird.f32 %v1183
        %vm1347 = vweird.f32 %v1341
        %vm1348 = vmor %vm1346, %vm1347
        %v1349 = vsel %vm1348, %v1341, %v1345
        %v1350 = vand.u32 2147483647, %v1183
        %vm1351 = vcmp.eq.f32.partialorder %v1350, 8.507059e+37
        %v1352 = vand.u32 %v1183, 2147483648
        %v1353 = vor.u32 1.1754944e-38, %v1352
        %v1354 = vsel %vm1351, %v1353, %v1349
        %v1355 = vmul.f32 1.0, %v1354
        %v1356 = vrcp.pop %v1184
        %v1357 = vmul.f32 %v1184, %v1356
        %v1358 = vsub.f32 1.0, %v1357
        %v1359 = vmul.f32 %v1356, %v1358
        %v1360 = vadd.f32 %v1356, %v1359
        %vm1361 = vweird.f32 %v1184
        %vm1362 = vweird.f32 %v1356
        %vm1363 = vmor %vm1361, %vm1362
        %v1364 = vsel %vm1363, %v1356, %v1360
        %v1365 = vand.u32 2147483647, %v1184
        %vm1366 = vcmp.eq.f32.partialorder %v1365, 8.507059e+37
        %v1367 = vand.u32 %v1184, 2147483648
        %v1368 = vor.u32 1.1754944e-38, %v1367
        %v1369 = vsel %vm1366, %v1368, %v1364
        %v1370 = vmul.f32 1.0, %v1369
        %v1371 = vrcp.pop %v1185
        %v1372 = vmul.f32 %v1185, %v1371
        %v1373 = vsub.f32 1.0, %v1372
        %v1374 = vmul.f32 %v1371, %v1373
        %v1375 = vadd.f32 %v1371, %v1374
        %vm1376 = vweird.f32 %v1185
        %vm1377 = vweird.f32 %v1371
        %vm1378 = vmor %vm1376, %vm1377
        %v1379 = vsel %vm1378, %v1371, %v1375
        %v1380 = vand.u32 2147483647, %v1185
        %vm1381 = vcmp.eq.f32.partialorder %v1380, 8.507059e+37
        %v1382 = vand.u32 %v1185, 2147483648
        %v1383 = vor.u32 1.1754944e-38, %v1382
        %v1384 = vsel %vm1381, %v1383, %v1379
        %v1385 = vmul.f32 1.0, %v1384
        %v1386 = vrcp.pop %v1186
        %v1387 = vmul.f32 %v1186, %v1386
        %v1388 = vsub.f32 1.0, %v1387
        %v1389 = vmul.f32 %v1386, %v1388
        %v1390 = vadd.f32 %v1386, %v1389
        %vm1391 = vweird.f32 %v1186
        %vm1392 = vweird.f32 %v1386
        %vm1393 = vmor %vm1391, %vm1392
        %v1394 = vsel %vm1393, %v1386, %v1390
        %v1395 = vand.u32 2147483647, %v1186
        %vm1396 = vcmp.eq.f32.partialorder %v1395, 8.507059e+37
        %v1397 = vand.u32 %v1186, 2147483648
        %v1398 = vor.u32 1.1754944e-38, %v1397
        %v1399 = vsel %vm1396, %v1398, %v1394
        %v1400 = vmul.f32 1.0, %v1399
        %v1401 = vrcp.pop %v1187
        %v1402 = vmul.f32 %v1187, %v1401
        %v1403 = vsub.f32 1.0, %v1402
        %v1404 = vmul.f32 %v1401, %v1403
        %v1405 = vadd.f32 %v1401, %v1404
        %vm1406 = vweird.f32 %v1187
        %vm1407 = vweird.f32 %v1401
        %vm1408 = vmor %vm1406, %vm1407
        %v1409 = vsel %vm1408, %v1401, %v1405
        %v1410 = vand.u32 2147483647, %v1187
        %vm1411 = vcmp.eq.f32.partialorder %v1410, 8.507059e+37
        %v1412 = vand.u32 %v1187, 2147483648
        %v1413 = vor.u32 1.1754944e-38, %v1412
        %v1414 = vsel %vm1411, %v1413, %v1409
        %v1415 = vmul.f32 1.0, %v1414
        %v1416 = vrcp.pop %v1188
        %v1417 = vmul.f32 %v1188, %v1416
        %v1418 = vsub.f32 1.0, %v1417
        %v1419 = vmul.f32 %v1416, %v1418
        %v1420 = vadd.f32 %v1416, %v1419
        %vm1421 = vweird.f32 %v1188
        %vm1422 = vweird.f32 %v1416
        %vm1423 = vmor %vm1421, %vm1422
        %v1424 = vsel %vm1423, %v1416, %v1420
        %v1425 = vand.u32 2147483647, %v1188
        %vm1426 = vcmp.eq.f32.partialorder %v1425, 8.507059e+37
        %v1427 = vand.u32 %v1188, 2147483648
        %v1428 = vor.u32 1.1754944e-38, %v1427
        %v1429 = vsel %vm1426, %v1428, %v1424
        %v1430 = vmul.f32 1.0, %v1429
        %v1431 = vrcp.pop %v1189
        %v1432 = vmul.f32 %v1189, %v1431
        %v1433 = vsub.f32 1.0, %v1432
        %v1434 = vmul.f32 %v1431, %v1433
        %v1435 = vadd.f32 %v1431, %v1434
        %vm1436 = vweird.f32 %v1189
        %vm1437 = vweird.f32 %v1431
        %vm1438 = vmor %vm1436, %vm1437
        %v1439 = vsel %vm1438, %v1431, %v1435
        %v1440 = vand.u32 2147483647, %v1189
        %vm1441 = vcmp.eq.f32.partialorder %v1440, 8.507059e+37
        %v1442 = vand.u32 %v1189, 2147483648
        %v1443 = vor.u32 1.1754944e-38, %v1442
        %v1444 = vsel %vm1441, %v1443, %v1439
        %v1445 = vmul.f32 1.0, %v1444
        %v1446 = vrcp.pop %v1190
        %v1447 = vmul.f32 %v1190, %v1446
        %v1448 = vsub.f32 1.0, %v1447
        %v1449 = vmul.f32 %v1446, %v1448
        %v1450 = vadd.f32 %v1446, %v1449
        %vm1451 = vweird.f32 %v1190
        %vm1452 = vweird.f32 %v1446
        %vm1453 = vmor %vm1451, %vm1452
        %v1454 = vsel %vm1453, %v1446, %v1450
        %v1455 = vand.u32 2147483647, %v1190
        %vm1456 = vcmp.eq.f32.partialorder %v1455, 8.507059e+37
        %v1457 = vand.u32 %v1190, 2147483648
        %v1458 = vor.u32 1.1754944e-38, %v1457
        %v1459 = vsel %vm1456, %v1458, %v1454
        %v1460 = vmul.f32 1.0, %v1459
        %v1461 = vrcp.pop %v1191
        %v1462 = vmul.f32 %v1191, %v1461
        %v1463 = vsub.f32 1.0, %v1462
        %v1464 = vmul.f32 %v1461, %v1463
        %v1465 = vadd.f32 %v1461, %v1464
        %vm1466 = vweird.f32 %v1191
        %vm1467 = vweird.f32 %v1461
        %vm1468 = vmor %vm1466, %vm1467
        %v1469 = vsel %vm1468, %v1461, %v1465
        %v1470 = vand.u32 2147483647, %v1191
        %vm1471 = vcmp.eq.f32.partialorder %v1470, 8.507059e+37
        %v1472 = vand.u32 %v1191, 2147483648
        %v1473 = vor.u32 1.1754944e-38, %v1472
        %v1474 = vsel %vm1471, %v1473, %v1469
        %v1475 = vmul.f32 1.0, %v1474
        %v1476 = vrcp.pop %v1192
        %v1477 = vmul.f32 %v1192, %v1476
        %v1478 = vsub.f32 1.0, %v1477
        %v1479 = vmul.f32 %v1476, %v1478
        %v1480 = vadd.f32 %v1476, %v1479
        %vm1481 = vweird.f32 %v1192
        %vm1482 = vweird.f32 %v1476
        %vm1483 = vmor %vm1481, %vm1482
        %v1484 = vsel %vm1483, %v1476, %v1480
        %v1485 = vand.u32 2147483647, %v1192
        %vm1486 = vcmp.eq.f32.partialorder %v1485, 8.507059e+37
        %v1487 = vand.u32 %v1192, 2147483648
        %v1488 = vor.u32 1.1754944e-38, %v1487
        %v1489 = vsel %vm1486, %v1488, %v1484
        %v1490 = vmul.f32 1.0, %v1489
        %v1491 = vrcp.pop %v1193
        %v1492 = vmul.f32 %v1193, %v1491
        %v1493 = vsub.f32 1.0, %v1492
        %v1494 = vmul.f32 %v1491, %v1493
        %v1495 = vadd.f32 %v1491, %v1494
        %vm1496 = vweird.f32 %v1193
        %vm1497 = vweird.f32 %v1491
        %vm1498 = vmor %vm1496, %vm1497
        %v1499 = vsel %vm1498, %v1491, %v1495
        %v1500 = vand.u32 2147483647, %v1193
        %vm1501 = vcmp.eq.f32.partialorder %v1500, 8.507059e+37
        %v1502 = vand.u32 %v1193, 2147483648
        %v1503 = vor.u32 1.1754944e-38, %v1502
        %v1504 = vsel %vm1501, %v1503, %v1499
        %v1505 = vmul.f32 1.0, %v1504
        %v1506 = vrcp.pop %v1194
        %v1507 = vmul.f32 %v1194, %v1506
        %v1508 = vsub.f32 1.0, %v1507
        %v1509 = vmul.f32 %v1506, %v1508
        %v1510 = vadd.f32 %v1506, %v1509
        %vm1511 = vweird.f32 %v1194
        %vm1512 = vweird.f32 %v1506
        %vm1513 = vmor %vm1511, %vm1512
        %v1514 = vsel %vm1513, %v1506, %v1510
        %v1515 = vand.u32 2147483647, %v1194
        %vm1516 = vcmp.eq.f32.partialorder %v1515, 8.507059e+37
        %v1517 = vand.u32 %v1194, 2147483648
        %v1518 = vor.u32 1.1754944e-38, %v1517
        %v1519 = vsel %vm1516, %v1518, %v1514
        %v1520 = vmul.f32 1.0, %v1519
        %v1521 = vrcp.pop %v1195
        %v1522 = vmul.f32 %v1195, %v1521
        %v1523 = vsub.f32 1.0, %v1522
        %v1524 = vmul.f32 %v1521, %v1523
        %v1525 = vadd.f32 %v1521, %v1524
        %vm1526 = vweird.f32 %v1195
        %vm1527 = vweird.f32 %v1521
        %vm1528 = vmor %vm1526, %vm1527
        %v1529 = vsel %vm1528, %v1521, %v1525
        %v1530 = vand.u32 2147483647, %v1195
        %vm1531 = vcmp.eq.f32.partialorder %v1530, 8.507059e+37
        %v1532 = vand.u32 %v1195, 2147483648
        %v1533 = vor.u32 1.1754944e-38, %v1532
        %v1534 = vsel %vm1531, %v1533, %v1529
        %v1535 = vmul.f32 1.0, %v1534
        %v1536 = vrcp.pop %v1196
        %v1537 = vmul.f32 %v1196, %v1536
        %v1538 = vsub.f32 1.0, %v1537
        %v1539 = vmul.f32 %v1536, %v1538
        %v1540 = vadd.f32 %v1536, %v1539
        %vm1541 = vweird.f32 %v1196
        %vm1542 = vweird.f32 %v1536
        %vm1543 = vmor %vm1541, %vm1542
        %v1544 = vsel %vm1543, %v1536, %v1540
        %v1545 = vand.u32 2147483647, %v1196
        %vm1546 = vcmp.eq.f32.partialorder %v1545, 8.507059e+37
        %v1547 = vand.u32 %v1196, 2147483648
        %v1548 = vor.u32 1.1754944e-38, %v1547
        %v1549 = vsel %vm1546, %v1548, %v1544
        %v1550 = vmul.f32 1.0, %v1549
        %v1551 = vrcp.pop %v1197
        %v1552 = vmul.f32 %v1197, %v1551
        %v1553 = vsub.f32 1.0, %v1552
        %v1554 = vmul.f32 %v1551, %v1553
        %v1555 = vadd.f32 %v1551, %v1554
        %vm1556 = vweird.f32 %v1197
        %vm1557 = vweird.f32 %v1551
        %vm1558 = vmor %vm1556, %vm1557
        %v1559 = vsel %vm1558, %v1551, %v1555
        %v1560 = vand.u32 2147483647, %v1197
        %vm1561 = vcmp.eq.f32.partialorder %v1560, 8.507059e+37
        %v1562 = vand.u32 %v1197, 2147483648
        %v1563 = vor.u32 1.1754944e-38, %v1562
        %v1564 = vsel %vm1561, %v1563, %v1559
        %v1565 = vmul.f32 1.0, %v1564
        %v1566 = vrcp.pop %v1198
        %v1567 = vmul.f32 %v1198, %v1566
        %v1568 = vsub.f32 1.0, %v1567
        %v1569 = vmul.f32 %v1566, %v1568
        %v1570 = vadd.f32 %v1566, %v1569
        %vm1571 = vweird.f32 %v1198
        %vm1572 = vweird.f32 %v1566
        %vm1573 = vmor %vm1571, %vm1572
        %v1574 = vsel %vm1573, %v1566, %v1570
        %v1575 = vand.u32 2147483647, %v1198
        %vm1576 = vcmp.eq.f32.partialorder %v1575, 8.507059e+37
        %v1577 = vand.u32 %v1198, 2147483648
        %v1578 = vor.u32 1.1754944e-38, %v1577
        %v1579 = vsel %vm1576, %v1578, %v1574
        %v1580 = vmul.f32 1.0, %v1579
        %v1581 = vrcp.pop %v1199
        %v1582 = vmul.f32 %v1199, %v1581
        %v1583 = vsub.f32 1.0, %v1582
        %v1584 = vmul.f32 %v1581, %v1583
        %v1585 = vadd.f32 %v1581, %v1584
        %vm1586 = vweird.f32 %v1199
        %vm1587 = vweird.f32 %v1581
        %vm1588 = vmor %vm1586, %vm1587
        %v1589 = vsel %vm1588, %v1581, %v1585
        %v1590 = vand.u32 2147483647, %v1199
        %vm1591 = vcmp.eq.f32.partialorder %v1590, 8.507059e+37
        %v1592 = vand.u32 %v1199, 2147483648
        %v1593 = vor.u32 1.1754944e-38, %v1592
        %v1594 = vsel %vm1591, %v1593, %v1589
        %v1595 = vmul.f32 1.0, %v1594
        %v1596 = vrcp.pop %v1200
        %v1597 = vmul.f32 %v1200, %v1596
        %v1598 = vsub.f32 1.0, %v1597
        %v1599 = vmul.f32 %v1596, %v1598
        %v1600 = vadd.f32 %v1596, %v1599
        %vm1601 = vweird.f32 %v1200
        %vm1602 = vweird.f32 %v1596
        %vm1603 = vmor %vm1601, %vm1602
        %v1604 = vsel %vm1603, %v1596, %v1600
        %v1605 = vand.u32 2147483647, %v1200
        %vm1606 = vcmp.eq.f32.partialorder %v1605, 8.507059e+37
        %v1607 = vand.u32 %v1200, 2147483648
        %v1608 = vor.u32 1.1754944e-38, %v1607
        %v1609 = vsel %vm1606, %v1608, %v1604
        %v1610 = vmul.f32 1.0, %v1609
        %v1611 = vrcp.pop %v1201
        %v1612 = vmul.f32 %v1201, %v1611
        %v1613 = vsub.f32 1.0, %v1612
        %v1614 = vmul.f32 %v1611, %v1613
        %v1615 = vadd.f32 %v1611, %v1614
        %vm1616 = vweird.f32 %v1201
        %vm1617 = vweird.f32 %v1611
        %vm1618 = vmor %vm1616, %vm1617
        %v1619 = vsel %vm1618, %v1611, %v1615
        %v1620 = vand.u32 2147483647, %v1201
        %vm1621 = vcmp.eq.f32.partialorder %v1620, 8.507059e+37
        %v1622 = vand.u32 %v1201, 2147483648
        %v1623 = vor.u32 1.1754944e-38, %v1622
        %v1624 = vsel %vm1621, %v1623, %v1619
        %v1625 = vmul.f32 1.0, %v1624
        %v1626 = vrcp.pop %v1202
        %v1627 = vmul.f32 %v1202, %v1626
        %v1628 = vsub.f32 1.0, %v1627
        %v1629 = vmul.f32 %v1626, %v1628
        %v1630 = vadd.f32 %v1626, %v1629
        %vm1631 = vweird.f32 %v1202
        %vm1632 = vweird.f32 %v1626
        %vm1633 = vmor %vm1631, %vm1632
        %v1634 = vsel %vm1633, %v1626, %v1630
        %v1635 = vand.u32 2147483647, %v1202
        %vm1636 = vcmp.eq.f32.partialorder %v1635, 8.507059e+37
        %v1637 = vand.u32 %v1202, 2147483648
        %v1638 = vor.u32 1.1754944e-38, %v1637
        %v1639 = vsel %vm1636, %v1638, %v1634
        %v1640 = vmul.f32 1.0, %v1639
        %v1641 = vrcp.pop %v1203
        %v1642 = vmul.f32 %v1203, %v1641
        %v1643 = vsub.f32 1.0, %v1642
        %v1644 = vmul.f32 %v1641, %v1643
        %v1645 = vadd.f32 %v1641, %v1644
        %vm1646 = vweird.f32 %v1203
        %vm1647 = vweird.f32 %v1641
        %vm1648 = vmor %vm1646, %vm1647
        %v1649 = vsel %vm1648, %v1641, %v1645
        %v1650 = vand.u32 2147483647, %v1203
        %vm1651 = vcmp.eq.f32.partialorder %v1650, 8.507059e+37
        %v1652 = vand.u32 %v1203, 2147483648
        %v1653 = vor.u32 1.1754944e-38, %v1652
        %v1654 = vsel %vm1651, %v1653, %v1649
        %v1655 = vmul.f32 1.0, %v1654
        %v1656 = vrcp.pop %v1204
        %v1657 = vmul.f32 %v1204, %v1656
        %v1658 = vsub.f32 1.0, %v1657
        %v1659 = vmul.f32 %v1656, %v1658
        %v1660 = vadd.f32 %v1656, %v1659
        %vm1661 = vweird.f32 %v1204
        %vm1662 = vweird.f32 %v1656
        %vm1663 = vmor %vm1661, %vm1662
        %v1664 = vsel %vm1663, %v1656, %v1660
        %v1665 = vand.u32 2147483647, %v1204
        %vm1666 = vcmp.eq.f32.partialorder %v1665, 8.507059e+37
        %v1667 = vand.u32 %v1204, 2147483648
        %v1668 = vor.u32 1.1754944e-38, %v1667
        %v1669 = vsel %vm1666, %v1668, %v1664
        %v1670 = vmul.f32 1.0, %v1669
        %v1671 = vrcp.pop %v1205
        %v1672 = vmul.f32 %v1205, %v1671
        %v1673 = vsub.f32 1.0, %v1672
        %v1674 = vmul.f32 %v1671, %v1673
        %v1675 = vadd.f32 %v1671, %v1674
        %vm1676 = vweird.f32 %v1205
        %vm1677 = vweird.f32 %v1671
        %vm1678 = vmor %vm1676, %vm1677
        %v1679 = vsel %vm1678, %v1671, %v1675
        %v1680 = vand.u32 2147483647, %v1205
        %vm1681 = vcmp.eq.f32.partialorder %v1680, 8.507059e+37
        %v1682 = vand.u32 %v1205, 2147483648
        %v1683 = vor.u32 1.1754944e-38, %v1682
        %v1684 = vsel %vm1681, %v1683, %v1679
        %v1685 = vmul.f32 1.0, %v1684
        %s1686 = scalar_lea.vmem [#allocation5], 640
        %v1687 = vld [vmem:[%s1686] sm:$0xff]
        %v1688 = vld [vmem:[%s1686 + $0x8] sm:$0xff]
        %v1689 = vld [vmem:[%s1686 + $0x10] sm:$0xff]
        %v1690 = vld [vmem:[%s1686 + $0x18] sm:$0xff]
        %v1691 = vld [vmem:[%s1686 + $0x20] sm:$0xff]
        %v1692 = vld [vmem:[%s1686 + $0x28] sm:$0xff]
        %v1693 = vld [vmem:[%s1686 + $0x30] sm:$0xff]
        %v1694 = vld [vmem:[%s1686 + $0x38] sm:$0xff]
        %v1695 = vld [vmem:[%s1686 + $0x40] sm:$0xff]
        %v1696 = vld [vmem:[%s1686 + $0x48] sm:$0xff]
        %v1697 = vld [vmem:[%s1686 + $0x50] sm:$0xff]
        %v1698 = vld [vmem:[%s1686 + $0x58] sm:$0xff]
        %v1699 = vld [vmem:[%s1686 + $0x60] sm:$0xff]
        %v1700 = vld [vmem:[%s1686 + $0x68] sm:$0xff]
        %v1701 = vld [vmem:[%s1686 + $0x70] sm:$0xff]
        %v1702 = vld [vmem:[%s1686 + $0x78] sm:$0xff]
        %v1703 = vld [vmem:[#allocation7 + $0x5] sm:$0x1]
        %v1704 = vperm.slane %v1703, 0
        %1705 = vmatpush.msra.mxu0 %v1702
        %1706 = vmatpush.msra.mxu0 %v1701
        %1707 = vmatpush.msra.mxu0 %v1700
        %1708 = vmatpush.msra.mxu0 %v1699
        %1709 = vmatpush.msra.mxu0 %v1698
        %1710 = vmatpush.msra.mxu0 %v1697
        %1711 = vmatpush.msra.mxu0 %v1696
        %1712 = vmatpush.msra.mxu0 %v1695
        %1713 = vmatpush.msra.mxu0 %v1694
        %1714 = vmatpush.msra.mxu0 %v1693
        %1715 = vmatpush.msra.mxu0 %v1692
        %1716 = vmatpush.msra.mxu0 %v1691
        %1717 = vmatpush.msra.mxu0 %v1690
        %1718 = vmatpush.msra.mxu0 %v1689
        %1719 = vmatpush.msra.mxu0 %v1688
        %1720 = vmatpush.msra.mxu0 %v1687
        %1721 = vmatmul.f32.gmra.mxu0 %v914
        %v1722 = vpop.f32.mrf.mxu0
        %v1723 = vadd.f32 %v1704, %v1722
        %1724 = vmatmul.f32.gmra.mxu0 %v915
        %v1725 = vpop.f32.mrf.mxu0
        %v1726 = vadd.f32 %v1704, %v1725
        %1727 = vmatmul.f32.gmra.mxu0 %v916
        %v1728 = vpop.f32.mrf.mxu0
        %v1729 = vadd.f32 %v1704, %v1728
        %1730 = vmatmul.f32.gmra.mxu0 %v917
        %v1731 = vpop.f32.mrf.mxu0
        %v1732 = vadd.f32 %v1704, %v1731
        %1733 = vmatmul.f32.gmra.mxu0 %v918
        %v1734 = vpop.f32.mrf.mxu0
        %v1735 = vadd.f32 %v1704, %v1734
        %1736 = vmatmul.f32.gmra.mxu0 %v919
        %v1737 = vpop.f32.mrf.mxu0
        %v1738 = vadd.f32 %v1704, %v1737
        %1739 = vmatmul.f32.gmra.mxu0 %v920
        %v1740 = vpop.f32.mrf.mxu0
        %v1741 = vadd.f32 %v1704, %v1740
        %1742 = vmatmul.f32.gmra.mxu0 %v921
        %v1743 = vpop.f32.mrf.mxu0
        %v1744 = vadd.f32 %v1704, %v1743
        %1745 = vmatmul.f32.gmra.mxu0 %v922
        %v1746 = vpop.f32.mrf.mxu0
        %v1747 = vadd.f32 %v1704, %v1746
        %1748 = vmatmul.f32.gmra.mxu0 %v923
        %v1749 = vpop.f32.mrf.mxu0
        %v1750 = vadd.f32 %v1704, %v1749
        %1751 = vmatmul.f32.gmra.mxu0 %v924
        %v1752 = vpop.f32.mrf.mxu0
        %v1753 = vadd.f32 %v1704, %v1752
        %1754 = vmatmul.f32.gmra.mxu0 %v925
        %v1755 = vpop.f32.mrf.mxu0
        %v1756 = vadd.f32 %v1704, %v1755
        %1757 = vmatmul.f32.gmra.mxu0 %v926
        %v1758 = vpop.f32.mrf.mxu0
        %v1759 = vadd.f32 %v1704, %v1758
        %1760 = vmatmul.f32.gmra.mxu0 %v927
        %v1761 = vpop.f32.mrf.mxu0
        %v1762 = vadd.f32 %v1704, %v1761
        %1763 = vmatmul.f32.gmra.mxu0 %v928
        %v1764 = vpop.f32.mrf.mxu0
        %v1765 = vadd.f32 %v1704, %v1764
        %1766 = vmatmul.f32.gmra.mxu0 %v929
        %v1767 = vpop.f32.mrf.mxu0
        %v1768 = vadd.f32 %v1704, %v1767
        %1769 = vmatmul.f32.gmra.mxu0 %v930
        %v1770 = vpop.f32.mrf.mxu0
        %v1771 = vadd.f32 %v1704, %v1770
        %1772 = vmatmul.f32.gmra.mxu0 %v931
        %v1773 = vpop.f32.mrf.mxu0
        %v1774 = vadd.f32 %v1704, %v1773
        %1775 = vmatmul.f32.gmra.mxu0 %v932
        %v1776 = vpop.f32.mrf.mxu0
        %v1777 = vadd.f32 %v1704, %v1776
        %1778 = vmatmul.f32.gmra.mxu0 %v933
        %v1779 = vpop.f32.mrf.mxu0
        %v1780 = vadd.f32 %v1704, %v1779
        %1781 = vmatmul.f32.gmra.mxu0 %v934
        %v1782 = vpop.f32.mrf.mxu0
        %v1783 = vadd.f32 %v1704, %v1782
        %1784 = vmatmul.f32.gmra.mxu0 %v935
        %v1785 = vpop.f32.mrf.mxu0
        %v1786 = vadd.f32 %v1704, %v1785
        %1787 = vmatmul.f32.gmra.mxu0 %v936
        %v1788 = vpop.f32.mrf.mxu0
        %v1789 = vadd.f32 %v1704, %v1788
        %1790 = vmatmul.f32.gmra.mxu0 %v937
        %v1791 = vpop.f32.mrf.mxu0
        %v1792 = vadd.f32 %v1704, %v1791
        %1793 = vmatmul.f32.gmra.mxu0 %v938
        %v1794 = vpop.f32.mrf.mxu0
        %v1795 = vadd.f32 %v1704, %v1794
        %1796 = vmatmul.f32.gmra.mxu0 %v939
        %v1797 = vpop.f32.mrf.mxu0
        %v1798 = vadd.f32 %v1704, %v1797
        %1799 = vmatmul.f32.gmra.mxu0 %v940
        %v1800 = vpop.f32.mrf.mxu0
        %v1801 = vadd.f32 %v1704, %v1800
        %1802 = vmatmul.f32.gmra.mxu0 %v941
        %v1803 = vpop.f32.mrf.mxu0
        %v1804 = vadd.f32 %v1704, %v1803
        %1805 = vmatmul.f32.gmra.mxu0 %v942
        %v1806 = vpop.f32.mrf.mxu0
        %v1807 = vadd.f32 %v1704, %v1806
        %1808 = vmatmul.f32.gmra.mxu0 %v943
        %v1809 = vpop.f32.mrf.mxu0
        %v1810 = vadd.f32 %v1704, %v1809
        %1811 = vmatmul.f32.gmra.mxu0 %v944
        %v1812 = vpop.f32.mrf.mxu0
        %v1813 = vadd.f32 %v1704, %v1812
        %1814 = vmatmul.f32.gmra.mxu0 %v945
        %v1815 = vpop.f32.mrf.mxu0
        %v1816 = vadd.f32 %v1704, %v1815
        %1817 = vdwg.mxu0
        %v1818 = vmax.f32 %v1723, 0.0
        %v1819 = vmax.f32 %v1726, 0.0
        %v1820 = vmax.f32 %v1729, 0.0
        %v1821 = vmax.f32 %v1732, 0.0
        %v1822 = vmax.f32 %v1735, 0.0
        %v1823 = vmax.f32 %v1738, 0.0
        %v1824 = vmax.f32 %v1741, 0.0
        %v1825 = vmax.f32 %v1744, 0.0
        %v1826 = vmax.f32 %v1747, 0.0
        %v1827 = vmax.f32 %v1750, 0.0
        %v1828 = vmax.f32 %v1753, 0.0
        %v1829 = vmax.f32 %v1756, 0.0
        %v1830 = vmax.f32 %v1759, 0.0
        %v1831 = vmax.f32 %v1762, 0.0
        %v1832 = vmax.f32 %v1765, 0.0
        %v1833 = vmax.f32 %v1768, 0.0
        %v1834 = vmax.f32 %v1771, 0.0
        %v1835 = vmax.f32 %v1774, 0.0
        %v1836 = vmax.f32 %v1777, 0.0
        %v1837 = vmax.f32 %v1780, 0.0
        %v1838 = vmax.f32 %v1783, 0.0
        %v1839 = vmax.f32 %v1786, 0.0
        %v1840 = vmax.f32 %v1789, 0.0
        %v1841 = vmax.f32 %v1792, 0.0
        %v1842 = vmax.f32 %v1795, 0.0
        %v1843 = vmax.f32 %v1798, 0.0
        %v1844 = vmax.f32 %v1801, 0.0
        %v1845 = vmax.f32 %v1804, 0.0
        %v1846 = vmax.f32 %v1807, 0.0
        %v1847 = vmax.f32 %v1810, 0.0
        %v1848 = vmax.f32 %v1813, 0.0
        %v1849 = vmax.f32 %v1816, 0.0
        %s1850 = scalar_lea.vmem [#allocation5], 768
        %v1851 = vld [vmem:[%s1850] sm:$0xff]
        %v1852 = vld [vmem:[%s1850 + $0x8] sm:$0xff]
        %v1853 = vld [vmem:[%s1850 + $0x10] sm:$0xff]
        %v1854 = vld [vmem:[%s1850 + $0x18] sm:$0xff]
        %v1855 = vld [vmem:[%s1850 + $0x20] sm:$0xff]
        %v1856 = vld [vmem:[%s1850 + $0x28] sm:$0xff]
        %v1857 = vld [vmem:[%s1850 + $0x30] sm:$0xff]
        %v1858 = vld [vmem:[%s1850 + $0x38] sm:$0xff]
        %v1859 = vld [vmem:[%s1850 + $0x40] sm:$0xff]
        %v1860 = vld [vmem:[%s1850 + $0x48] sm:$0xff]
        %v1861 = vld [vmem:[%s1850 + $0x50] sm:$0xff]
        %v1862 = vld [vmem:[%s1850 + $0x58] sm:$0xff]
        %v1863 = vld [vmem:[%s1850 + $0x60] sm:$0xff]
        %v1864 = vld [vmem:[%s1850 + $0x68] sm:$0xff]
        %v1865 = vld [vmem:[%s1850 + $0x70] sm:$0xff]
        %v1866 = vld [vmem:[%s1850 + $0x78] sm:$0xff]
        %v1867 = vld [vmem:[#allocation7 + $0x6] sm:$0x1]
        %v1868 = vperm.slane %v1867, 0
        %1869 = vmatpush.msra.mxu0 %v1866
        %1870 = vmatpush.msra.mxu0 %v1865
        %1871 = vmatpush.msra.mxu0 %v1864
        %1872 = vmatpush.msra.mxu0 %v1863
        %1873 = vmatpush.msra.mxu0 %v1862
        %1874 = vmatpush.msra.mxu0 %v1861
        %1875 = vmatpush.msra.mxu0 %v1860
        %1876 = vmatpush.msra.mxu0 %v1859
        %1877 = vmatpush.msra.mxu0 %v1858
        %1878 = vmatpush.msra.mxu0 %v1857
        %1879 = vmatpush.msra.mxu0 %v1856
        %1880 = vmatpush.msra.mxu0 %v1855
        %1881 = vmatpush.msra.mxu0 %v1854
        %1882 = vmatpush.msra.mxu0 %v1853
        %1883 = vmatpush.msra.mxu0 %v1852
        %1884 = vmatpush.msra.mxu0 %v1851
        %1885 = vmatmul.f32.gmra.mxu0 %v1818
        %v1886 = vpop.f32.mrf.mxu0
        %v1887 = vadd.f32 %v1868, %v1886
        %1888 = vmatmul.f32.gmra.mxu0 %v1819
        %v1889 = vpop.f32.mrf.mxu0
        %v1890 = vadd.f32 %v1868, %v1889
        %1891 = vmatmul.f32.gmra.mxu0 %v1820
        %v1892 = vpop.f32.mrf.mxu0
        %v1893 = vadd.f32 %v1868, %v1892
        %1894 = vmatmul.f32.gmra.mxu0 %v1821
        %v1895 = vpop.f32.mrf.mxu0
        %v1896 = vadd.f32 %v1868, %v1895
        %1897 = vmatmul.f32.gmra.mxu0 %v1822
        %v1898 = vpop.f32.mrf.mxu0
        %v1899 = vadd.f32 %v1868, %v1898
        %1900 = vmatmul.f32.gmra.mxu0 %v1823
        %v1901 = vpop.f32.mrf.mxu0
        %v1902 = vadd.f32 %v1868, %v1901
        %1903 = vmatmul.f32.gmra.mxu0 %v1824
        %v1904 = vpop.f32.mrf.mxu0
        %v1905 = vadd.f32 %v1868, %v1904
        %1906 = vmatmul.f32.gmra.mxu0 %v1825
        %v1907 = vpop.f32.mrf.mxu0
        %v1908 = vadd.f32 %v1868, %v1907
        %1909 = vmatmul.f32.gmra.mxu0 %v1826
        %v1910 = vpop.f32.mrf.mxu0
        %v1911 = vadd.f32 %v1868, %v1910
        %1912 = vmatmul.f32.gmra.mxu0 %v1827
        %v1913 = vpop.f32.mrf.mxu0
        %v1914 = vadd.f32 %v1868, %v1913
        %1915 = vmatmul.f32.gmra.mxu0 %v1828
        %v1916 = vpop.f32.mrf.mxu0
        %v1917 = vadd.f32 %v1868, %v1916
        %1918 = vmatmul.f32.gmra.mxu0 %v1829
        %v1919 = vpop.f32.mrf.mxu0
        %v1920 = vadd.f32 %v1868, %v1919
        %1921 = vmatmul.f32.gmra.mxu0 %v1830
        %v1922 = vpop.f32.mrf.mxu0
        %v1923 = vadd.f32 %v1868, %v1922
        %1924 = vmatmul.f32.gmra.mxu0 %v1831
        %v1925 = vpop.f32.mrf.mxu0
        %v1926 = vadd.f32 %v1868, %v1925
        %1927 = vmatmul.f32.gmra.mxu0 %v1832
        %v1928 = vpop.f32.mrf.mxu0
        %v1929 = vadd.f32 %v1868, %v1928
        %1930 = vmatmul.f32.gmra.mxu0 %v1833
        %v1931 = vpop.f32.mrf.mxu0
        %v1932 = vadd.f32 %v1868, %v1931
        %1933 = vmatmul.f32.gmra.mxu0 %v1834
        %v1934 = vpop.f32.mrf.mxu0
        %v1935 = vadd.f32 %v1868, %v1934
        %1936 = vmatmul.f32.gmra.mxu0 %v1835
        %v1937 = vpop.f32.mrf.mxu0
        %v1938 = vadd.f32 %v1868, %v1937
        %1939 = vmatmul.f32.gmra.mxu0 %v1836
        %v1940 = vpop.f32.mrf.mxu0
        %v1941 = vadd.f32 %v1868, %v1940
        %1942 = vmatmul.f32.gmra.mxu0 %v1837
        %v1943 = vpop.f32.mrf.mxu0
        %v1944 = vadd.f32 %v1868, %v1943
        %1945 = vmatmul.f32.gmra.mxu0 %v1838
        %v1946 = vpop.f32.mrf.mxu0
        %v1947 = vadd.f32 %v1868, %v1946
        %1948 = vmatmul.f32.gmra.mxu0 %v1839
        %v1949 = vpop.f32.mrf.mxu0
        %v1950 = vadd.f32 %v1868, %v1949
        %1951 = vmatmul.f32.gmra.mxu0 %v1840
        %v1952 = vpop.f32.mrf.mxu0
        %v1953 = vadd.f32 %v1868, %v1952
        %1954 = vmatmul.f32.gmra.mxu0 %v1841
        %v1955 = vpop.f32.mrf.mxu0
        %v1956 = vadd.f32 %v1868, %v1955
        %1957 = vmatmul.f32.gmra.mxu0 %v1842
        %v1958 = vpop.f32.mrf.mxu0
        %v1959 = vadd.f32 %v1868, %v1958
        %1960 = vmatmul.f32.gmra.mxu0 %v1843
        %v1961 = vpop.f32.mrf.mxu0
        %v1962 = vadd.f32 %v1868, %v1961
        %1963 = vmatmul.f32.gmra.mxu0 %v1844
        %v1964 = vpop.f32.mrf.mxu0
        %v1965 = vadd.f32 %v1868, %v1964
        %1966 = vmatmul.f32.gmra.mxu0 %v1845
        %v1967 = vpop.f32.mrf.mxu0
        %v1968 = vadd.f32 %v1868, %v1967
        %1969 = vmatmul.f32.gmra.mxu0 %v1846
        %v1970 = vpop.f32.mrf.mxu0
        %v1971 = vadd.f32 %v1868, %v1970
        %1972 = vmatmul.f32.gmra.mxu0 %v1847
        %v1973 = vpop.f32.mrf.mxu0
        %v1974 = vadd.f32 %v1868, %v1973
        %1975 = vmatmul.f32.gmra.mxu0 %v1848
        %v1976 = vpop.f32.mrf.mxu0
        %v1977 = vadd.f32 %v1868, %v1976
        %1978 = vmatmul.f32.gmra.mxu0 %v1849
        %v1979 = vpop.f32.mrf.mxu0
        %v1980 = vadd.f32 %v1868, %v1979
        %1981 = vdwg.mxu0
        %v1982 = vmax.f32 %v1887, 0.0
        %v1983 = vmax.f32 %v1890, 0.0
        %v1984 = vmax.f32 %v1893, 0.0
        %v1985 = vmax.f32 %v1896, 0.0
        %v1986 = vmax.f32 %v1899, 0.0
        %v1987 = vmax.f32 %v1902, 0.0
        %v1988 = vmax.f32 %v1905, 0.0
        %v1989 = vmax.f32 %v1908, 0.0
        %v1990 = vmax.f32 %v1911, 0.0
        %v1991 = vmax.f32 %v1914, 0.0
        %v1992 = vmax.f32 %v1917, 0.0
        %v1993 = vmax.f32 %v1920, 0.0
        %v1994 = vmax.f32 %v1923, 0.0
        %v1995 = vmax.f32 %v1926, 0.0
        %v1996 = vmax.f32 %v1929, 0.0
        %v1997 = vmax.f32 %v1932, 0.0
        %v1998 = vmax.f32 %v1935, 0.0
        %v1999 = vmax.f32 %v1938, 0.0
        %v2000 = vmax.f32 %v1941, 0.0
        %v2001 = vmax.f32 %v1944, 0.0
        %v2002 = vmax.f32 %v1947, 0.0
        %v2003 = vmax.f32 %v1950, 0.0
        %v2004 = vmax.f32 %v1953, 0.0
        %v2005 = vmax.f32 %v1956, 0.0
        %v2006 = vmax.f32 %v1959, 0.0
        %v2007 = vmax.f32 %v1962, 0.0
        %v2008 = vmax.f32 %v1965, 0.0
        %v2009 = vmax.f32 %v1968, 0.0
        %v2010 = vmax.f32 %v1971, 0.0
        %v2011 = vmax.f32 %v1974, 0.0
        %v2012 = vmax.f32 %v1977, 0.0
        %v2013 = vmax.f32 %v1980, 0.0
        %s2014 = scalar_lea.vmem [#allocation5], 896
        %v2015 = vld [vmem:[%s2014] sm:$0xff]
        %v2016 = vld [vmem:[%s2014 + $0x8] sm:$0xff]
        %v2017 = vld [vmem:[%s2014 + $0x10] sm:$0xff]
        %v2018 = vld [vmem:[%s2014 + $0x18] sm:$0xff]
        %v2019 = vld [vmem:[%s2014 + $0x20] sm:$0xff]
        %v2020 = vld [vmem:[%s2014 + $0x28] sm:$0xff]
        %v2021 = vld [vmem:[%s2014 + $0x30] sm:$0xff]
        %v2022 = vld [vmem:[%s2014 + $0x38] sm:$0xff]
        %v2023 = vld [vmem:[%s2014 + $0x40] sm:$0xff]
        %v2024 = vld [vmem:[%s2014 + $0x48] sm:$0xff]
        %v2025 = vld [vmem:[%s2014 + $0x50] sm:$0xff]
        %v2026 = vld [vmem:[%s2014 + $0x58] sm:$0xff]
        %v2027 = vld [vmem:[%s2014 + $0x60] sm:$0xff]
        %v2028 = vld [vmem:[%s2014 + $0x68] sm:$0xff]
        %v2029 = vld [vmem:[%s2014 + $0x70] sm:$0xff]
        %v2030 = vld [vmem:[%s2014 + $0x78] sm:$0xff]
        %v2031 = vld [vmem:[#allocation7 + $0x7] sm:$0x1]
        %v2032 = vperm.slane %v2031, 0
        %2033 = vmatpush.msra.mxu0 %v2030
        %2034 = vmatpush.msra.mxu0 %v2029
        %2035 = vmatpush.msra.mxu0 %v2028
        %2036 = vmatpush.msra.mxu0 %v2027
        %2037 = vmatpush.msra.mxu0 %v2026
        %2038 = vmatpush.msra.mxu0 %v2025
        %2039 = vmatpush.msra.mxu0 %v2024
        %2040 = vmatpush.msra.mxu0 %v2023
        %2041 = vmatpush.msra.mxu0 %v2022
        %2042 = vmatpush.msra.mxu0 %v2021
        %2043 = vmatpush.msra.mxu0 %v2020
        %2044 = vmatpush.msra.mxu0 %v2019
        %2045 = vmatpush.msra.mxu0 %v2018
        %2046 = vmatpush.msra.mxu0 %v2017
        %2047 = vmatpush.msra.mxu0 %v2016
        %2048 = vmatpush.msra.mxu0 %v2015
        %2049 = vmatmul.f32.gmra.mxu0 %v1982
        %v2050 = vpop.f32.mrf.mxu0
        %v2051 = vadd.f32 %v2032, %v2050
        %2052 = vmatmul.f32.gmra.mxu0 %v1983
        %v2053 = vpop.f32.mrf.mxu0
        %v2054 = vadd.f32 %v2032, %v2053
        %2055 = vmatmul.f32.gmra.mxu0 %v1984
        %v2056 = vpop.f32.mrf.mxu0
        %v2057 = vadd.f32 %v2032, %v2056
        %2058 = vmatmul.f32.gmra.mxu0 %v1985
        %v2059 = vpop.f32.mrf.mxu0
        %v2060 = vadd.f32 %v2032, %v2059
        %2061 = vmatmul.f32.gmra.mxu0 %v1986
        %v2062 = vpop.f32.mrf.mxu0
        %v2063 = vadd.f32 %v2032, %v2062
        %2064 = vmatmul.f32.gmra.mxu0 %v1987
        %v2065 = vpop.f32.mrf.mxu0
        %v2066 = vadd.f32 %v2032, %v2065
        %2067 = vmatmul.f32.gmra.mxu0 %v1988
        %v2068 = vpop.f32.mrf.mxu0
        %v2069 = vadd.f32 %v2032, %v2068
        %2070 = vmatmul.f32.gmra.mxu0 %v1989
        %v2071 = vpop.f32.mrf.mxu0
        %v2072 = vadd.f32 %v2032, %v2071
        %2073 = vmatmul.f32.gmra.mxu0 %v1990
        %v2074 = vpop.f32.mrf.mxu0
        %v2075 = vadd.f32 %v2032, %v2074
        %2076 = vmatmul.f32.gmra.mxu0 %v1991
        %v2077 = vpop.f32.mrf.mxu0
        %v2078 = vadd.f32 %v2032, %v2077
        %2079 = vmatmul.f32.gmra.mxu0 %v1992
        %v2080 = vpop.f32.mrf.mxu0
        %v2081 = vadd.f32 %v2032, %v2080
        %2082 = vmatmul.f32.gmra.mxu0 %v1993
        %v2083 = vpop.f32.mrf.mxu0
        %v2084 = vadd.f32 %v2032, %v2083
        %2085 = vmatmul.f32.gmra.mxu0 %v1994
        %v2086 = vpop.f32.mrf.mxu0
        %v2087 = vadd.f32 %v2032, %v2086
        %2088 = vmatmul.f32.gmra.mxu0 %v1995
        %v2089 = vpop.f32.mrf.mxu0
        %v2090 = vadd.f32 %v2032, %v2089
        %2091 = vmatmul.f32.gmra.mxu0 %v1996
        %v2092 = vpop.f32.mrf.mxu0
        %v2093 = vadd.f32 %v2032, %v2092
        %2094 = vmatmul.f32.gmra.mxu0 %v1997
        %v2095 = vpop.f32.mrf.mxu0
        %v2096 = vadd.f32 %v2032, %v2095
        %2097 = vmatmul.f32.gmra.mxu0 %v1998
        %v2098 = vpop.f32.mrf.mxu0
        %v2099 = vadd.f32 %v2032, %v2098
        %2100 = vmatmul.f32.gmra.mxu0 %v1999
        %v2101 = vpop.f32.mrf.mxu0
        %v2102 = vadd.f32 %v2032, %v2101
        %2103 = vmatmul.f32.gmra.mxu0 %v2000
        %v2104 = vpop.f32.mrf.mxu0
        %v2105 = vadd.f32 %v2032, %v2104
        %2106 = vmatmul.f32.gmra.mxu0 %v2001
        %v2107 = vpop.f32.mrf.mxu0
        %v2108 = vadd.f32 %v2032, %v2107
        %2109 = vmatmul.f32.gmra.mxu0 %v2002
        %v2110 = vpop.f32.mrf.mxu0
        %v2111 = vadd.f32 %v2032, %v2110
        %2112 = vmatmul.f32.gmra.mxu0 %v2003
        %v2113 = vpop.f32.mrf.mxu0
        %v2114 = vadd.f32 %v2032, %v2113
        %2115 = vmatmul.f32.gmra.mxu0 %v2004
        %v2116 = vpop.f32.mrf.mxu0
        %v2117 = vadd.f32 %v2032, %v2116
        %2118 = vmatmul.f32.gmra.mxu0 %v2005
        %v2119 = vpop.f32.mrf.mxu0
        %v2120 = vadd.f32 %v2032, %v2119
        %2121 = vmatmul.f32.gmra.mxu0 %v2006
        %v2122 = vpop.f32.mrf.mxu0
        %v2123 = vadd.f32 %v2032, %v2122
        %2124 = vmatmul.f32.gmra.mxu0 %v2007
        %v2125 = vpop.f32.mrf.mxu0
        %v2126 = vadd.f32 %v2032, %v2125
        %2127 = vmatmul.f32.gmra.mxu0 %v2008
        %v2128 = vpop.f32.mrf.mxu0
        %v2129 = vadd.f32 %v2032, %v2128
        %2130 = vmatmul.f32.gmra.mxu0 %v2009
        %v2131 = vpop.f32.mrf.mxu0
        %v2132 = vadd.f32 %v2032, %v2131
        %2133 = vmatmul.f32.gmra.mxu0 %v2010
        %v2134 = vpop.f32.mrf.mxu0
        %v2135 = vadd.f32 %v2032, %v2134
        %2136 = vmatmul.f32.gmra.mxu0 %v2011
        %v2137 = vpop.f32.mrf.mxu0
        %v2138 = vadd.f32 %v2032, %v2137
        %2139 = vmatmul.f32.gmra.mxu0 %v2012
        %v2140 = vpop.f32.mrf.mxu0
        %v2141 = vadd.f32 %v2032, %v2140
        %2142 = vmatmul.f32.gmra.mxu0 %v2013
        %v2143 = vpop.f32.mrf.mxu0
        %v2144 = vadd.f32 %v2032, %v2143
        %2145 = vdwg.mxu0
        %v2146 = vmax.f32 %v2051, 0.0
        %v2147 = vmax.f32 %v2054, 0.0
        %v2148 = vmax.f32 %v2057, 0.0
        %v2149 = vmax.f32 %v2060, 0.0
        %v2150 = vmax.f32 %v2063, 0.0
        %v2151 = vmax.f32 %v2066, 0.0
        %v2152 = vmax.f32 %v2069, 0.0
        %v2153 = vmax.f32 %v2072, 0.0
        %v2154 = vmax.f32 %v2075, 0.0
        %v2155 = vmax.f32 %v2078, 0.0
        %v2156 = vmax.f32 %v2081, 0.0
        %v2157 = vmax.f32 %v2084, 0.0
        %v2158 = vmax.f32 %v2087, 0.0
        %v2159 = vmax.f32 %v2090, 0.0
        %v2160 = vmax.f32 %v2093, 0.0
        %v2161 = vmax.f32 %v2096, 0.0
        %v2162 = vmax.f32 %v2099, 0.0
        %v2163 = vmax.f32 %v2102, 0.0
        %v2164 = vmax.f32 %v2105, 0.0
        %v2165 = vmax.f32 %v2108, 0.0
        %v2166 = vmax.f32 %v2111, 0.0
        %v2167 = vmax.f32 %v2114, 0.0
        %v2168 = vmax.f32 %v2117, 0.0
        %v2169 = vmax.f32 %v2120, 0.0
        %v2170 = vmax.f32 %v2123, 0.0
        %v2171 = vmax.f32 %v2126, 0.0
        %v2172 = vmax.f32 %v2129, 0.0
        %v2173 = vmax.f32 %v2132, 0.0
        %v2174 = vmax.f32 %v2135, 0.0
        %v2175 = vmax.f32 %v2138, 0.0
        %v2176 = vmax.f32 %v2141, 0.0
        %v2177 = vmax.f32 %v2144, 0.0
        %s2178 = scalar_lea.vmem [#allocation5], 1024
        %v2179 = vld [vmem:[%s2178] sm:$0xff]
        %v2180 = vld [vmem:[%s2178 + $0x8] sm:$0xff]
        %v2181 = vld [vmem:[%s2178 + $0x10] sm:$0xff]
        %v2182 = vld [vmem:[%s2178 + $0x18] sm:$0xff]
        %v2183 = vld [vmem:[%s2178 + $0x20] sm:$0xff]
        %v2184 = vld [vmem:[%s2178 + $0x28] sm:$0xff]
        %v2185 = vld [vmem:[%s2178 + $0x30] sm:$0xff]
        %v2186 = vld [vmem:[%s2178 + $0x38] sm:$0xff]
        %v2187 = vld [vmem:[%s2178 + $0x40] sm:$0xff]
        %v2188 = vld [vmem:[%s2178 + $0x48] sm:$0xff]
        %v2189 = vld [vmem:[%s2178 + $0x50] sm:$0xff]
        %v2190 = vld [vmem:[%s2178 + $0x58] sm:$0xff]
        %v2191 = vld [vmem:[%s2178 + $0x60] sm:$0xff]
        %v2192 = vld [vmem:[%s2178 + $0x68] sm:$0xff]
        %v2193 = vld [vmem:[%s2178 + $0x70] sm:$0xff]
        %v2194 = vld [vmem:[%s2178 + $0x78] sm:$0xff]
        %v2195 = vld [vmem:[#allocation7 + $0x8] sm:$0x1]
        %v2196 = vperm.slane %v2195, 0
        %2197 = vmatpush.msra.mxu0 %v2194
        %2198 = vmatpush.msra.mxu0 %v2193
        %2199 = vmatpush.msra.mxu0 %v2192
        %2200 = vmatpush.msra.mxu0 %v2191
        %2201 = vmatpush.msra.mxu0 %v2190
        %2202 = vmatpush.msra.mxu0 %v2189
        %2203 = vmatpush.msra.mxu0 %v2188
        %2204 = vmatpush.msra.mxu0 %v2187
        %2205 = vmatpush.msra.mxu0 %v2186
        %2206 = vmatpush.msra.mxu0 %v2185
        %2207 = vmatpush.msra.mxu0 %v2184
        %2208 = vmatpush.msra.mxu0 %v2183
        %2209 = vmatpush.msra.mxu0 %v2182
        %2210 = vmatpush.msra.mxu0 %v2181
        %2211 = vmatpush.msra.mxu0 %v2180
        %2212 = vmatpush.msra.mxu0 %v2179
        %2213 = vmatmul.f32.gmra.mxu0 %v2146
        %v2214 = vpop.f32.mrf.mxu0
        %v2215 = vadd.f32 %v2196, %v2214
        %2216 = vmatmul.f32.gmra.mxu0 %v2147
        %v2217 = vpop.f32.mrf.mxu0
        %v2218 = vadd.f32 %v2196, %v2217
        %2219 = vmatmul.f32.gmra.mxu0 %v2148
        %v2220 = vpop.f32.mrf.mxu0
        %v2221 = vadd.f32 %v2196, %v2220
        %2222 = vmatmul.f32.gmra.mxu0 %v2149
        %v2223 = vpop.f32.mrf.mxu0
        %v2224 = vadd.f32 %v2196, %v2223
        %2225 = vmatmul.f32.gmra.mxu0 %v2150
        %v2226 = vpop.f32.mrf.mxu0
        %v2227 = vadd.f32 %v2196, %v2226
        %2228 = vmatmul.f32.gmra.mxu0 %v2151
        %v2229 = vpop.f32.mrf.mxu0
        %v2230 = vadd.f32 %v2196, %v2229
        %2231 = vmatmul.f32.gmra.mxu0 %v2152
        %v2232 = vpop.f32.mrf.mxu0
        %v2233 = vadd.f32 %v2196, %v2232
        %2234 = vmatmul.f32.gmra.mxu0 %v2153
        %v2235 = vpop.f32.mrf.mxu0
        %v2236 = vadd.f32 %v2196, %v2235
        %2237 = vmatmul.f32.gmra.mxu0 %v2154
        %v2238 = vpop.f32.mrf.mxu0
        %v2239 = vadd.f32 %v2196, %v2238
        %2240 = vmatmul.f32.gmra.mxu0 %v2155
        %v2241 = vpop.f32.mrf.mxu0
        %v2242 = vadd.f32 %v2196, %v2241
        %2243 = vmatmul.f32.gmra.mxu0 %v2156
        %v2244 = vpop.f32.mrf.mxu0
        %v2245 = vadd.f32 %v2196, %v2244
        %2246 = vmatmul.f32.gmra.mxu0 %v2157
        %v2247 = vpop.f32.mrf.mxu0
        %v2248 = vadd.f32 %v2196, %v2247
        %2249 = vmatmul.f32.gmra.mxu0 %v2158
        %v2250 = vpop.f32.mrf.mxu0
        %v2251 = vadd.f32 %v2196, %v2250
        %2252 = vmatmul.f32.gmra.mxu0 %v2159
        %v2253 = vpop.f32.mrf.mxu0
        %v2254 = vadd.f32 %v2196, %v2253
        %2255 = vmatmul.f32.gmra.mxu0 %v2160
        %v2256 = vpop.f32.mrf.mxu0
        %v2257 = vadd.f32 %v2196, %v2256
        %2258 = vmatmul.f32.gmra.mxu0 %v2161
        %v2259 = vpop.f32.mrf.mxu0
        %v2260 = vadd.f32 %v2196, %v2259
        %2261 = vmatmul.f32.gmra.mxu0 %v2162
        %v2262 = vpop.f32.mrf.mxu0
        %v2263 = vadd.f32 %v2196, %v2262
        %2264 = vmatmul.f32.gmra.mxu0 %v2163
        %v2265 = vpop.f32.mrf.mxu0
        %v2266 = vadd.f32 %v2196, %v2265
        %2267 = vmatmul.f32.gmra.mxu0 %v2164
        %v2268 = vpop.f32.mrf.mxu0
        %v2269 = vadd.f32 %v2196, %v2268
        %2270 = vmatmul.f32.gmra.mxu0 %v2165
        %v2271 = vpop.f32.mrf.mxu0
        %v2272 = vadd.f32 %v2196, %v2271
        %2273 = vmatmul.f32.gmra.mxu0 %v2166
        %v2274 = vpop.f32.mrf.mxu0
        %v2275 = vadd.f32 %v2196, %v2274
        %2276 = vmatmul.f32.gmra.mxu0 %v2167
        %v2277 = vpop.f32.mrf.mxu0
        %v2278 = vadd.f32 %v2196, %v2277
        %2279 = vmatmul.f32.gmra.mxu0 %v2168
        %v2280 = vpop.f32.mrf.mxu0
        %v2281 = vadd.f32 %v2196, %v2280
        %2282 = vmatmul.f32.gmra.mxu0 %v2169
        %v2283 = vpop.f32.mrf.mxu0
        %v2284 = vadd.f32 %v2196, %v2283
        %2285 = vmatmul.f32.gmra.mxu0 %v2170
        %v2286 = vpop.f32.mrf.mxu0
        %v2287 = vadd.f32 %v2196, %v2286
        %2288 = vmatmul.f32.gmra.mxu0 %v2171
        %v2289 = vpop.f32.mrf.mxu0
        %v2290 = vadd.f32 %v2196, %v2289
        %2291 = vmatmul.f32.gmra.mxu0 %v2172
        %v2292 = vpop.f32.mrf.mxu0
        %v2293 = vadd.f32 %v2196, %v2292
        %2294 = vmatmul.f32.gmra.mxu0 %v2173
        %v2295 = vpop.f32.mrf.mxu0
        %v2296 = vadd.f32 %v2196, %v2295
        %2297 = vmatmul.f32.gmra.mxu0 %v2174
        %v2298 = vpop.f32.mrf.mxu0
        %v2299 = vadd.f32 %v2196, %v2298
        %2300 = vmatmul.f32.gmra.mxu0 %v2175
        %v2301 = vpop.f32.mrf.mxu0
        %v2302 = vadd.f32 %v2196, %v2301
        %2303 = vmatmul.f32.gmra.mxu0 %v2176
        %v2304 = vpop.f32.mrf.mxu0
        %v2305 = vadd.f32 %v2196, %v2304
        %2306 = vmatmul.f32.gmra.mxu0 %v2177
        %v2307 = vpop.f32.mrf.mxu0
        %v2308 = vadd.f32 %v2196, %v2307
        %2309 = vdwg.mxu0
        %v2310 = vmul.f32 %v2215, 2.0
        %v2311 = vmul.f32 %v2218, 2.0
        %v2312 = vmul.f32 %v2221, 2.0
        %v2313 = vmul.f32 %v2224, 2.0
        %v2314 = vmul.f32 %v2227, 2.0
        %v2315 = vmul.f32 %v2230, 2.0
        %v2316 = vmul.f32 %v2233, 2.0
        %v2317 = vmul.f32 %v2236, 2.0
        %v2318 = vmul.f32 %v2239, 2.0
        %v2319 = vmul.f32 %v2242, 2.0
        %v2320 = vmul.f32 %v2245, 2.0
        %v2321 = vmul.f32 %v2248, 2.0
        %v2322 = vmul.f32 %v2251, 2.0
        %v2323 = vmul.f32 %v2254, 2.0
        %v2324 = vmul.f32 %v2257, 2.0
        %v2325 = vmul.f32 %v2260, 2.0
        %v2326 = vmul.f32 %v2263, 2.0
        %v2327 = vmul.f32 %v2266, 2.0
        %v2328 = vmul.f32 %v2269, 2.0
        %v2329 = vmul.f32 %v2272, 2.0
        %v2330 = vmul.f32 %v2275, 2.0
        %v2331 = vmul.f32 %v2278, 2.0
        %v2332 = vmul.f32 %v2281, 2.0
        %v2333 = vmul.f32 %v2284, 2.0
        %v2334 = vmul.f32 %v2287, 2.0
        %v2335 = vmul.f32 %v2290, 2.0
        %v2336 = vmul.f32 %v2293, 2.0
        %v2337 = vmul.f32 %v2296, 2.0
        %v2338 = vmul.f32 %v2299, 2.0
        %v2339 = vmul.f32 %v2302, 2.0
        %v2340 = vmul.f32 %v2305, 2.0
        %v2341 = vmul.f32 %v2308, 2.0
        %v2342 = vxor.u32 %v2310, 2147483648
        %v2343 = vxor.u32 %v2311, 2147483648
        %v2344 = vxor.u32 %v2312, 2147483648
        %v2345 = vxor.u32 %v2313, 2147483648
        %v2346 = vxor.u32 %v2314, 2147483648
        %v2347 = vxor.u32 %v2315, 2147483648
        %v2348 = vxor.u32 %v2316, 2147483648
        %v2349 = vxor.u32 %v2317, 2147483648
        %v2350 = vxor.u32 %v2318, 2147483648
        %v2351 = vxor.u32 %v2319, 2147483648
        %v2352 = vxor.u32 %v2320, 2147483648
        %v2353 = vxor.u32 %v2321, 2147483648
        %v2354 = vxor.u32 %v2322, 2147483648
        %v2355 = vxor.u32 %v2323, 2147483648
        %v2356 = vxor.u32 %v2324, 2147483648
        %v2357 = vxor.u32 %v2325, 2147483648
        %v2358 = vxor.u32 %v2326, 2147483648
        %v2359 = vxor.u32 %v2327, 2147483648
        %v2360 = vxor.u32 %v2328, 2147483648
        %v2361 = vxor.u32 %v2329, 2147483648
        %v2362 = vxor.u32 %v2330, 2147483648
        %v2363 = vxor.u32 %v2331, 2147483648
        %v2364 = vxor.u32 %v2332, 2147483648
        %v2365 = vxor.u32 %v2333, 2147483648
        %v2366 = vxor.u32 %v2334, 2147483648
        %v2367 = vxor.u32 %v2335, 2147483648
        %v2368 = vxor.u32 %v2336, 2147483648
        %v2369 = vxor.u32 %v2337, 2147483648
        %v2370 = vxor.u32 %v2338, 2147483648
        %v2371 = vxor.u32 %v2339, 2147483648
        %v2372 = vxor.u32 %v2340, 2147483648
        %v2373 = vxor.u32 %v2341, 2147483648
        %v2374 = vmul.f32 %v2342, 1.442695
        %v2375 = vpow.pop %v2374
        %v2376 = vmul.f32 %v2343, 1.442695
        %v2377 = vpow.pop %v2376
        %v2378 = vmul.f32 %v2344, 1.442695
        %v2379 = vpow.pop %v2378
        %v2380 = vmul.f32 %v2345, 1.442695
        %v2381 = vpow.pop %v2380
        %v2382 = vmul.f32 %v2346, 1.442695
        %v2383 = vpow.pop %v2382
        %v2384 = vmul.f32 %v2347, 1.442695
        %v2385 = vpow.pop %v2384
        %v2386 = vmul.f32 %v2348, 1.442695
        %v2387 = vpow.pop %v2386
        %v2388 = vmul.f32 %v2349, 1.442695
        %v2389 = vpow.pop %v2388
        %v2390 = vmul.f32 %v2350, 1.442695
        %v2391 = vpow.pop %v2390
        %v2392 = vmul.f32 %v2351, 1.442695
        %v2393 = vpow.pop %v2392
        %v2394 = vmul.f32 %v2352, 1.442695
        %v2395 = vpow.pop %v2394
        %v2396 = vmul.f32 %v2353, 1.442695
        %v2397 = vpow.pop %v2396
        %v2398 = vmul.f32 %v2354, 1.442695
        %v2399 = vpow.pop %v2398
        %v2400 = vmul.f32 %v2355, 1.442695
        %v2401 = vpow.pop %v2400
        %v2402 = vmul.f32 %v2356, 1.442695
        %v2403 = vpow.pop %v2402
        %v2404 = vmul.f32 %v2357, 1.442695
        %v2405 = vpow.pop %v2404
        %v2406 = vmul.f32 %v2358, 1.442695
        %v2407 = vpow.pop %v2406
        %v2408 = vmul.f32 %v2359, 1.442695
        %v2409 = vpow.pop %v2408
        %v2410 = vmul.f32 %v2360, 1.442695
        %v2411 = vpow.pop %v2410
        %v2412 = vmul.f32 %v2361, 1.442695
        %v2413 = vpow.pop %v2412
        %v2414 = vmul.f32 %v2362, 1.442695
        %v2415 = vpow.pop %v2414
        %v2416 = vmul.f32 %v2363, 1.442695
        %v2417 = vpow.pop %v2416
        %v2418 = vmul.f32 %v2364, 1.442695
        %v2419 = vpow.pop %v2418
        %v2420 = vmul.f32 %v2365, 1.442695
        %v2421 = vpow.pop %v2420
        %v2422 = vmul.f32 %v2366, 1.442695
        %v2423 = vpow.pop %v2422
        %v2424 = vmul.f32 %v2367, 1.442695
        %v2425 = vpow.pop %v2424
        %v2426 = vmul.f32 %v2368, 1.442695
        %v2427 = vpow.pop %v2426
        %v2428 = vmul.f32 %v2369, 1.442695
        %v2429 = vpow.pop %v2428
        %v2430 = vmul.f32 %v2370, 1.442695
        %v2431 = vpow.pop %v2430
        %v2432 = vmul.f32 %v2371, 1.442695
        %v2433 = vpow.pop %v2432
        %v2434 = vmul.f32 %v2372, 1.442695
        %v2435 = vpow.pop %v2434
        %v2436 = vmul.f32 %v2373, 1.442695
        %v2437 = vpow.pop %v2436
        %v2438 = vadd.f32 %v2375, 1.0
        %v2439 = vadd.f32 %v2377, 1.0
        %v2440 = vadd.f32 %v2379, 1.0
        %v2441 = vadd.f32 %v2381, 1.0
        %v2442 = vadd.f32 %v2383, 1.0
        %v2443 = vadd.f32 %v2385, 1.0
        %v2444 = vadd.f32 %v2387, 1.0
        %v2445 = vadd.f32 %v2389, 1.0
        %v2446 = vadd.f32 %v2391, 1.0
        %v2447 = vadd.f32 %v2393, 1.0
        %v2448 = vadd.f32 %v2395, 1.0
        %v2449 = vadd.f32 %v2397, 1.0
        %v2450 = vadd.f32 %v2399, 1.0
        %v2451 = vadd.f32 %v2401, 1.0
        %v2452 = vadd.f32 %v2403, 1.0
        %v2453 = vadd.f32 %v2405, 1.0
        %v2454 = vadd.f32 %v2407, 1.0
        %v2455 = vadd.f32 %v2409, 1.0
        %v2456 = vadd.f32 %v2411, 1.0
        %v2457 = vadd.f32 %v2413, 1.0
        %v2458 = vadd.f32 %v2415, 1.0
        %v2459 = vadd.f32 %v2417, 1.0
        %v2460 = vadd.f32 %v2419, 1.0
        %v2461 = vadd.f32 %v2421, 1.0
        %v2462 = vadd.f32 %v2423, 1.0
        %v2463 = vadd.f32 %v2425, 1.0
        %v2464 = vadd.f32 %v2427, 1.0
        %v2465 = vadd.f32 %v2429, 1.0
        %v2466 = vadd.f32 %v2431, 1.0
        %v2467 = vadd.f32 %v2433, 1.0
        %v2468 = vadd.f32 %v2435, 1.0
        %v2469 = vadd.f32 %v2437, 1.0
        %v2470 = vrcp.pop %v2438
        %v2471 = vmul.f32 %v2438, %v2470
        %v2472 = vsub.f32 1.0, %v2471
        %v2473 = vmul.f32 %v2470, %v2472
        %v2474 = vadd.f32 %v2470, %v2473
        %vm2475 = vweird.f32 %v2438
        %vm2476 = vweird.f32 %v2470
        %vm2477 = vmor %vm2475, %vm2476
        %v2478 = vsel %vm2477, %v2470, %v2474
        %v2479 = vand.u32 2147483647, %v2438
        %vm2480 = vcmp.eq.f32.partialorder %v2479, 8.507059e+37
        %v2481 = vand.u32 %v2438, 2147483648
        %v2482 = vor.u32 1.1754944e-38, %v2481
        %v2483 = vsel %vm2480, %v2482, %v2478
        %v2484 = vmul.f32 1.0, %v2483
        %v2485 = vrcp.pop %v2439
        %v2486 = vmul.f32 %v2439, %v2485
        %v2487 = vsub.f32 1.0, %v2486
        %v2488 = vmul.f32 %v2485, %v2487
        %v2489 = vadd.f32 %v2485, %v2488
        %vm2490 = vweird.f32 %v2439
        %vm2491 = vweird.f32 %v2485
        %vm2492 = vmor %vm2490, %vm2491
        %v2493 = vsel %vm2492, %v2485, %v2489
        %v2494 = vand.u32 2147483647, %v2439
        %vm2495 = vcmp.eq.f32.partialorder %v2494, 8.507059e+37
        %v2496 = vand.u32 %v2439, 2147483648
        %v2497 = vor.u32 1.1754944e-38, %v2496
        %v2498 = vsel %vm2495, %v2497, %v2493
        %v2499 = vmul.f32 1.0, %v2498
        %v2500 = vrcp.pop %v2440
        %v2501 = vmul.f32 %v2440, %v2500
        %v2502 = vsub.f32 1.0, %v2501
        %v2503 = vmul.f32 %v2500, %v2502
        %v2504 = vadd.f32 %v2500, %v2503
        %vm2505 = vweird.f32 %v2440
        %vm2506 = vweird.f32 %v2500
        %vm2507 = vmor %vm2505, %vm2506
        %v2508 = vsel %vm2507, %v2500, %v2504
        %v2509 = vand.u32 2147483647, %v2440
        %vm2510 = vcmp.eq.f32.partialorder %v2509, 8.507059e+37
        %v2511 = vand.u32 %v2440, 2147483648
        %v2512 = vor.u32 1.1754944e-38, %v2511
        %v2513 = vsel %vm2510, %v2512, %v2508
        %v2514 = vmul.f32 1.0, %v2513
        %v2515 = vrcp.pop %v2441
        %v2516 = vmul.f32 %v2441, %v2515
        %v2517 = vsub.f32 1.0, %v2516
        %v2518 = vmul.f32 %v2515, %v2517
        %v2519 = vadd.f32 %v2515, %v2518
        %vm2520 = vweird.f32 %v2441
        %vm2521 = vweird.f32 %v2515
        %vm2522 = vmor %vm2520, %vm2521
        %v2523 = vsel %vm2522, %v2515, %v2519
        %v2524 = vand.u32 2147483647, %v2441
        %vm2525 = vcmp.eq.f32.partialorder %v2524, 8.507059e+37
        %v2526 = vand.u32 %v2441, 2147483648
        %v2527 = vor.u32 1.1754944e-38, %v2526
        %v2528 = vsel %vm2525, %v2527, %v2523
        %v2529 = vmul.f32 1.0, %v2528
        %v2530 = vrcp.pop %v2442
        %v2531 = vmul.f32 %v2442, %v2530
        %v2532 = vsub.f32 1.0, %v2531
        %v2533 = vmul.f32 %v2530, %v2532
        %v2534 = vadd.f32 %v2530, %v2533
        %vm2535 = vweird.f32 %v2442
        %vm2536 = vweird.f32 %v2530
        %vm2537 = vmor %vm2535, %vm2536
        %v2538 = vsel %vm2537, %v2530, %v2534
        %v2539 = vand.u32 2147483647, %v2442
        %vm2540 = vcmp.eq.f32.partialorder %v2539, 8.507059e+37
        %v2541 = vand.u32 %v2442, 2147483648
        %v2542 = vor.u32 1.1754944e-38, %v2541
        %v2543 = vsel %vm2540, %v2542, %v2538
        %v2544 = vmul.f32 1.0, %v2543
        %v2545 = vrcp.pop %v2443
        %v2546 = vmul.f32 %v2443, %v2545
        %v2547 = vsub.f32 1.0, %v2546
        %v2548 = vmul.f32 %v2545, %v2547
        %v2549 = vadd.f32 %v2545, %v2548
        %vm2550 = vweird.f32 %v2443
        %vm2551 = vweird.f32 %v2545
        %vm2552 = vmor %vm2550, %vm2551
        %v2553 = vsel %vm2552, %v2545, %v2549
        %v2554 = vand.u32 2147483647, %v2443
        %vm2555 = vcmp.eq.f32.partialorder %v2554, 8.507059e+37
        %v2556 = vand.u32 %v2443, 2147483648
        %v2557 = vor.u32 1.1754944e-38, %v2556
        %v2558 = vsel %vm2555, %v2557, %v2553
        %v2559 = vmul.f32 1.0, %v2558
        %v2560 = vrcp.pop %v2444
        %v2561 = vmul.f32 %v2444, %v2560
        %v2562 = vsub.f32 1.0, %v2561
        %v2563 = vmul.f32 %v2560, %v2562
        %v2564 = vadd.f32 %v2560, %v2563
        %vm2565 = vweird.f32 %v2444
        %vm2566 = vweird.f32 %v2560
        %vm2567 = vmor %vm2565, %vm2566
        %v2568 = vsel %vm2567, %v2560, %v2564
        %v2569 = vand.u32 2147483647, %v2444
        %vm2570 = vcmp.eq.f32.partialorder %v2569, 8.507059e+37
        %v2571 = vand.u32 %v2444, 2147483648
        %v2572 = vor.u32 1.1754944e-38, %v2571
        %v2573 = vsel %vm2570, %v2572, %v2568
        %v2574 = vmul.f32 1.0, %v2573
        %v2575 = vrcp.pop %v2445
        %v2576 = vmul.f32 %v2445, %v2575
        %v2577 = vsub.f32 1.0, %v2576
        %v2578 = vmul.f32 %v2575, %v2577
        %v2579 = vadd.f32 %v2575, %v2578
        %vm2580 = vweird.f32 %v2445
        %vm2581 = vweird.f32 %v2575
        %vm2582 = vmor %vm2580, %vm2581
        %v2583 = vsel %vm2582, %v2575, %v2579
        %v2584 = vand.u32 2147483647, %v2445
        %vm2585 = vcmp.eq.f32.partialorder %v2584, 8.507059e+37
        %v2586 = vand.u32 %v2445, 2147483648
        %v2587 = vor.u32 1.1754944e-38, %v2586
        %v2588 = vsel %vm2585, %v2587, %v2583
        %v2589 = vmul.f32 1.0, %v2588
        %v2590 = vrcp.pop %v2446
        %v2591 = vmul.f32 %v2446, %v2590
        %v2592 = vsub.f32 1.0, %v2591
        %v2593 = vmul.f32 %v2590, %v2592
        %v2594 = vadd.f32 %v2590, %v2593
        %vm2595 = vweird.f32 %v2446
        %vm2596 = vweird.f32 %v2590
        %vm2597 = vmor %vm2595, %vm2596
        %v2598 = vsel %vm2597, %v2590, %v2594
        %v2599 = vand.u32 2147483647, %v2446
        %vm2600 = vcmp.eq.f32.partialorder %v2599, 8.507059e+37
        %v2601 = vand.u32 %v2446, 2147483648
        %v2602 = vor.u32 1.1754944e-38, %v2601
        %v2603 = vsel %vm2600, %v2602, %v2598
        %v2604 = vmul.f32 1.0, %v2603
        %v2605 = vrcp.pop %v2447
        %v2606 = vmul.f32 %v2447, %v2605
        %v2607 = vsub.f32 1.0, %v2606
        %v2608 = vmul.f32 %v2605, %v2607
        %v2609 = vadd.f32 %v2605, %v2608
        %vm2610 = vweird.f32 %v2447
        %vm2611 = vweird.f32 %v2605
        %vm2612 = vmor %vm2610, %vm2611
        %v2613 = vsel %vm2612, %v2605, %v2609
        %v2614 = vand.u32 2147483647, %v2447
        %vm2615 = vcmp.eq.f32.partialorder %v2614, 8.507059e+37
        %v2616 = vand.u32 %v2447, 2147483648
        %v2617 = vor.u32 1.1754944e-38, %v2616
        %v2618 = vsel %vm2615, %v2617, %v2613
        %v2619 = vmul.f32 1.0, %v2618
        %v2620 = vrcp.pop %v2448
        %v2621 = vmul.f32 %v2448, %v2620
        %v2622 = vsub.f32 1.0, %v2621
        %v2623 = vmul.f32 %v2620, %v2622
        %v2624 = vadd.f32 %v2620, %v2623
        %vm2625 = vweird.f32 %v2448
        %vm2626 = vweird.f32 %v2620
        %vm2627 = vmor %vm2625, %vm2626
        %v2628 = vsel %vm2627, %v2620, %v2624
        %v2629 = vand.u32 2147483647, %v2448
        %vm2630 = vcmp.eq.f32.partialorder %v2629, 8.507059e+37
        %v2631 = vand.u32 %v2448, 2147483648
        %v2632 = vor.u32 1.1754944e-38, %v2631
        %v2633 = vsel %vm2630, %v2632, %v2628
        %v2634 = vmul.f32 1.0, %v2633
        %v2635 = vrcp.pop %v2449
        %v2636 = vmul.f32 %v2449, %v2635
        %v2637 = vsub.f32 1.0, %v2636
        %v2638 = vmul.f32 %v2635, %v2637
        %v2639 = vadd.f32 %v2635, %v2638
        %vm2640 = vweird.f32 %v2449
        %vm2641 = vweird.f32 %v2635
        %vm2642 = vmor %vm2640, %vm2641
        %v2643 = vsel %vm2642, %v2635, %v2639
        %v2644 = vand.u32 2147483647, %v2449
        %vm2645 = vcmp.eq.f32.partialorder %v2644, 8.507059e+37
        %v2646 = vand.u32 %v2449, 2147483648
        %v2647 = vor.u32 1.1754944e-38, %v2646
        %v2648 = vsel %vm2645, %v2647, %v2643
        %v2649 = vmul.f32 1.0, %v2648
        %v2650 = vrcp.pop %v2450
        %v2651 = vmul.f32 %v2450, %v2650
        %v2652 = vsub.f32 1.0, %v2651
        %v2653 = vmul.f32 %v2650, %v2652
        %v2654 = vadd.f32 %v2650, %v2653
        %vm2655 = vweird.f32 %v2450
        %vm2656 = vweird.f32 %v2650
        %vm2657 = vmor %vm2655, %vm2656
        %v2658 = vsel %vm2657, %v2650, %v2654
        %v2659 = vand.u32 2147483647, %v2450
        %vm2660 = vcmp.eq.f32.partialorder %v2659, 8.507059e+37
        %v2661 = vand.u32 %v2450, 2147483648
        %v2662 = vor.u32 1.1754944e-38, %v2661
        %v2663 = vsel %vm2660, %v2662, %v2658
        %v2664 = vmul.f32 1.0, %v2663
        %v2665 = vrcp.pop %v2451
        %v2666 = vmul.f32 %v2451, %v2665
        %v2667 = vsub.f32 1.0, %v2666
        %v2668 = vmul.f32 %v2665, %v2667
        %v2669 = vadd.f32 %v2665, %v2668
        %vm2670 = vweird.f32 %v2451
        %vm2671 = vweird.f32 %v2665
        %vm2672 = vmor %vm2670, %vm2671
        %v2673 = vsel %vm2672, %v2665, %v2669
        %v2674 = vand.u32 2147483647, %v2451
        %vm2675 = vcmp.eq.f32.partialorder %v2674, 8.507059e+37
        %v2676 = vand.u32 %v2451, 2147483648
        %v2677 = vor.u32 1.1754944e-38, %v2676
        %v2678 = vsel %vm2675, %v2677, %v2673
        %v2679 = vmul.f32 1.0, %v2678
        %v2680 = vrcp.pop %v2452
        %v2681 = vmul.f32 %v2452, %v2680
        %v2682 = vsub.f32 1.0, %v2681
        %v2683 = vmul.f32 %v2680, %v2682
        %v2684 = vadd.f32 %v2680, %v2683
        %vm2685 = vweird.f32 %v2452
        %vm2686 = vweird.f32 %v2680
        %vm2687 = vmor %vm2685, %vm2686
        %v2688 = vsel %vm2687, %v2680, %v2684
        %v2689 = vand.u32 2147483647, %v2452
        %vm2690 = vcmp.eq.f32.partialorder %v2689, 8.507059e+37
        %v2691 = vand.u32 %v2452, 2147483648
        %v2692 = vor.u32 1.1754944e-38, %v2691
        %v2693 = vsel %vm2690, %v2692, %v2688
        %v2694 = vmul.f32 1.0, %v2693
        %v2695 = vrcp.pop %v2453
        %v2696 = vmul.f32 %v2453, %v2695
        %v2697 = vsub.f32 1.0, %v2696
        %v2698 = vmul.f32 %v2695, %v2697
        %v2699 = vadd.f32 %v2695, %v2698
        %vm2700 = vweird.f32 %v2453
        %vm2701 = vweird.f32 %v2695
        %vm2702 = vmor %vm2700, %vm2701
        %v2703 = vsel %vm2702, %v2695, %v2699
        %v2704 = vand.u32 2147483647, %v2453
        %vm2705 = vcmp.eq.f32.partialorder %v2704, 8.507059e+37
        %v2706 = vand.u32 %v2453, 2147483648
        %v2707 = vor.u32 1.1754944e-38, %v2706
        %v2708 = vsel %vm2705, %v2707, %v2703
        %v2709 = vmul.f32 1.0, %v2708
        %v2710 = vrcp.pop %v2454
        %v2711 = vmul.f32 %v2454, %v2710
        %v2712 = vsub.f32 1.0, %v2711
        %v2713 = vmul.f32 %v2710, %v2712
        %v2714 = vadd.f32 %v2710, %v2713
        %vm2715 = vweird.f32 %v2454
        %vm2716 = vweird.f32 %v2710
        %vm2717 = vmor %vm2715, %vm2716
        %v2718 = vsel %vm2717, %v2710, %v2714
        %v2719 = vand.u32 2147483647, %v2454
        %vm2720 = vcmp.eq.f32.partialorder %v2719, 8.507059e+37
        %v2721 = vand.u32 %v2454, 2147483648
        %v2722 = vor.u32 1.1754944e-38, %v2721
        %v2723 = vsel %vm2720, %v2722, %v2718
        %v2724 = vmul.f32 1.0, %v2723
        %v2725 = vrcp.pop %v2455
        %v2726 = vmul.f32 %v2455, %v2725
        %v2727 = vsub.f32 1.0, %v2726
        %v2728 = vmul.f32 %v2725, %v2727
        %v2729 = vadd.f32 %v2725, %v2728
        %vm2730 = vweird.f32 %v2455
        %vm2731 = vweird.f32 %v2725
        %vm2732 = vmor %vm2730, %vm2731
        %v2733 = vsel %vm2732, %v2725, %v2729
        %v2734 = vand.u32 2147483647, %v2455
        %vm2735 = vcmp.eq.f32.partialorder %v2734, 8.507059e+37
        %v2736 = vand.u32 %v2455, 2147483648
        %v2737 = vor.u32 1.1754944e-38, %v2736
        %v2738 = vsel %vm2735, %v2737, %v2733
        %v2739 = vmul.f32 1.0, %v2738
        %v2740 = vrcp.pop %v2456
        %v2741 = vmul.f32 %v2456, %v2740
        %v2742 = vsub.f32 1.0, %v2741
        %v2743 = vmul.f32 %v2740, %v2742
        %v2744 = vadd.f32 %v2740, %v2743
        %vm2745 = vweird.f32 %v2456
        %vm2746 = vweird.f32 %v2740
        %vm2747 = vmor %vm2745, %vm2746
        %v2748 = vsel %vm2747, %v2740, %v2744
        %v2749 = vand.u32 2147483647, %v2456
        %vm2750 = vcmp.eq.f32.partialorder %v2749, 8.507059e+37
        %v2751 = vand.u32 %v2456, 2147483648
        %v2752 = vor.u32 1.1754944e-38, %v2751
        %v2753 = vsel %vm2750, %v2752, %v2748
        %v2754 = vmul.f32 1.0, %v2753
        %v2755 = vrcp.pop %v2457
        %v2756 = vmul.f32 %v2457, %v2755
        %v2757 = vsub.f32 1.0, %v2756
        %v2758 = vmul.f32 %v2755, %v2757
        %v2759 = vadd.f32 %v2755, %v2758
        %vm2760 = vweird.f32 %v2457
        %vm2761 = vweird.f32 %v2755
        %vm2762 = vmor %vm2760, %vm2761
        %v2763 = vsel %vm2762, %v2755, %v2759
        %v2764 = vand.u32 2147483647, %v2457
        %vm2765 = vcmp.eq.f32.partialorder %v2764, 8.507059e+37
        %v2766 = vand.u32 %v2457, 2147483648
        %v2767 = vor.u32 1.1754944e-38, %v2766
        %v2768 = vsel %vm2765, %v2767, %v2763
        %v2769 = vmul.f32 1.0, %v2768
        %v2770 = vrcp.pop %v2458
        %v2771 = vmul.f32 %v2458, %v2770
        %v2772 = vsub.f32 1.0, %v2771
        %v2773 = vmul.f32 %v2770, %v2772
        %v2774 = vadd.f32 %v2770, %v2773
        %vm2775 = vweird.f32 %v2458
        %vm2776 = vweird.f32 %v2770
        %vm2777 = vmor %vm2775, %vm2776
        %v2778 = vsel %vm2777, %v2770, %v2774
        %v2779 = vand.u32 2147483647, %v2458
        %vm2780 = vcmp.eq.f32.partialorder %v2779, 8.507059e+37
        %v2781 = vand.u32 %v2458, 2147483648
        %v2782 = vor.u32 1.1754944e-38, %v2781
        %v2783 = vsel %vm2780, %v2782, %v2778
        %v2784 = vmul.f32 1.0, %v2783
        %v2785 = vrcp.pop %v2459
        %v2786 = vmul.f32 %v2459, %v2785
        %v2787 = vsub.f32 1.0, %v2786
        %v2788 = vmul.f32 %v2785, %v2787
        %v2789 = vadd.f32 %v2785, %v2788
        %vm2790 = vweird.f32 %v2459
        %vm2791 = vweird.f32 %v2785
        %vm2792 = vmor %vm2790, %vm2791
        %v2793 = vsel %vm2792, %v2785, %v2789
        %v2794 = vand.u32 2147483647, %v2459
        %vm2795 = vcmp.eq.f32.partialorder %v2794, 8.507059e+37
        %v2796 = vand.u32 %v2459, 2147483648
        %v2797 = vor.u32 1.1754944e-38, %v2796
        %v2798 = vsel %vm2795, %v2797, %v2793
        %v2799 = vmul.f32 1.0, %v2798
        %v2800 = vrcp.pop %v2460
        %v2801 = vmul.f32 %v2460, %v2800
        %v2802 = vsub.f32 1.0, %v2801
        %v2803 = vmul.f32 %v2800, %v2802
        %v2804 = vadd.f32 %v2800, %v2803
        %vm2805 = vweird.f32 %v2460
        %vm2806 = vweird.f32 %v2800
        %vm2807 = vmor %vm2805, %vm2806
        %v2808 = vsel %vm2807, %v2800, %v2804
        %v2809 = vand.u32 2147483647, %v2460
        %vm2810 = vcmp.eq.f32.partialorder %v2809, 8.507059e+37
        %v2811 = vand.u32 %v2460, 2147483648
        %v2812 = vor.u32 1.1754944e-38, %v2811
        %v2813 = vsel %vm2810, %v2812, %v2808
        %v2814 = vmul.f32 1.0, %v2813
        %v2815 = vrcp.pop %v2461
        %v2816 = vmul.f32 %v2461, %v2815
        %v2817 = vsub.f32 1.0, %v2816
        %v2818 = vmul.f32 %v2815, %v2817
        %v2819 = vadd.f32 %v2815, %v2818
        %vm2820 = vweird.f32 %v2461
        %vm2821 = vweird.f32 %v2815
        %vm2822 = vmor %vm2820, %vm2821
        %v2823 = vsel %vm2822, %v2815, %v2819
        %v2824 = vand.u32 2147483647, %v2461
        %vm2825 = vcmp.eq.f32.partialorder %v2824, 8.507059e+37
        %v2826 = vand.u32 %v2461, 2147483648
        %v2827 = vor.u32 1.1754944e-38, %v2826
        %v2828 = vsel %vm2825, %v2827, %v2823
        %v2829 = vmul.f32 1.0, %v2828
        %v2830 = vrcp.pop %v2462
        %v2831 = vmul.f32 %v2462, %v2830
        %v2832 = vsub.f32 1.0, %v2831
        %v2833 = vmul.f32 %v2830, %v2832
        %v2834 = vadd.f32 %v2830, %v2833
        %vm2835 = vweird.f32 %v2462
        %vm2836 = vweird.f32 %v2830
        %vm2837 = vmor %vm2835, %vm2836
        %v2838 = vsel %vm2837, %v2830, %v2834
        %v2839 = vand.u32 2147483647, %v2462
        %vm2840 = vcmp.eq.f32.partialorder %v2839, 8.507059e+37
        %v2841 = vand.u32 %v2462, 2147483648
        %v2842 = vor.u32 1.1754944e-38, %v2841
        %v2843 = vsel %vm2840, %v2842, %v2838
        %v2844 = vmul.f32 1.0, %v2843
        %v2845 = vrcp.pop %v2463
        %v2846 = vmul.f32 %v2463, %v2845
        %v2847 = vsub.f32 1.0, %v2846
        %v2848 = vmul.f32 %v2845, %v2847
        %v2849 = vadd.f32 %v2845, %v2848
        %vm2850 = vweird.f32 %v2463
        %vm2851 = vweird.f32 %v2845
        %vm2852 = vmor %vm2850, %vm2851
        %v2853 = vsel %vm2852, %v2845, %v2849
        %v2854 = vand.u32 2147483647, %v2463
        %vm2855 = vcmp.eq.f32.partialorder %v2854, 8.507059e+37
        %v2856 = vand.u32 %v2463, 2147483648
        %v2857 = vor.u32 1.1754944e-38, %v2856
        %v2858 = vsel %vm2855, %v2857, %v2853
        %v2859 = vmul.f32 1.0, %v2858
        %v2860 = vrcp.pop %v2464
        %v2861 = vmul.f32 %v2464, %v2860
        %v2862 = vsub.f32 1.0, %v2861
        %v2863 = vmul.f32 %v2860, %v2862
        %v2864 = vadd.f32 %v2860, %v2863
        %vm2865 = vweird.f32 %v2464
        %vm2866 = vweird.f32 %v2860
        %vm2867 = vmor %vm2865, %vm2866
        %v2868 = vsel %vm2867, %v2860, %v2864
        %v2869 = vand.u32 2147483647, %v2464
        %vm2870 = vcmp.eq.f32.partialorder %v2869, 8.507059e+37
        %v2871 = vand.u32 %v2464, 2147483648
        %v2872 = vor.u32 1.1754944e-38, %v2871
        %v2873 = vsel %vm2870, %v2872, %v2868
        %v2874 = vmul.f32 1.0, %v2873
        %v2875 = vrcp.pop %v2465
        %v2876 = vmul.f32 %v2465, %v2875
        %v2877 = vsub.f32 1.0, %v2876
        %v2878 = vmul.f32 %v2875, %v2877
        %v2879 = vadd.f32 %v2875, %v2878
        %vm2880 = vweird.f32 %v2465
        %vm2881 = vweird.f32 %v2875
        %vm2882 = vmor %vm2880, %vm2881
        %v2883 = vsel %vm2882, %v2875, %v2879
        %v2884 = vand.u32 2147483647, %v2465
        %vm2885 = vcmp.eq.f32.partialorder %v2884, 8.507059e+37
        %v2886 = vand.u32 %v2465, 2147483648
        %v2887 = vor.u32 1.1754944e-38, %v2886
        %v2888 = vsel %vm2885, %v2887, %v2883
        %v2889 = vmul.f32 1.0, %v2888
        %v2890 = vrcp.pop %v2466
        %v2891 = vmul.f32 %v2466, %v2890
        %v2892 = vsub.f32 1.0, %v2891
        %v2893 = vmul.f32 %v2890, %v2892
        %v2894 = vadd.f32 %v2890, %v2893
        %vm2895 = vweird.f32 %v2466
        %vm2896 = vweird.f32 %v2890
        %vm2897 = vmor %vm2895, %vm2896
        %v2898 = vsel %vm2897, %v2890, %v2894
        %v2899 = vand.u32 2147483647, %v2466
        %vm2900 = vcmp.eq.f32.partialorder %v2899, 8.507059e+37
        %v2901 = vand.u32 %v2466, 2147483648
        %v2902 = vor.u32 1.1754944e-38, %v2901
        %v2903 = vsel %vm2900, %v2902, %v2898
        %v2904 = vmul.f32 1.0, %v2903
        %v2905 = vrcp.pop %v2467
        %v2906 = vmul.f32 %v2467, %v2905
        %v2907 = vsub.f32 1.0, %v2906
        %v2908 = vmul.f32 %v2905, %v2907
        %v2909 = vadd.f32 %v2905, %v2908
        %vm2910 = vweird.f32 %v2467
        %vm2911 = vweird.f32 %v2905
        %vm2912 = vmor %vm2910, %vm2911
        %v2913 = vsel %vm2912, %v2905, %v2909
        %v2914 = vand.u32 2147483647, %v2467
        %vm2915 = vcmp.eq.f32.partialorder %v2914, 8.507059e+37
        %v2916 = vand.u32 %v2467, 2147483648
        %v2917 = vor.u32 1.1754944e-38, %v2916
        %v2918 = vsel %vm2915, %v2917, %v2913
        %v2919 = vmul.f32 1.0, %v2918
        %v2920 = vrcp.pop %v2468
        %v2921 = vmul.f32 %v2468, %v2920
        %v2922 = vsub.f32 1.0, %v2921
        %v2923 = vmul.f32 %v2920, %v2922
        %v2924 = vadd.f32 %v2920, %v2923
        %vm2925 = vweird.f32 %v2468
        %vm2926 = vweird.f32 %v2920
        %vm2927 = vmor %vm2925, %vm2926
        %v2928 = vsel %vm2927, %v2920, %v2924
        %v2929 = vand.u32 2147483647, %v2468
        %vm2930 = vcmp.eq.f32.partialorder %v2929, 8.507059e+37
        %v2931 = vand.u32 %v2468, 2147483648
        %v2932 = vor.u32 1.1754944e-38, %v2931
        %v2933 = vsel %vm2930, %v2932, %v2928
        %v2934 = vmul.f32 1.0, %v2933
        %v2935 = vrcp.pop %v2469
        %v2936 = vmul.f32 %v2469, %v2935
        %v2937 = vsub.f32 1.0, %v2936
        %v2938 = vmul.f32 %v2935, %v2937
        %v2939 = vadd.f32 %v2935, %v2938
        %vm2940 = vweird.f32 %v2469
        %vm2941 = vweird.f32 %v2935
        %vm2942 = vmor %vm2940, %vm2941
        %v2943 = vsel %vm2942, %v2935, %v2939
        %v2944 = vand.u32 2147483647, %v2469
        %vm2945 = vcmp.eq.f32.partialorder %v2944, 8.507059e+37
        %v2946 = vand.u32 %v2469, 2147483648
        %v2947 = vor.u32 1.1754944e-38, %v2946
        %v2948 = vsel %vm2945, %v2947, %v2943
        %v2949 = vmul.f32 1.0, %v2948
        %s2950 = scalar_lea.vmem [#allocation5], 1152
        %v2951 = vld [vmem:[%s2950] sm:$0xff]
        %v2952 = vld [vmem:[%s2950 + $0x8] sm:$0xff]
        %v2953 = vld [vmem:[%s2950 + $0x10] sm:$0xff]
        %v2954 = vld [vmem:[%s2950 + $0x18] sm:$0xff]
        %v2955 = vld [vmem:[%s2950 + $0x20] sm:$0xff]
        %v2956 = vld [vmem:[%s2950 + $0x28] sm:$0xff]
        %v2957 = vld [vmem:[%s2950 + $0x30] sm:$0xff]
        %v2958 = vld [vmem:[%s2950 + $0x38] sm:$0xff]
        %v2959 = vld [vmem:[%s2950 + $0x40] sm:$0xff]
        %v2960 = vld [vmem:[%s2950 + $0x48] sm:$0xff]
        %v2961 = vld [vmem:[%s2950 + $0x50] sm:$0xff]
        %v2962 = vld [vmem:[%s2950 + $0x58] sm:$0xff]
        %v2963 = vld [vmem:[%s2950 + $0x60] sm:$0xff]
        %v2964 = vld [vmem:[%s2950 + $0x68] sm:$0xff]
        %v2965 = vld [vmem:[%s2950 + $0x70] sm:$0xff]
        %v2966 = vld [vmem:[%s2950 + $0x78] sm:$0xff]
        %2967 = vmatpush.msra.mxu0 %v2966
        %2968 = vmatpush.msra.mxu0 %v2965
        %2969 = vmatpush.msra.mxu0 %v2964
        %2970 = vmatpush.msra.mxu0 %v2963
        %2971 = vmatpush.msra.mxu0 %v2962
        %2972 = vmatpush.msra.mxu0 %v2961
        %2973 = vmatpush.msra.mxu0 %v2960
        %2974 = vmatpush.msra.mxu0 %v2959
        %2975 = vmatpush.msra.mxu0 %v2958
        %2976 = vmatpush.msra.mxu0 %v2957
        %2977 = vmatpush.msra.mxu0 %v2956
        %2978 = vmatpush.msra.mxu0 %v2955
        %2979 = vmatpush.msra.mxu0 %v2954
        %2980 = vmatpush.msra.mxu0 %v2953
        %2981 = vmatpush.msra.mxu0 %v2952
        %2982 = vmatpush.msra.mxu0 %v2951
        %2983 = vmatmul.f32.gmra.mxu0 %v228
        %v2984 = vpop.f32.mrf.mxu0
        %v2985 = vadd.f32 0.0, %v2984
        %2986 = vmatmul.f32.gmra.mxu0 %v230
        %v2987 = vpop.f32.mrf.mxu0
        %v2988 = vadd.f32 0.0, %v2987
        %2989 = vmatmul.f32.gmra.mxu0 %v232
        %v2990 = vpop.f32.mrf.mxu0
        %v2991 = vadd.f32 0.0, %v2990
        %2992 = vmatmul.f32.gmra.mxu0 %v234
        %v2993 = vpop.f32.mrf.mxu0
        %v2994 = vadd.f32 0.0, %v2993
        %2995 = vmatmul.f32.gmra.mxu0 %v236
        %v2996 = vpop.f32.mrf.mxu0
        %v2997 = vadd.f32 0.0, %v2996
        %2998 = vmatmul.f32.gmra.mxu0 %v238
        %v2999 = vpop.f32.mrf.mxu0
        %v3000 = vadd.f32 0.0, %v2999
        %3001 = vmatmul.f32.gmra.mxu0 %v240
        %v3002 = vpop.f32.mrf.mxu0
        %v3003 = vadd.f32 0.0, %v3002
        %3004 = vmatmul.f32.gmra.mxu0 %v242
        %v3005 = vpop.f32.mrf.mxu0
        %v3006 = vadd.f32 0.0, %v3005
        %3007 = vmatmul.f32.gmra.mxu0 %v244
        %v3008 = vpop.f32.mrf.mxu0
        %v3009 = vadd.f32 0.0, %v3008
        %3010 = vmatmul.f32.gmra.mxu0 %v246
        %v3011 = vpop.f32.mrf.mxu0
        %v3012 = vadd.f32 0.0, %v3011
        %3013 = vmatmul.f32.gmra.mxu0 %v248
        %v3014 = vpop.f32.mrf.mxu0
        %v3015 = vadd.f32 0.0, %v3014
        %3016 = vmatmul.f32.gmra.mxu0 %v250
        %v3017 = vpop.f32.mrf.mxu0
        %v3018 = vadd.f32 0.0, %v3017
        %3019 = vmatmul.f32.gmra.mxu0 %v252
        %v3020 = vpop.f32.mrf.mxu0
        %v3021 = vadd.f32 0.0, %v3020
        %3022 = vmatmul.f32.gmra.mxu0 %v254
        %v3023 = vpop.f32.mrf.mxu0
        %v3024 = vadd.f32 0.0, %v3023
        %3025 = vmatmul.f32.gmra.mxu0 %v256
        %v3026 = vpop.f32.mrf.mxu0
        %v3027 = vadd.f32 0.0, %v3026
        %3028 = vmatmul.f32.gmra.mxu0 %v258
        %v3029 = vpop.f32.mrf.mxu0
        %v3030 = vadd.f32 0.0, %v3029
        %3031 = vmatmul.f32.gmra.mxu0 %v260
        %v3032 = vpop.f32.mrf.mxu0
        %v3033 = vadd.f32 0.0, %v3032
        %3034 = vmatmul.f32.gmra.mxu0 %v262
        %v3035 = vpop.f32.mrf.mxu0
        %v3036 = vadd.f32 0.0, %v3035
        %3037 = vmatmul.f32.gmra.mxu0 %v264
        %v3038 = vpop.f32.mrf.mxu0
        %v3039 = vadd.f32 0.0, %v3038
        %3040 = vmatmul.f32.gmra.mxu0 %v266
        %v3041 = vpop.f32.mrf.mxu0
        %v3042 = vadd.f32 0.0, %v3041
        %3043 = vmatmul.f32.gmra.mxu0 %v268
        %v3044 = vpop.f32.mrf.mxu0
        %v3045 = vadd.f32 0.0, %v3044
        %3046 = vmatmul.f32.gmra.mxu0 %v270
        %v3047 = vpop.f32.mrf.mxu0
        %v3048 = vadd.f32 0.0, %v3047
        %3049 = vmatmul.f32.gmra.mxu0 %v272
        %v3050 = vpop.f32.mrf.mxu0
        %v3051 = vadd.f32 0.0, %v3050
        %3052 = vmatmul.f32.gmra.mxu0 %v274
        %v3053 = vpop.f32.mrf.mxu0
        %v3054 = vadd.f32 0.0, %v3053
        %3055 = vmatmul.f32.gmra.mxu0 %v276
        %v3056 = vpop.f32.mrf.mxu0
        %v3057 = vadd.f32 0.0, %v3056
        %3058 = vmatmul.f32.gmra.mxu0 %v278
        %v3059 = vpop.f32.mrf.mxu0
        %v3060 = vadd.f32 0.0, %v3059
        %3061 = vmatmul.f32.gmra.mxu0 %v280
        %v3062 = vpop.f32.mrf.mxu0
        %v3063 = vadd.f32 0.0, %v3062
        %3064 = vmatmul.f32.gmra.mxu0 %v282
        %v3065 = vpop.f32.mrf.mxu0
        %v3066 = vadd.f32 0.0, %v3065
        %3067 = vmatmul.f32.gmra.mxu0 %v284
        %v3068 = vpop.f32.mrf.mxu0
        %v3069 = vadd.f32 0.0, %v3068
        %3070 = vmatmul.f32.gmra.mxu0 %v286
        %v3071 = vpop.f32.mrf.mxu0
        %v3072 = vadd.f32 0.0, %v3071
        %3073 = vmatmul.f32.gmra.mxu0 %v288
        %v3074 = vpop.f32.mrf.mxu0
        %v3075 = vadd.f32 0.0, %v3074
        %3076 = vmatmul.f32.gmra.mxu0 %v290
        %v3077 = vpop.f32.mrf.mxu0
        %v3078 = vadd.f32 0.0, %v3077
        %3079 = vdwg.mxu0
        %s3080 = scalar_lea.vmem [#allocation5], 1280
        %v3081 = vld [vmem:[%s3080] sm:$0xff]
        %v3082 = vld [vmem:[%s3080 + $0x8] sm:$0xff]
        %v3083 = vld [vmem:[%s3080 + $0x10] sm:$0xff]
        %v3084 = vld [vmem:[%s3080 + $0x18] sm:$0xff]
        %v3085 = vld [vmem:[%s3080 + $0x20] sm:$0xff]
        %v3086 = vld [vmem:[%s3080 + $0x28] sm:$0xff]
        %v3087 = vld [vmem:[%s3080 + $0x30] sm:$0xff]
        %v3088 = vld [vmem:[%s3080 + $0x38] sm:$0xff]
        %v3089 = vld [vmem:[%s3080 + $0x40] sm:$0xff]
        %v3090 = vld [vmem:[%s3080 + $0x48] sm:$0xff]
        %v3091 = vld [vmem:[%s3080 + $0x50] sm:$0xff]
        %v3092 = vld [vmem:[%s3080 + $0x58] sm:$0xff]
        %v3093 = vld [vmem:[%s3080 + $0x60] sm:$0xff]
        %v3094 = vld [vmem:[%s3080 + $0x68] sm:$0xff]
        %v3095 = vld [vmem:[%s3080 + $0x70] sm:$0xff]
        %v3096 = vld [vmem:[%s3080 + $0x78] sm:$0xff]
        %v3097 = vld [vmem:[#allocation7 + $0x9] sm:$0x1]
        %v3098 = vperm.slane %v3097, 0
        %3099 = vmatpush.msra.mxu0 %v3096
        %3100 = vmatpush.msra.mxu0 %v3095
        %3101 = vmatpush.msra.mxu0 %v3094
        %3102 = vmatpush.msra.mxu0 %v3093
        %3103 = vmatpush.msra.mxu0 %v3092
        %3104 = vmatpush.msra.mxu0 %v3091
        %3105 = vmatpush.msra.mxu0 %v3090
        %3106 = vmatpush.msra.mxu0 %v3089
        %3107 = vmatpush.msra.mxu0 %v3088
        %3108 = vmatpush.msra.mxu0 %v3087
        %3109 = vmatpush.msra.mxu0 %v3086
        %3110 = vmatpush.msra.mxu0 %v3085
        %3111 = vmatpush.msra.mxu0 %v3084
        %3112 = vmatpush.msra.mxu0 %v3083
        %3113 = vmatpush.msra.mxu0 %v3082
        %3114 = vmatpush.msra.mxu0 %v3081
        %3115 = vmatmul.f32.gmra.mxu0 %v2985
        %v3116 = vpop.f32.mrf.mxu0
        %v3117 = vadd.f32 %v3098, %v3116
        %3118 = vmatmul.f32.gmra.mxu0 %v2988
        %v3119 = vpop.f32.mrf.mxu0
        %v3120 = vadd.f32 %v3098, %v3119
        %3121 = vmatmul.f32.gmra.mxu0 %v2991
        %v3122 = vpop.f32.mrf.mxu0
        %v3123 = vadd.f32 %v3098, %v3122
        %3124 = vmatmul.f32.gmra.mxu0 %v2994
        %v3125 = vpop.f32.mrf.mxu0
        %v3126 = vadd.f32 %v3098, %v3125
        %3127 = vmatmul.f32.gmra.mxu0 %v2997
        %v3128 = vpop.f32.mrf.mxu0
        %v3129 = vadd.f32 %v3098, %v3128
        %3130 = vmatmul.f32.gmra.mxu0 %v3000
        %v3131 = vpop.f32.mrf.mxu0
        %v3132 = vadd.f32 %v3098, %v3131
        %3133 = vmatmul.f32.gmra.mxu0 %v3003
        %v3134 = vpop.f32.mrf.mxu0
        %v3135 = vadd.f32 %v3098, %v3134
        %3136 = vmatmul.f32.gmra.mxu0 %v3006
        %v3137 = vpop.f32.mrf.mxu0
        %v3138 = vadd.f32 %v3098, %v3137
        %3139 = vmatmul.f32.gmra.mxu0 %v3009
        %v3140 = vpop.f32.mrf.mxu0
        %v3141 = vadd.f32 %v3098, %v3140
        %3142 = vmatmul.f32.gmra.mxu0 %v3012
        %v3143 = vpop.f32.mrf.mxu0
        %v3144 = vadd.f32 %v3098, %v3143
        %3145 = vmatmul.f32.gmra.mxu0 %v3015
        %v3146 = vpop.f32.mrf.mxu0
        %v3147 = vadd.f32 %v3098, %v3146
        %3148 = vmatmul.f32.gmra.mxu0 %v3018
        %v3149 = vpop.f32.mrf.mxu0
        %v3150 = vadd.f32 %v3098, %v3149
        %3151 = vmatmul.f32.gmra.mxu0 %v3021
        %v3152 = vpop.f32.mrf.mxu0
        %v3153 = vadd.f32 %v3098, %v3152
        %3154 = vmatmul.f32.gmra.mxu0 %v3024
        %v3155 = vpop.f32.mrf.mxu0
        %v3156 = vadd.f32 %v3098, %v3155
        %3157 = vmatmul.f32.gmra.mxu0 %v3027
        %v3158 = vpop.f32.mrf.mxu0
        %v3159 = vadd.f32 %v3098, %v3158
        %3160 = vmatmul.f32.gmra.mxu0 %v3030
        %v3161 = vpop.f32.mrf.mxu0
        %v3162 = vadd.f32 %v3098, %v3161
        %3163 = vmatmul.f32.gmra.mxu0 %v3033
        %v3164 = vpop.f32.mrf.mxu0
        %v3165 = vadd.f32 %v3098, %v3164
        %3166 = vmatmul.f32.gmra.mxu0 %v3036
        %v3167 = vpop.f32.mrf.mxu0
        %v3168 = vadd.f32 %v3098, %v3167
        %3169 = vmatmul.f32.gmra.mxu0 %v3039
        %v3170 = vpop.f32.mrf.mxu0
        %v3171 = vadd.f32 %v3098, %v3170
        %3172 = vmatmul.f32.gmra.mxu0 %v3042
        %v3173 = vpop.f32.mrf.mxu0
        %v3174 = vadd.f32 %v3098, %v3173
        %3175 = vmatmul.f32.gmra.mxu0 %v3045
        %v3176 = vpop.f32.mrf.mxu0
        %v3177 = vadd.f32 %v3098, %v3176
        %3178 = vmatmul.f32.gmra.mxu0 %v3048
        %v3179 = vpop.f32.mrf.mxu0
        %v3180 = vadd.f32 %v3098, %v3179
        %3181 = vmatmul.f32.gmra.mxu0 %v3051
        %v3182 = vpop.f32.mrf.mxu0
        %v3183 = vadd.f32 %v3098, %v3182
        %3184 = vmatmul.f32.gmra.mxu0 %v3054
        %v3185 = vpop.f32.mrf.mxu0
        %v3186 = vadd.f32 %v3098, %v3185
        %3187 = vmatmul.f32.gmra.mxu0 %v3057
        %v3188 = vpop.f32.mrf.mxu0
        %v3189 = vadd.f32 %v3098, %v3188
        %3190 = vmatmul.f32.gmra.mxu0 %v3060
        %v3191 = vpop.f32.mrf.mxu0
        %v3192 = vadd.f32 %v3098, %v3191
        %3193 = vmatmul.f32.gmra.mxu0 %v3063
        %v3194 = vpop.f32.mrf.mxu0
        %v3195 = vadd.f32 %v3098, %v3194
        %3196 = vmatmul.f32.gmra.mxu0 %v3066
        %v3197 = vpop.f32.mrf.mxu0
        %v3198 = vadd.f32 %v3098, %v3197
        %3199 = vmatmul.f32.gmra.mxu0 %v3069
        %v3200 = vpop.f32.mrf.mxu0
        %v3201 = vadd.f32 %v3098, %v3200
        %3202 = vmatmul.f32.gmra.mxu0 %v3072
        %v3203 = vpop.f32.mrf.mxu0
        %v3204 = vadd.f32 %v3098, %v3203
        %3205 = vmatmul.f32.gmra.mxu0 %v3075
        %v3206 = vpop.f32.mrf.mxu0
        %v3207 = vadd.f32 %v3098, %v3206
        %3208 = vmatmul.f32.gmra.mxu0 %v3078
        %v3209 = vpop.f32.mrf.mxu0
        %v3210 = vadd.f32 %v3098, %v3209
        %3211 = vdwg.mxu0
        %v3212 = vmax.f32 %v3117, 0.0
        %v3213 = vmax.f32 %v3120, 0.0
        %v3214 = vmax.f32 %v3123, 0.0
        %v3215 = vmax.f32 %v3126, 0.0
        %v3216 = vmax.f32 %v3129, 0.0
        %v3217 = vmax.f32 %v3132, 0.0
        %v3218 = vmax.f32 %v3135, 0.0
        %v3219 = vmax.f32 %v3138, 0.0
        %v3220 = vmax.f32 %v3141, 0.0
        %v3221 = vmax.f32 %v3144, 0.0
        %v3222 = vmax.f32 %v3147, 0.0
        %v3223 = vmax.f32 %v3150, 0.0
        %v3224 = vmax.f32 %v3153, 0.0
        %v3225 = vmax.f32 %v3156, 0.0
        %v3226 = vmax.f32 %v3159, 0.0
        %v3227 = vmax.f32 %v3162, 0.0
        %v3228 = vmax.f32 %v3165, 0.0
        %v3229 = vmax.f32 %v3168, 0.0
        %v3230 = vmax.f32 %v3171, 0.0
        %v3231 = vmax.f32 %v3174, 0.0
        %v3232 = vmax.f32 %v3177, 0.0
        %v3233 = vmax.f32 %v3180, 0.0
        %v3234 = vmax.f32 %v3183, 0.0
        %v3235 = vmax.f32 %v3186, 0.0
        %v3236 = vmax.f32 %v3189, 0.0
        %v3237 = vmax.f32 %v3192, 0.0
        %v3238 = vmax.f32 %v3195, 0.0
        %v3239 = vmax.f32 %v3198, 0.0
        %v3240 = vmax.f32 %v3201, 0.0
        %v3241 = vmax.f32 %v3204, 0.0
        %v3242 = vmax.f32 %v3207, 0.0
        %v3243 = vmax.f32 %v3210, 0.0
        %v3244 = vadd.f32 %v750, %v3212
        %v3245 = vadd.f32 %v751, %v3213
        %v3246 = vadd.f32 %v752, %v3214
        %v3247 = vadd.f32 %v753, %v3215
        %v3248 = vadd.f32 %v754, %v3216
        %v3249 = vadd.f32 %v755, %v3217
        %v3250 = vadd.f32 %v756, %v3218
        %v3251 = vadd.f32 %v757, %v3219
        %v3252 = vadd.f32 %v758, %v3220
        %v3253 = vadd.f32 %v759, %v3221
        %v3254 = vadd.f32 %v760, %v3222
        %v3255 = vadd.f32 %v761, %v3223
        %v3256 = vadd.f32 %v762, %v3224
        %v3257 = vadd.f32 %v763, %v3225
        %v3258 = vadd.f32 %v764, %v3226
        %v3259 = vadd.f32 %v765, %v3227
        %v3260 = vadd.f32 %v766, %v3228
        %v3261 = vadd.f32 %v767, %v3229
        %v3262 = vadd.f32 %v768, %v3230
        %v3263 = vadd.f32 %v769, %v3231
        %v3264 = vadd.f32 %v770, %v3232
        %v3265 = vadd.f32 %v771, %v3233
        %v3266 = vadd.f32 %v772, %v3234
        %v3267 = vadd.f32 %v773, %v3235
        %v3268 = vadd.f32 %v774, %v3236
        %v3269 = vadd.f32 %v775, %v3237
        %v3270 = vadd.f32 %v776, %v3238
        %v3271 = vadd.f32 %v777, %v3239
        %v3272 = vadd.f32 %v778, %v3240
        %v3273 = vadd.f32 %v779, %v3241
        %v3274 = vadd.f32 %v780, %v3242
        %v3275 = vadd.f32 %v781, %v3243
        %s3276 = scalar_lea.vmem [#allocation5], 1408
        %v3277 = vld [vmem:[%s3276] sm:$0xff]
        %v3278 = vld [vmem:[%s3276 + $0x8] sm:$0xff]
        %v3279 = vld [vmem:[%s3276 + $0x10] sm:$0xff]
        %v3280 = vld [vmem:[%s3276 + $0x18] sm:$0xff]
        %v3281 = vld [vmem:[%s3276 + $0x20] sm:$0xff]
        %v3282 = vld [vmem:[%s3276 + $0x28] sm:$0xff]
        %v3283 = vld [vmem:[%s3276 + $0x30] sm:$0xff]
        %v3284 = vld [vmem:[%s3276 + $0x38] sm:$0xff]
        %v3285 = vld [vmem:[%s3276 + $0x40] sm:$0xff]
        %v3286 = vld [vmem:[%s3276 + $0x48] sm:$0xff]
        %v3287 = vld [vmem:[%s3276 + $0x50] sm:$0xff]
        %v3288 = vld [vmem:[%s3276 + $0x58] sm:$0xff]
        %v3289 = vld [vmem:[%s3276 + $0x60] sm:$0xff]
        %v3290 = vld [vmem:[%s3276 + $0x68] sm:$0xff]
        %v3291 = vld [vmem:[%s3276 + $0x70] sm:$0xff]
        %v3292 = vld [vmem:[%s3276 + $0x78] sm:$0xff]
        %v3293 = vld [vmem:[#allocation7 + $0xa] sm:$0x1]
        %v3294 = vperm.slane %v3293, 0
        %3295 = vmatpush.msra.mxu0 %v3292
        %3296 = vmatpush.msra.mxu0 %v3291
        %3297 = vmatpush.msra.mxu0 %v3290
        %3298 = vmatpush.msra.mxu0 %v3289
        %3299 = vmatpush.msra.mxu0 %v3288
        %3300 = vmatpush.msra.mxu0 %v3287
        %3301 = vmatpush.msra.mxu0 %v3286
        %3302 = vmatpush.msra.mxu0 %v3285
        %3303 = vmatpush.msra.mxu0 %v3284
        %3304 = vmatpush.msra.mxu0 %v3283
        %3305 = vmatpush.msra.mxu0 %v3282
        %3306 = vmatpush.msra.mxu0 %v3281
        %3307 = vmatpush.msra.mxu0 %v3280
        %3308 = vmatpush.msra.mxu0 %v3279
        %3309 = vmatpush.msra.mxu0 %v3278
        %3310 = vmatpush.msra.mxu0 %v3277
        %3311 = vmatmul.f32.gmra.mxu0 %v3244
        %v3312 = vpop.f32.mrf.mxu0
        %v3313 = vadd.f32 %v3294, %v3312
        %3314 = vmatmul.f32.gmra.mxu0 %v3245
        %v3315 = vpop.f32.mrf.mxu0
        %v3316 = vadd.f32 %v3294, %v3315
        %3317 = vmatmul.f32.gmra.mxu0 %v3246
        %v3318 = vpop.f32.mrf.mxu0
        %v3319 = vadd.f32 %v3294, %v3318
        %3320 = vmatmul.f32.gmra.mxu0 %v3247
        %v3321 = vpop.f32.mrf.mxu0
        %v3322 = vadd.f32 %v3294, %v3321
        %3323 = vmatmul.f32.gmra.mxu0 %v3248
        %v3324 = vpop.f32.mrf.mxu0
        %v3325 = vadd.f32 %v3294, %v3324
        %3326 = vmatmul.f32.gmra.mxu0 %v3249
        %v3327 = vpop.f32.mrf.mxu0
        %v3328 = vadd.f32 %v3294, %v3327
        %3329 = vmatmul.f32.gmra.mxu0 %v3250
        %v3330 = vpop.f32.mrf.mxu0
        %v3331 = vadd.f32 %v3294, %v3330
        %3332 = vmatmul.f32.gmra.mxu0 %v3251
        %v3333 = vpop.f32.mrf.mxu0
        %v3334 = vadd.f32 %v3294, %v3333
        %3335 = vmatmul.f32.gmra.mxu0 %v3252
        %v3336 = vpop.f32.mrf.mxu0
        %v3337 = vadd.f32 %v3294, %v3336
        %3338 = vmatmul.f32.gmra.mxu0 %v3253
        %v3339 = vpop.f32.mrf.mxu0
        %v3340 = vadd.f32 %v3294, %v3339
        %3341 = vmatmul.f32.gmra.mxu0 %v3254
        %v3342 = vpop.f32.mrf.mxu0
        %v3343 = vadd.f32 %v3294, %v3342
        %3344 = vmatmul.f32.gmra.mxu0 %v3255
        %v3345 = vpop.f32.mrf.mxu0
        %v3346 = vadd.f32 %v3294, %v3345
        %3347 = vmatmul.f32.gmra.mxu0 %v3256
        %v3348 = vpop.f32.mrf.mxu0
        %v3349 = vadd.f32 %v3294, %v3348
        %3350 = vmatmul.f32.gmra.mxu0 %v3257
        %v3351 = vpop.f32.mrf.mxu0
        %v3352 = vadd.f32 %v3294, %v3351
        %3353 = vmatmul.f32.gmra.mxu0 %v3258
        %v3354 = vpop.f32.mrf.mxu0
        %v3355 = vadd.f32 %v3294, %v3354
        %3356 = vmatmul.f32.gmra.mxu0 %v3259
        %v3357 = vpop.f32.mrf.mxu0
        %v3358 = vadd.f32 %v3294, %v3357
        %3359 = vmatmul.f32.gmra.mxu0 %v3260
        %v3360 = vpop.f32.mrf.mxu0
        %v3361 = vadd.f32 %v3294, %v3360
        %3362 = vmatmul.f32.gmra.mxu0 %v3261
        %v3363 = vpop.f32.mrf.mxu0
        %v3364 = vadd.f32 %v3294, %v3363
        %3365 = vmatmul.f32.gmra.mxu0 %v3262
        %v3366 = vpop.f32.mrf.mxu0
        %v3367 = vadd.f32 %v3294, %v3366
        %3368 = vmatmul.f32.gmra.mxu0 %v3263
        %v3369 = vpop.f32.mrf.mxu0
        %v3370 = vadd.f32 %v3294, %v3369
        %3371 = vmatmul.f32.gmra.mxu0 %v3264
        %v3372 = vpop.f32.mrf.mxu0
        %v3373 = vadd.f32 %v3294, %v3372
        %3374 = vmatmul.f32.gmra.mxu0 %v3265
        %v3375 = vpop.f32.mrf.mxu0
        %v3376 = vadd.f32 %v3294, %v3375
        %3377 = vmatmul.f32.gmra.mxu0 %v3266
        %v3378 = vpop.f32.mrf.mxu0
        %v3379 = vadd.f32 %v3294, %v3378
        %3380 = vmatmul.f32.gmra.mxu0 %v3267
        %v3381 = vpop.f32.mrf.mxu0
        %v3382 = vadd.f32 %v3294, %v3381
        %3383 = vmatmul.f32.gmra.mxu0 %v3268
        %v3384 = vpop.f32.mrf.mxu0
        %v3385 = vadd.f32 %v3294, %v3384
        %3386 = vmatmul.f32.gmra.mxu0 %v3269
        %v3387 = vpop.f32.mrf.mxu0
        %v3388 = vadd.f32 %v3294, %v3387
        %3389 = vmatmul.f32.gmra.mxu0 %v3270
        %v3390 = vpop.f32.mrf.mxu0
        %v3391 = vadd.f32 %v3294, %v3390
        %3392 = vmatmul.f32.gmra.mxu0 %v3271
        %v3393 = vpop.f32.mrf.mxu0
        %v3394 = vadd.f32 %v3294, %v3393
        %3395 = vmatmul.f32.gmra.mxu0 %v3272
        %v3396 = vpop.f32.mrf.mxu0
        %v3397 = vadd.f32 %v3294, %v3396
        %3398 = vmatmul.f32.gmra.mxu0 %v3273
        %v3399 = vpop.f32.mrf.mxu0
        %v3400 = vadd.f32 %v3294, %v3399
        %3401 = vmatmul.f32.gmra.mxu0 %v3274
        %v3402 = vpop.f32.mrf.mxu0
        %v3403 = vadd.f32 %v3294, %v3402
        %3404 = vmatmul.f32.gmra.mxu0 %v3275
        %v3405 = vpop.f32.mrf.mxu0
        %v3406 = vadd.f32 %v3294, %v3405
        %3407 = vdwg.mxu0
        %v3408 = vmax.f32 %v3313, 0.0
        %v3409 = vmax.f32 %v3316, 0.0
        %v3410 = vmax.f32 %v3319, 0.0
        %v3411 = vmax.f32 %v3322, 0.0
        %v3412 = vmax.f32 %v3325, 0.0
        %v3413 = vmax.f32 %v3328, 0.0
        %v3414 = vmax.f32 %v3331, 0.0
        %v3415 = vmax.f32 %v3334, 0.0
        %v3416 = vmax.f32 %v3337, 0.0
        %v3417 = vmax.f32 %v3340, 0.0
        %v3418 = vmax.f32 %v3343, 0.0
        %v3419 = vmax.f32 %v3346, 0.0
        %v3420 = vmax.f32 %v3349, 0.0
        %v3421 = vmax.f32 %v3352, 0.0
        %v3422 = vmax.f32 %v3355, 0.0
        %v3423 = vmax.f32 %v3358, 0.0
        %v3424 = vmax.f32 %v3361, 0.0
        %v3425 = vmax.f32 %v3364, 0.0
        %v3426 = vmax.f32 %v3367, 0.0
        %v3427 = vmax.f32 %v3370, 0.0
        %v3428 = vmax.f32 %v3373, 0.0
        %v3429 = vmax.f32 %v3376, 0.0
        %v3430 = vmax.f32 %v3379, 0.0
        %v3431 = vmax.f32 %v3382, 0.0
        %v3432 = vmax.f32 %v3385, 0.0
        %v3433 = vmax.f32 %v3388, 0.0
        %v3434 = vmax.f32 %v3391, 0.0
        %v3435 = vmax.f32 %v3394, 0.0
        %v3436 = vmax.f32 %v3397, 0.0
        %v3437 = vmax.f32 %v3400, 0.0
        %v3438 = vmax.f32 %v3403, 0.0
        %v3439 = vmax.f32 %v3406, 0.0
        %s3440 = scalar_lea.vmem [#allocation5], 1536
        %v3441 = vld [vmem:[%s3440] sm:$0xff]
        %v3442 = vld [vmem:[%s3440 + $0x8] sm:$0xff]
        %v3443 = vld [vmem:[%s3440 + $0x10] sm:$0xff]
        %v3444 = vld [vmem:[%s3440 + $0x18] sm:$0xff]
        %v3445 = vld [vmem:[%s3440 + $0x20] sm:$0xff]
        %v3446 = vld [vmem:[%s3440 + $0x28] sm:$0xff]
        %v3447 = vld [vmem:[%s3440 + $0x30] sm:$0xff]
        %v3448 = vld [vmem:[%s3440 + $0x38] sm:$0xff]
        %v3449 = vld [vmem:[%s3440 + $0x40] sm:$0xff]
        %v3450 = vld [vmem:[%s3440 + $0x48] sm:$0xff]
        %v3451 = vld [vmem:[%s3440 + $0x50] sm:$0xff]
        %v3452 = vld [vmem:[%s3440 + $0x58] sm:$0xff]
        %v3453 = vld [vmem:[%s3440 + $0x60] sm:$0xff]
        %v3454 = vld [vmem:[%s3440 + $0x68] sm:$0xff]
        %v3455 = vld [vmem:[%s3440 + $0x70] sm:$0xff]
        %v3456 = vld [vmem:[%s3440 + $0x78] sm:$0xff]
        %v3457 = vld [vmem:[#allocation7 + $0xb] sm:$0x1]
        %v3458 = vperm.slane %v3457, 0
        %3459 = vmatpush.msra.mxu0 %v3456
        %3460 = vmatpush.msra.mxu0 %v3455
        %3461 = vmatpush.msra.mxu0 %v3454
        %3462 = vmatpush.msra.mxu0 %v3453
        %3463 = vmatpush.msra.mxu0 %v3452
        %3464 = vmatpush.msra.mxu0 %v3451
        %3465 = vmatpush.msra.mxu0 %v3450
        %3466 = vmatpush.msra.mxu0 %v3449
        %3467 = vmatpush.msra.mxu0 %v3448
        %3468 = vmatpush.msra.mxu0 %v3447
        %3469 = vmatpush.msra.mxu0 %v3446
        %3470 = vmatpush.msra.mxu0 %v3445
        %3471 = vmatpush.msra.mxu0 %v3444
        %3472 = vmatpush.msra.mxu0 %v3443
        %3473 = vmatpush.msra.mxu0 %v3442
        %3474 = vmatpush.msra.mxu0 %v3441
        %3475 = vmatmul.f32.gmra.mxu0 %v3408
        %v3476 = vpop.f32.mrf.mxu0
        %v3477 = vadd.f32 %v3458, %v3476
        %3478 = vmatmul.f32.gmra.mxu0 %v3409
        %v3479 = vpop.f32.mrf.mxu0
        %v3480 = vadd.f32 %v3458, %v3479
        %3481 = vmatmul.f32.gmra.mxu0 %v3410
        %v3482 = vpop.f32.mrf.mxu0
        %v3483 = vadd.f32 %v3458, %v3482
        %3484 = vmatmul.f32.gmra.mxu0 %v3411
        %v3485 = vpop.f32.mrf.mxu0
        %v3486 = vadd.f32 %v3458, %v3485
        %3487 = vmatmul.f32.gmra.mxu0 %v3412
        %v3488 = vpop.f32.mrf.mxu0
        %v3489 = vadd.f32 %v3458, %v3488
        %3490 = vmatmul.f32.gmra.mxu0 %v3413
        %v3491 = vpop.f32.mrf.mxu0
        %v3492 = vadd.f32 %v3458, %v3491
        %3493 = vmatmul.f32.gmra.mxu0 %v3414
        %v3494 = vpop.f32.mrf.mxu0
        %v3495 = vadd.f32 %v3458, %v3494
        %3496 = vmatmul.f32.gmra.mxu0 %v3415
        %v3497 = vpop.f32.mrf.mxu0
        %v3498 = vadd.f32 %v3458, %v3497
        %3499 = vmatmul.f32.gmra.mxu0 %v3416
        %v3500 = vpop.f32.mrf.mxu0
        %v3501 = vadd.f32 %v3458, %v3500
        %3502 = vmatmul.f32.gmra.mxu0 %v3417
        %v3503 = vpop.f32.mrf.mxu0
        %v3504 = vadd.f32 %v3458, %v3503
        %3505 = vmatmul.f32.gmra.mxu0 %v3418
        %v3506 = vpop.f32.mrf.mxu0
        %v3507 = vadd.f32 %v3458, %v3506
        %3508 = vmatmul.f32.gmra.mxu0 %v3419
        %v3509 = vpop.f32.mrf.mxu0
        %v3510 = vadd.f32 %v3458, %v3509
        %3511 = vmatmul.f32.gmra.mxu0 %v3420
        %v3512 = vpop.f32.mrf.mxu0
        %v3513 = vadd.f32 %v3458, %v3512
        %3514 = vmatmul.f32.gmra.mxu0 %v3421
        %v3515 = vpop.f32.mrf.mxu0
        %v3516 = vadd.f32 %v3458, %v3515
        %3517 = vmatmul.f32.gmra.mxu0 %v3422
        %v3518 = vpop.f32.mrf.mxu0
        %v3519 = vadd.f32 %v3458, %v3518
        %3520 = vmatmul.f32.gmra.mxu0 %v3423
        %v3521 = vpop.f32.mrf.mxu0
        %v3522 = vadd.f32 %v3458, %v3521
        %3523 = vmatmul.f32.gmra.mxu0 %v3424
        %v3524 = vpop.f32.mrf.mxu0
        %v3525 = vadd.f32 %v3458, %v3524
        %3526 = vmatmul.f32.gmra.mxu0 %v3425
        %v3527 = vpop.f32.mrf.mxu0
        %v3528 = vadd.f32 %v3458, %v3527
        %3529 = vmatmul.f32.gmra.mxu0 %v3426
        %v3530 = vpop.f32.mrf.mxu0
        %v3531 = vadd.f32 %v3458, %v3530
        %3532 = vmatmul.f32.gmra.mxu0 %v3427
        %v3533 = vpop.f32.mrf.mxu0
        %v3534 = vadd.f32 %v3458, %v3533
        %3535 = vmatmul.f32.gmra.mxu0 %v3428
        %v3536 = vpop.f32.mrf.mxu0
        %v3537 = vadd.f32 %v3458, %v3536
        %3538 = vmatmul.f32.gmra.mxu0 %v3429
        %v3539 = vpop.f32.mrf.mxu0
        %v3540 = vadd.f32 %v3458, %v3539
        %3541 = vmatmul.f32.gmra.mxu0 %v3430
        %v3542 = vpop.f32.mrf.mxu0
        %v3543 = vadd.f32 %v3458, %v3542
        %3544 = vmatmul.f32.gmra.mxu0 %v3431
        %v3545 = vpop.f32.mrf.mxu0
        %v3546 = vadd.f32 %v3458, %v3545
        %3547 = vmatmul.f32.gmra.mxu0 %v3432
        %v3548 = vpop.f32.mrf.mxu0
        %v3549 = vadd.f32 %v3458, %v3548
        %3550 = vmatmul.f32.gmra.mxu0 %v3433
        %v3551 = vpop.f32.mrf.mxu0
        %v3552 = vadd.f32 %v3458, %v3551
        %3553 = vmatmul.f32.gmra.mxu0 %v3434
        %v3554 = vpop.f32.mrf.mxu0
        %v3555 = vadd.f32 %v3458, %v3554
        %3556 = vmatmul.f32.gmra.mxu0 %v3435
        %v3557 = vpop.f32.mrf.mxu0
        %v3558 = vadd.f32 %v3458, %v3557
        %3559 = vmatmul.f32.gmra.mxu0 %v3436
        %v3560 = vpop.f32.mrf.mxu0
        %v3561 = vadd.f32 %v3458, %v3560
        %3562 = vmatmul.f32.gmra.mxu0 %v3437
        %v3563 = vpop.f32.mrf.mxu0
        %v3564 = vadd.f32 %v3458, %v3563
        %3565 = vmatmul.f32.gmra.mxu0 %v3438
        %v3566 = vpop.f32.mrf.mxu0
        %v3567 = vadd.f32 %v3458, %v3566
        %3568 = vmatmul.f32.gmra.mxu0 %v3439
        %v3569 = vpop.f32.mrf.mxu0
        %v3570 = vadd.f32 %v3458, %v3569
        %3571 = vdwg.mxu0
        %v3572 = vmax.f32 %v3477, 0.0
        %v3573 = vmax.f32 %v3480, 0.0
        %v3574 = vmax.f32 %v3483, 0.0
        %v3575 = vmax.f32 %v3486, 0.0
        %v3576 = vmax.f32 %v3489, 0.0
        %v3577 = vmax.f32 %v3492, 0.0
        %v3578 = vmax.f32 %v3495, 0.0
        %v3579 = vmax.f32 %v3498, 0.0
        %v3580 = vmax.f32 %v3501, 0.0
        %v3581 = vmax.f32 %v3504, 0.0
        %v3582 = vmax.f32 %v3507, 0.0
        %v3583 = vmax.f32 %v3510, 0.0
        %v3584 = vmax.f32 %v3513, 0.0
        %v3585 = vmax.f32 %v3516, 0.0
        %v3586 = vmax.f32 %v3519, 0.0
        %v3587 = vmax.f32 %v3522, 0.0
        %v3588 = vmax.f32 %v3525, 0.0
        %v3589 = vmax.f32 %v3528, 0.0
        %v3590 = vmax.f32 %v3531, 0.0
        %v3591 = vmax.f32 %v3534, 0.0
        %v3592 = vmax.f32 %v3537, 0.0
        %v3593 = vmax.f32 %v3540, 0.0
        %v3594 = vmax.f32 %v3543, 0.0
        %v3595 = vmax.f32 %v3546, 0.0
        %v3596 = vmax.f32 %v3549, 0.0
        %v3597 = vmax.f32 %v3552, 0.0
        %v3598 = vmax.f32 %v3555, 0.0
        %v3599 = vmax.f32 %v3558, 0.0
        %v3600 = vmax.f32 %v3561, 0.0
        %v3601 = vmax.f32 %v3564, 0.0
        %v3602 = vmax.f32 %v3567, 0.0
        %v3603 = vmax.f32 %v3570, 0.0
        %s3604 = scalar_lea.vmem [#allocation5], 1664
        %v3605 = vld [vmem:[%s3604] sm:$0xff]
        %v3606 = vld [vmem:[%s3604 + $0x8] sm:$0xff]
        %v3607 = vld [vmem:[%s3604 + $0x10] sm:$0xff]
        %v3608 = vld [vmem:[%s3604 + $0x18] sm:$0xff]
        %v3609 = vld [vmem:[%s3604 + $0x20] sm:$0xff]
        %v3610 = vld [vmem:[%s3604 + $0x28] sm:$0xff]
        %v3611 = vld [vmem:[%s3604 + $0x30] sm:$0xff]
        %v3612 = vld [vmem:[%s3604 + $0x38] sm:$0xff]
        %v3613 = vld [vmem:[%s3604 + $0x40] sm:$0xff]
        %v3614 = vld [vmem:[%s3604 + $0x48] sm:$0xff]
        %v3615 = vld [vmem:[%s3604 + $0x50] sm:$0xff]
        %v3616 = vld [vmem:[%s3604 + $0x58] sm:$0xff]
        %v3617 = vld [vmem:[%s3604 + $0x60] sm:$0xff]
        %v3618 = vld [vmem:[%s3604 + $0x68] sm:$0xff]
        %v3619 = vld [vmem:[%s3604 + $0x70] sm:$0xff]
        %v3620 = vld [vmem:[%s3604 + $0x78] sm:$0xff]
        %v3621 = vld [vmem:[#allocation7 + $0xc] sm:$0x1]
        %v3622 = vperm.slane %v3621, 0
        %3623 = vmatpush.msra.mxu0 %v3620
        %3624 = vmatpush.msra.mxu0 %v3619
        %3625 = vmatpush.msra.mxu0 %v3618
        %3626 = vmatpush.msra.mxu0 %v3617
        %3627 = vmatpush.msra.mxu0 %v3616
        %3628 = vmatpush.msra.mxu0 %v3615
        %3629 = vmatpush.msra.mxu0 %v3614
        %3630 = vmatpush.msra.mxu0 %v3613
        %3631 = vmatpush.msra.mxu0 %v3612
        %3632 = vmatpush.msra.mxu0 %v3611
        %3633 = vmatpush.msra.mxu0 %v3610
        %3634 = vmatpush.msra.mxu0 %v3609
        %3635 = vmatpush.msra.mxu0 %v3608
        %3636 = vmatpush.msra.mxu0 %v3607
        %3637 = vmatpush.msra.mxu0 %v3606
        %3638 = vmatpush.msra.mxu0 %v3605
        %3639 = vmatmul.f32.gmra.mxu0 %v3572
        %v3640 = vpop.f32.mrf.mxu0
        %v3641 = vadd.f32 %v3622, %v3640
        %3642 = vmatmul.f32.gmra.mxu0 %v3573
        %v3643 = vpop.f32.mrf.mxu0
        %v3644 = vadd.f32 %v3622, %v3643
        %3645 = vmatmul.f32.gmra.mxu0 %v3574
        %v3646 = vpop.f32.mrf.mxu0
        %v3647 = vadd.f32 %v3622, %v3646
        %3648 = vmatmul.f32.gmra.mxu0 %v3575
        %v3649 = vpop.f32.mrf.mxu0
        %v3650 = vadd.f32 %v3622, %v3649
        %3651 = vmatmul.f32.gmra.mxu0 %v3576
        %v3652 = vpop.f32.mrf.mxu0
        %v3653 = vadd.f32 %v3622, %v3652
        %3654 = vmatmul.f32.gmra.mxu0 %v3577
        %v3655 = vpop.f32.mrf.mxu0
        %v3656 = vadd.f32 %v3622, %v3655
        %3657 = vmatmul.f32.gmra.mxu0 %v3578
        %v3658 = vpop.f32.mrf.mxu0
        %v3659 = vadd.f32 %v3622, %v3658
        %3660 = vmatmul.f32.gmra.mxu0 %v3579
        %v3661 = vpop.f32.mrf.mxu0
        %v3662 = vadd.f32 %v3622, %v3661
        %3663 = vmatmul.f32.gmra.mxu0 %v3580
        %v3664 = vpop.f32.mrf.mxu0
        %v3665 = vadd.f32 %v3622, %v3664
        %3666 = vmatmul.f32.gmra.mxu0 %v3581
        %v3667 = vpop.f32.mrf.mxu0
        %v3668 = vadd.f32 %v3622, %v3667
        %3669 = vmatmul.f32.gmra.mxu0 %v3582
        %v3670 = vpop.f32.mrf.mxu0
        %v3671 = vadd.f32 %v3622, %v3670
        %3672 = vmatmul.f32.gmra.mxu0 %v3583
        %v3673 = vpop.f32.mrf.mxu0
        %v3674 = vadd.f32 %v3622, %v3673
        %3675 = vmatmul.f32.gmra.mxu0 %v3584
        %v3676 = vpop.f32.mrf.mxu0
        %v3677 = vadd.f32 %v3622, %v3676
        %3678 = vmatmul.f32.gmra.mxu0 %v3585
        %v3679 = vpop.f32.mrf.mxu0
        %v3680 = vadd.f32 %v3622, %v3679
        %3681 = vmatmul.f32.gmra.mxu0 %v3586
        %v3682 = vpop.f32.mrf.mxu0
        %v3683 = vadd.f32 %v3622, %v3682
        %3684 = vmatmul.f32.gmra.mxu0 %v3587
        %v3685 = vpop.f32.mrf.mxu0
        %v3686 = vadd.f32 %v3622, %v3685
        %3687 = vmatmul.f32.gmra.mxu0 %v3588
        %v3688 = vpop.f32.mrf.mxu0
        %v3689 = vadd.f32 %v3622, %v3688
        %3690 = vmatmul.f32.gmra.mxu0 %v3589
        %v3691 = vpop.f32.mrf.mxu0
        %v3692 = vadd.f32 %v3622, %v3691
        %3693 = vmatmul.f32.gmra.mxu0 %v3590
        %v3694 = vpop.f32.mrf.mxu0
        %v3695 = vadd.f32 %v3622, %v3694
        %3696 = vmatmul.f32.gmra.mxu0 %v3591
        %v3697 = vpop.f32.mrf.mxu0
        %v3698 = vadd.f32 %v3622, %v3697
        %3699 = vmatmul.f32.gmra.mxu0 %v3592
        %v3700 = vpop.f32.mrf.mxu0
        %v3701 = vadd.f32 %v3622, %v3700
        %3702 = vmatmul.f32.gmra.mxu0 %v3593
        %v3703 = vpop.f32.mrf.mxu0
        %v3704 = vadd.f32 %v3622, %v3703
        %3705 = vmatmul.f32.gmra.mxu0 %v3594
        %v3706 = vpop.f32.mrf.mxu0
        %v3707 = vadd.f32 %v3622, %v3706
        %3708 = vmatmul.f32.gmra.mxu0 %v3595
        %v3709 = vpop.f32.mrf.mxu0
        %v3710 = vadd.f32 %v3622, %v3709
        %3711 = vmatmul.f32.gmra.mxu0 %v3596
        %v3712 = vpop.f32.mrf.mxu0
        %v3713 = vadd.f32 %v3622, %v3712
        %3714 = vmatmul.f32.gmra.mxu0 %v3597
        %v3715 = vpop.f32.mrf.mxu0
        %v3716 = vadd.f32 %v3622, %v3715
        %3717 = vmatmul.f32.gmra.mxu0 %v3598
        %v3718 = vpop.f32.mrf.mxu0
        %v3719 = vadd.f32 %v3622, %v3718
        %3720 = vmatmul.f32.gmra.mxu0 %v3599
        %v3721 = vpop.f32.mrf.mxu0
        %v3722 = vadd.f32 %v3622, %v3721
        %3723 = vmatmul.f32.gmra.mxu0 %v3600
        %v3724 = vpop.f32.mrf.mxu0
        %v3725 = vadd.f32 %v3622, %v3724
        %3726 = vmatmul.f32.gmra.mxu0 %v3601
        %v3727 = vpop.f32.mrf.mxu0
        %v3728 = vadd.f32 %v3622, %v3727
        %3729 = vmatmul.f32.gmra.mxu0 %v3602
        %v3730 = vpop.f32.mrf.mxu0
        %v3731 = vadd.f32 %v3622, %v3730
        %3732 = vmatmul.f32.gmra.mxu0 %v3603
        %v3733 = vpop.f32.mrf.mxu0
        %v3734 = vadd.f32 %v3622, %v3733
        %3735 = vdwg.mxu0
        %v3736 = vmax.f32 %v3641, 0.0
        %v3737 = vmax.f32 %v3644, 0.0
        %v3738 = vmax.f32 %v3647, 0.0
        %v3739 = vmax.f32 %v3650, 0.0
        %v3740 = vmax.f32 %v3653, 0.0
        %v3741 = vmax.f32 %v3656, 0.0
        %v3742 = vmax.f32 %v3659, 0.0
        %v3743 = vmax.f32 %v3662, 0.0
        %v3744 = vmax.f32 %v3665, 0.0
        %v3745 = vmax.f32 %v3668, 0.0
        %v3746 = vmax.f32 %v3671, 0.0
        %v3747 = vmax.f32 %v3674, 0.0
        %v3748 = vmax.f32 %v3677, 0.0
        %v3749 = vmax.f32 %v3680, 0.0
        %v3750 = vmax.f32 %v3683, 0.0
        %v3751 = vmax.f32 %v3686, 0.0
        %v3752 = vmax.f32 %v3689, 0.0
        %v3753 = vmax.f32 %v3692, 0.0
        %v3754 = vmax.f32 %v3695, 0.0
        %v3755 = vmax.f32 %v3698, 0.0
        %v3756 = vmax.f32 %v3701, 0.0
        %v3757 = vmax.f32 %v3704, 0.0
        %v3758 = vmax.f32 %v3707, 0.0
        %v3759 = vmax.f32 %v3710, 0.0
        %v3760 = vmax.f32 %v3713, 0.0
        %v3761 = vmax.f32 %v3716, 0.0
        %v3762 = vmax.f32 %v3719, 0.0
        %v3763 = vmax.f32 %v3722, 0.0
        %v3764 = vmax.f32 %v3725, 0.0
        %v3765 = vmax.f32 %v3728, 0.0
        %v3766 = vmax.f32 %v3731, 0.0
        %v3767 = vmax.f32 %v3734, 0.0
        %s3768 = scalar_lea.vmem [#allocation5], 1792
        %v3769 = vld [vmem:[%s3768] sm:$0xff]
        %v3770 = vld [vmem:[%s3768 + $0x8] sm:$0xff]
        %v3771 = vld [vmem:[%s3768 + $0x10] sm:$0xff]
        %v3772 = vld [vmem:[%s3768 + $0x18] sm:$0xff]
        %v3773 = vld [vmem:[%s3768 + $0x20] sm:$0xff]
        %v3774 = vld [vmem:[%s3768 + $0x28] sm:$0xff]
        %v3775 = vld [vmem:[%s3768 + $0x30] sm:$0xff]
        %v3776 = vld [vmem:[%s3768 + $0x38] sm:$0xff]
        %v3777 = vld [vmem:[%s3768 + $0x40] sm:$0xff]
        %v3778 = vld [vmem:[%s3768 + $0x48] sm:$0xff]
        %v3779 = vld [vmem:[%s3768 + $0x50] sm:$0xff]
        %v3780 = vld [vmem:[%s3768 + $0x58] sm:$0xff]
        %v3781 = vld [vmem:[%s3768 + $0x60] sm:$0xff]
        %v3782 = vld [vmem:[%s3768 + $0x68] sm:$0xff]
        %v3783 = vld [vmem:[%s3768 + $0x70] sm:$0xff]
        %v3784 = vld [vmem:[%s3768 + $0x78] sm:$0xff]
        %v3785 = vld [vmem:[#allocation7 + $0xd] sm:$0x1]
        %v3786 = vperm.slane %v3785, 0
        %3787 = vmatpush.msra.mxu0 %v3784
        %3788 = vmatpush.msra.mxu0 %v3783
        %3789 = vmatpush.msra.mxu0 %v3782
        %3790 = vmatpush.msra.mxu0 %v3781
        %3791 = vmatpush.msra.mxu0 %v3780
        %3792 = vmatpush.msra.mxu0 %v3779
        %3793 = vmatpush.msra.mxu0 %v3778
        %3794 = vmatpush.msra.mxu0 %v3777
        %3795 = vmatpush.msra.mxu0 %v3776
        %3796 = vmatpush.msra.mxu0 %v3775
        %3797 = vmatpush.msra.mxu0 %v3774
        %3798 = vmatpush.msra.mxu0 %v3773
        %3799 = vmatpush.msra.mxu0 %v3772
        %3800 = vmatpush.msra.mxu0 %v3771
        %3801 = vmatpush.msra.mxu0 %v3770
        %3802 = vmatpush.msra.mxu0 %v3769
        %3803 = vmatmul.f32.gmra.mxu0 %v3736
        %v3804 = vpop.f32.mrf.mxu0
        %v3805 = vadd.f32 %v3786, %v3804
        %3806 = vmatmul.f32.gmra.mxu0 %v3737
        %v3807 = vpop.f32.mrf.mxu0
        %v3808 = vadd.f32 %v3786, %v3807
        %3809 = vmatmul.f32.gmra.mxu0 %v3738
        %v3810 = vpop.f32.mrf.mxu0
        %v3811 = vadd.f32 %v3786, %v3810
        %3812 = vmatmul.f32.gmra.mxu0 %v3739
        %v3813 = vpop.f32.mrf.mxu0
        %v3814 = vadd.f32 %v3786, %v3813
        %3815 = vmatmul.f32.gmra.mxu0 %v3740
        %v3816 = vpop.f32.mrf.mxu0
        %v3817 = vadd.f32 %v3786, %v3816
        %3818 = vmatmul.f32.gmra.mxu0 %v3741
        %v3819 = vpop.f32.mrf.mxu0
        %v3820 = vadd.f32 %v3786, %v3819
        %3821 = vmatmul.f32.gmra.mxu0 %v3742
        %v3822 = vpop.f32.mrf.mxu0
        %v3823 = vadd.f32 %v3786, %v3822
        %3824 = vmatmul.f32.gmra.mxu0 %v3743
        %v3825 = vpop.f32.mrf.mxu0
        %v3826 = vadd.f32 %v3786, %v3825
        %3827 = vmatmul.f32.gmra.mxu0 %v3744
        %v3828 = vpop.f32.mrf.mxu0
        %v3829 = vadd.f32 %v3786, %v3828
        %3830 = vmatmul.f32.gmra.mxu0 %v3745
        %v3831 = vpop.f32.mrf.mxu0
        %v3832 = vadd.f32 %v3786, %v3831
        %3833 = vmatmul.f32.gmra.mxu0 %v3746
        %v3834 = vpop.f32.mrf.mxu0
        %v3835 = vadd.f32 %v3786, %v3834
        %3836 = vmatmul.f32.gmra.mxu0 %v3747
        %v3837 = vpop.f32.mrf.mxu0
        %v3838 = vadd.f32 %v3786, %v3837
        %3839 = vmatmul.f32.gmra.mxu0 %v3748
        %v3840 = vpop.f32.mrf.mxu0
        %v3841 = vadd.f32 %v3786, %v3840
        %3842 = vmatmul.f32.gmra.mxu0 %v3749
        %v3843 = vpop.f32.mrf.mxu0
        %v3844 = vadd.f32 %v3786, %v3843
        %3845 = vmatmul.f32.gmra.mxu0 %v3750
        %v3846 = vpop.f32.mrf.mxu0
        %v3847 = vadd.f32 %v3786, %v3846
        %3848 = vmatmul.f32.gmra.mxu0 %v3751
        %v3849 = vpop.f32.mrf.mxu0
        %v3850 = vadd.f32 %v3786, %v3849
        %3851 = vmatmul.f32.gmra.mxu0 %v3752
        %v3852 = vpop.f32.mrf.mxu0
        %v3853 = vadd.f32 %v3786, %v3852
        %3854 = vmatmul.f32.gmra.mxu0 %v3753
        %v3855 = vpop.f32.mrf.mxu0
        %v3856 = vadd.f32 %v3786, %v3855
        %3857 = vmatmul.f32.gmra.mxu0 %v3754
        %v3858 = vpop.f32.mrf.mxu0
        %v3859 = vadd.f32 %v3786, %v3858
        %3860 = vmatmul.f32.gmra.mxu0 %v3755
        %v3861 = vpop.f32.mrf.mxu0
        %v3862 = vadd.f32 %v3786, %v3861
        %3863 = vmatmul.f32.gmra.mxu0 %v3756
        %v3864 = vpop.f32.mrf.mxu0
        %v3865 = vadd.f32 %v3786, %v3864
        %3866 = vmatmul.f32.gmra.mxu0 %v3757
        %v3867 = vpop.f32.mrf.mxu0
        %v3868 = vadd.f32 %v3786, %v3867
        %3869 = vmatmul.f32.gmra.mxu0 %v3758
        %v3870 = vpop.f32.mrf.mxu0
        %v3871 = vadd.f32 %v3786, %v3870
        %3872 = vmatmul.f32.gmra.mxu0 %v3759
        %v3873 = vpop.f32.mrf.mxu0
        %v3874 = vadd.f32 %v3786, %v3873
        %3875 = vmatmul.f32.gmra.mxu0 %v3760
        %v3876 = vpop.f32.mrf.mxu0
        %v3877 = vadd.f32 %v3786, %v3876
        %3878 = vmatmul.f32.gmra.mxu0 %v3761
        %v3879 = vpop.f32.mrf.mxu0
        %v3880 = vadd.f32 %v3786, %v3879
        %3881 = vmatmul.f32.gmra.mxu0 %v3762
        %v3882 = vpop.f32.mrf.mxu0
        %v3883 = vadd.f32 %v3786, %v3882
        %3884 = vmatmul.f32.gmra.mxu0 %v3763
        %v3885 = vpop.f32.mrf.mxu0
        %v3886 = vadd.f32 %v3786, %v3885
        %3887 = vmatmul.f32.gmra.mxu0 %v3764
        %v3888 = vpop.f32.mrf.mxu0
        %v3889 = vadd.f32 %v3786, %v3888
        %3890 = vmatmul.f32.gmra.mxu0 %v3765
        %v3891 = vpop.f32.mrf.mxu0
        %v3892 = vadd.f32 %v3786, %v3891
        %3893 = vmatmul.f32.gmra.mxu0 %v3766
        %v3894 = vpop.f32.mrf.mxu0
        %v3895 = vadd.f32 %v3786, %v3894
        %3896 = vmatmul.f32.gmra.mxu0 %v3767
        %v3897 = vpop.f32.mrf.mxu0
        %v3898 = vadd.f32 %v3786, %v3897
        %3899 = vdwg.mxu0
        %v3900 = vmax.f32 %v3805, 0.0
        %v3901 = vmax.f32 %v3808, 0.0
        %v3902 = vmax.f32 %v3811, 0.0
        %v3903 = vmax.f32 %v3814, 0.0
        %v3904 = vmax.f32 %v3817, 0.0
        %v3905 = vmax.f32 %v3820, 0.0
        %v3906 = vmax.f32 %v3823, 0.0
        %v3907 = vmax.f32 %v3826, 0.0
        %v3908 = vmax.f32 %v3829, 0.0
        %v3909 = vmax.f32 %v3832, 0.0
        %v3910 = vmax.f32 %v3835, 0.0
        %v3911 = vmax.f32 %v3838, 0.0
        %v3912 = vmax.f32 %v3841, 0.0
        %v3913 = vmax.f32 %v3844, 0.0
        %v3914 = vmax.f32 %v3847, 0.0
        %v3915 = vmax.f32 %v3850, 0.0
        %v3916 = vmax.f32 %v3853, 0.0
        %v3917 = vmax.f32 %v3856, 0.0
        %v3918 = vmax.f32 %v3859, 0.0
        %v3919 = vmax.f32 %v3862, 0.0
        %v3920 = vmax.f32 %v3865, 0.0
        %v3921 = vmax.f32 %v3868, 0.0
        %v3922 = vmax.f32 %v3871, 0.0
        %v3923 = vmax.f32 %v3874, 0.0
        %v3924 = vmax.f32 %v3877, 0.0
        %v3925 = vmax.f32 %v3880, 0.0
        %v3926 = vmax.f32 %v3883, 0.0
        %v3927 = vmax.f32 %v3886, 0.0
        %v3928 = vmax.f32 %v3889, 0.0
        %v3929 = vmax.f32 %v3892, 0.0
        %v3930 = vmax.f32 %v3895, 0.0
        %v3931 = vmax.f32 %v3898, 0.0
        %s3932 = scalar_lea.vmem [#allocation5], 1920
        %v3933 = vld [vmem:[%s3932] sm:$0xff]
        %v3934 = vld [vmem:[%s3932 + $0x8] sm:$0xff]
        %v3935 = vld [vmem:[%s3932 + $0x10] sm:$0xff]
        %v3936 = vld [vmem:[%s3932 + $0x18] sm:$0xff]
        %v3937 = vld [vmem:[%s3932 + $0x20] sm:$0xff]
        %v3938 = vld [vmem:[%s3932 + $0x28] sm:$0xff]
        %v3939 = vld [vmem:[%s3932 + $0x30] sm:$0xff]
        %v3940 = vld [vmem:[%s3932 + $0x38] sm:$0xff]
        %v3941 = vld [vmem:[%s3932 + $0x40] sm:$0xff]
        %v3942 = vld [vmem:[%s3932 + $0x48] sm:$0xff]
        %v3943 = vld [vmem:[%s3932 + $0x50] sm:$0xff]
        %v3944 = vld [vmem:[%s3932 + $0x58] sm:$0xff]
        %v3945 = vld [vmem:[%s3932 + $0x60] sm:$0xff]
        %v3946 = vld [vmem:[%s3932 + $0x68] sm:$0xff]
        %v3947 = vld [vmem:[%s3932 + $0x70] sm:$0xff]
        %v3948 = vld [vmem:[%s3932 + $0x78] sm:$0xff]
        %v3949 = vld [vmem:[#allocation7 + $0xe] sm:$0x1]
        %v3950 = vperm.slane %v3949, 0
        %3951 = vmatpush.msra.mxu0 %v3948
        %3952 = vmatpush.msra.mxu0 %v3947
        %3953 = vmatpush.msra.mxu0 %v3946
        %3954 = vmatpush.msra.mxu0 %v3945
        %3955 = vmatpush.msra.mxu0 %v3944
        %3956 = vmatpush.msra.mxu0 %v3943
        %3957 = vmatpush.msra.mxu0 %v3942
        %3958 = vmatpush.msra.mxu0 %v3941
        %3959 = vmatpush.msra.mxu0 %v3940
        %3960 = vmatpush.msra.mxu0 %v3939
        %3961 = vmatpush.msra.mxu0 %v3938
        %3962 = vmatpush.msra.mxu0 %v3937
        %3963 = vmatpush.msra.mxu0 %v3936
        %3964 = vmatpush.msra.mxu0 %v3935
        %3965 = vmatpush.msra.mxu0 %v3934
        %3966 = vmatpush.msra.mxu0 %v3933
        %3967 = vmatmul.f32.gmra.mxu0 %v3900
        %v3968 = vpop.f32.mrf.mxu0
        %v3969 = vadd.f32 %v3950, %v3968
        %3970 = vmatmul.f32.gmra.mxu0 %v3901
        %v3971 = vpop.f32.mrf.mxu0
        %v3972 = vadd.f32 %v3950, %v3971
        %3973 = vmatmul.f32.gmra.mxu0 %v3902
        %v3974 = vpop.f32.mrf.mxu0
        %v3975 = vadd.f32 %v3950, %v3974
        %3976 = vmatmul.f32.gmra.mxu0 %v3903
        %v3977 = vpop.f32.mrf.mxu0
        %v3978 = vadd.f32 %v3950, %v3977
        %3979 = vmatmul.f32.gmra.mxu0 %v3904
        %v3980 = vpop.f32.mrf.mxu0
        %v3981 = vadd.f32 %v3950, %v3980
        %3982 = vmatmul.f32.gmra.mxu0 %v3905
        %v3983 = vpop.f32.mrf.mxu0
        %v3984 = vadd.f32 %v3950, %v3983
        %3985 = vmatmul.f32.gmra.mxu0 %v3906
        %v3986 = vpop.f32.mrf.mxu0
        %v3987 = vadd.f32 %v3950, %v3986
        %3988 = vmatmul.f32.gmra.mxu0 %v3907
        %v3989 = vpop.f32.mrf.mxu0
        %v3990 = vadd.f32 %v3950, %v3989
        %3991 = vmatmul.f32.gmra.mxu0 %v3908
        %v3992 = vpop.f32.mrf.mxu0
        %v3993 = vadd.f32 %v3950, %v3992
        %3994 = vmatmul.f32.gmra.mxu0 %v3909
        %v3995 = vpop.f32.mrf.mxu0
        %v3996 = vadd.f32 %v3950, %v3995
        %3997 = vmatmul.f32.gmra.mxu0 %v3910
        %v3998 = vpop.f32.mrf.mxu0
        %v3999 = vadd.f32 %v3950, %v3998
        %4000 = vmatmul.f32.gmra.mxu0 %v3911
        %v4001 = vpop.f32.mrf.mxu0
        %v4002 = vadd.f32 %v3950, %v4001
        %4003 = vmatmul.f32.gmra.mxu0 %v3912
        %v4004 = vpop.f32.mrf.mxu0
        %v4005 = vadd.f32 %v3950, %v4004
        %4006 = vmatmul.f32.gmra.mxu0 %v3913
        %v4007 = vpop.f32.mrf.mxu0
        %v4008 = vadd.f32 %v3950, %v4007
        %4009 = vmatmul.f32.gmra.mxu0 %v3914
        %v4010 = vpop.f32.mrf.mxu0
        %v4011 = vadd.f32 %v3950, %v4010
        %4012 = vmatmul.f32.gmra.mxu0 %v3915
        %v4013 = vpop.f32.mrf.mxu0
        %v4014 = vadd.f32 %v3950, %v4013
        %4015 = vmatmul.f32.gmra.mxu0 %v3916
        %v4016 = vpop.f32.mrf.mxu0
        %v4017 = vadd.f32 %v3950, %v4016
        %4018 = vmatmul.f32.gmra.mxu0 %v3917
        %v4019 = vpop.f32.mrf.mxu0
        %v4020 = vadd.f32 %v3950, %v4019
        %4021 = vmatmul.f32.gmra.mxu0 %v3918
        %v4022 = vpop.f32.mrf.mxu0
        %v4023 = vadd.f32 %v3950, %v4022
        %4024 = vmatmul.f32.gmra.mxu0 %v3919
        %v4025 = vpop.f32.mrf.mxu0
        %v4026 = vadd.f32 %v3950, %v4025
        %4027 = vmatmul.f32.gmra.mxu0 %v3920
        %v4028 = vpop.f32.mrf.mxu0
        %v4029 = vadd.f32 %v3950, %v4028
        %4030 = vmatmul.f32.gmra.mxu0 %v3921
        %v4031 = vpop.f32.mrf.mxu0
        %v4032 = vadd.f32 %v3950, %v4031
        %4033 = vmatmul.f32.gmra.mxu0 %v3922
        %v4034 = vpop.f32.mrf.mxu0
        %v4035 = vadd.f32 %v3950, %v4034
        %4036 = vmatmul.f32.gmra.mxu0 %v3923
        %v4037 = vpop.f32.mrf.mxu0
        %v4038 = vadd.f32 %v3950, %v4037
        %4039 = vmatmul.f32.gmra.mxu0 %v3924
        %v4040 = vpop.f32.mrf.mxu0
        %v4041 = vadd.f32 %v3950, %v4040
        %4042 = vmatmul.f32.gmra.mxu0 %v3925
        %v4043 = vpop.f32.mrf.mxu0
        %v4044 = vadd.f32 %v3950, %v4043
        %4045 = vmatmul.f32.gmra.mxu0 %v3926
        %v4046 = vpop.f32.mrf.mxu0
        %v4047 = vadd.f32 %v3950, %v4046
        %4048 = vmatmul.f32.gmra.mxu0 %v3927
        %v4049 = vpop.f32.mrf.mxu0
        %v4050 = vadd.f32 %v3950, %v4049
        %4051 = vmatmul.f32.gmra.mxu0 %v3928
        %v4052 = vpop.f32.mrf.mxu0
        %v4053 = vadd.f32 %v3950, %v4052
        %4054 = vmatmul.f32.gmra.mxu0 %v3929
        %v4055 = vpop.f32.mrf.mxu0
        %v4056 = vadd.f32 %v3950, %v4055
        %4057 = vmatmul.f32.gmra.mxu0 %v3930
        %v4058 = vpop.f32.mrf.mxu0
        %v4059 = vadd.f32 %v3950, %v4058
        %4060 = vmatmul.f32.gmra.mxu0 %v3931
        %v4061 = vpop.f32.mrf.mxu0
        %v4062 = vadd.f32 %v3950, %v4061
        %4063 = vdwg.mxu0
        %v4064 = vmax.f32 %v3969, 0.0
        %v4065 = vmax.f32 %v3972, 0.0
        %v4066 = vmax.f32 %v3975, 0.0
        %v4067 = vmax.f32 %v3978, 0.0
        %v4068 = vmax.f32 %v3981, 0.0
        %v4069 = vmax.f32 %v3984, 0.0
        %v4070 = vmax.f32 %v3987, 0.0
        %v4071 = vmax.f32 %v3990, 0.0
        %v4072 = vmax.f32 %v3993, 0.0
        %v4073 = vmax.f32 %v3996, 0.0
        %v4074 = vmax.f32 %v3999, 0.0
        %v4075 = vmax.f32 %v4002, 0.0
        %v4076 = vmax.f32 %v4005, 0.0
        %v4077 = vmax.f32 %v4008, 0.0
        %v4078 = vmax.f32 %v4011, 0.0
        %v4079 = vmax.f32 %v4014, 0.0
        %v4080 = vmax.f32 %v4017, 0.0
        %v4081 = vmax.f32 %v4020, 0.0
        %v4082 = vmax.f32 %v4023, 0.0
        %v4083 = vmax.f32 %v4026, 0.0
        %v4084 = vmax.f32 %v4029, 0.0
        %v4085 = vmax.f32 %v4032, 0.0
        %v4086 = vmax.f32 %v4035, 0.0
        %v4087 = vmax.f32 %v4038, 0.0
        %v4088 = vmax.f32 %v4041, 0.0
        %v4089 = vmax.f32 %v4044, 0.0
        %v4090 = vmax.f32 %v4047, 0.0
        %v4091 = vmax.f32 %v4050, 0.0
        %v4092 = vmax.f32 %v4053, 0.0
        %v4093 = vmax.f32 %v4056, 0.0
        %v4094 = vmax.f32 %v4059, 0.0
        %v4095 = vmax.f32 %v4062, 0.0
        %s4096 = scalar_lea.vmem [#allocation5], 2048
        %v4097 = vld [vmem:[%s4096] sm:$0xff]
        %v4098 = vld [vmem:[%s4096 + $0x8] sm:$0xff]
        %v4099 = vld [vmem:[%s4096 + $0x10] sm:$0xff]
        %v4100 = vld [vmem:[%s4096 + $0x18] sm:$0xff]
        %v4101 = vld [vmem:[%s4096 + $0x20] sm:$0xff]
        %v4102 = vld [vmem:[%s4096 + $0x28] sm:$0xff]
        %v4103 = vld [vmem:[%s4096 + $0x30] sm:$0xff]
        %v4104 = vld [vmem:[%s4096 + $0x38] sm:$0xff]
        %v4105 = vld [vmem:[%s4096 + $0x40] sm:$0xff]
        %v4106 = vld [vmem:[%s4096 + $0x48] sm:$0xff]
        %v4107 = vld [vmem:[%s4096 + $0x50] sm:$0xff]
        %v4108 = vld [vmem:[%s4096 + $0x58] sm:$0xff]
        %v4109 = vld [vmem:[%s4096 + $0x60] sm:$0xff]
        %v4110 = vld [vmem:[%s4096 + $0x68] sm:$0xff]
        %v4111 = vld [vmem:[%s4096 + $0x70] sm:$0xff]
        %v4112 = vld [vmem:[%s4096 + $0x78] sm:$0xff]
        %v4113 = vld [vmem:[#allocation7 + $0xf] sm:$0x1]
        %v4114 = vperm.slane %v4113, 0
        %4115 = vmatpush.msra.mxu0 %v4112
        %4116 = vmatpush.msra.mxu0 %v4111
        %4117 = vmatpush.msra.mxu0 %v4110
        %4118 = vmatpush.msra.mxu0 %v4109
        %4119 = vmatpush.msra.mxu0 %v4108
        %4120 = vmatpush.msra.mxu0 %v4107
        %4121 = vmatpush.msra.mxu0 %v4106
        %4122 = vmatpush.msra.mxu0 %v4105
        %4123 = vmatpush.msra.mxu0 %v4104
        %4124 = vmatpush.msra.mxu0 %v4103
        %4125 = vmatpush.msra.mxu0 %v4102
        %4126 = vmatpush.msra.mxu0 %v4101
        %4127 = vmatpush.msra.mxu0 %v4100
        %4128 = vmatpush.msra.mxu0 %v4099
        %4129 = vmatpush.msra.mxu0 %v4098
        %4130 = vmatpush.msra.mxu0 %v4097
        %4131 = vmatmul.f32.gmra.mxu0 %v4064
        %v4132 = vpop.f32.mrf.mxu0
        %v4133 = vadd.f32 %v4114, %v4132
        %4134 = vmatmul.f32.gmra.mxu0 %v4065
        %v4135 = vpop.f32.mrf.mxu0
        %v4136 = vadd.f32 %v4114, %v4135
        %4137 = vmatmul.f32.gmra.mxu0 %v4066
        %v4138 = vpop.f32.mrf.mxu0
        %v4139 = vadd.f32 %v4114, %v4138
        %4140 = vmatmul.f32.gmra.mxu0 %v4067
        %v4141 = vpop.f32.mrf.mxu0
        %v4142 = vadd.f32 %v4114, %v4141
        %4143 = vmatmul.f32.gmra.mxu0 %v4068
        %v4144 = vpop.f32.mrf.mxu0
        %v4145 = vadd.f32 %v4114, %v4144
        %4146 = vmatmul.f32.gmra.mxu0 %v4069
        %v4147 = vpop.f32.mrf.mxu0
        %v4148 = vadd.f32 %v4114, %v4147
        %4149 = vmatmul.f32.gmra.mxu0 %v4070
        %v4150 = vpop.f32.mrf.mxu0
        %v4151 = vadd.f32 %v4114, %v4150
        %4152 = vmatmul.f32.gmra.mxu0 %v4071
        %v4153 = vpop.f32.mrf.mxu0
        %v4154 = vadd.f32 %v4114, %v4153
        %4155 = vmatmul.f32.gmra.mxu0 %v4072
        %v4156 = vpop.f32.mrf.mxu0
        %v4157 = vadd.f32 %v4114, %v4156
        %4158 = vmatmul.f32.gmra.mxu0 %v4073
        %v4159 = vpop.f32.mrf.mxu0
        %v4160 = vadd.f32 %v4114, %v4159
        %4161 = vmatmul.f32.gmra.mxu0 %v4074
        %v4162 = vpop.f32.mrf.mxu0
        %v4163 = vadd.f32 %v4114, %v4162
        %4164 = vmatmul.f32.gmra.mxu0 %v4075
        %v4165 = vpop.f32.mrf.mxu0
        %v4166 = vadd.f32 %v4114, %v4165
        %4167 = vmatmul.f32.gmra.mxu0 %v4076
        %v4168 = vpop.f32.mrf.mxu0
        %v4169 = vadd.f32 %v4114, %v4168
        %4170 = vmatmul.f32.gmra.mxu0 %v4077
        %v4171 = vpop.f32.mrf.mxu0
        %v4172 = vadd.f32 %v4114, %v4171
        %4173 = vmatmul.f32.gmra.mxu0 %v4078
        %v4174 = vpop.f32.mrf.mxu0
        %v4175 = vadd.f32 %v4114, %v4174
        %4176 = vmatmul.f32.gmra.mxu0 %v4079
        %v4177 = vpop.f32.mrf.mxu0
        %v4178 = vadd.f32 %v4114, %v4177
        %4179 = vmatmul.f32.gmra.mxu0 %v4080
        %v4180 = vpop.f32.mrf.mxu0
        %v4181 = vadd.f32 %v4114, %v4180
        %4182 = vmatmul.f32.gmra.mxu0 %v4081
        %v4183 = vpop.f32.mrf.mxu0
        %v4184 = vadd.f32 %v4114, %v4183
        %4185 = vmatmul.f32.gmra.mxu0 %v4082
        %v4186 = vpop.f32.mrf.mxu0
        %v4187 = vadd.f32 %v4114, %v4186
        %4188 = vmatmul.f32.gmra.mxu0 %v4083
        %v4189 = vpop.f32.mrf.mxu0
        %v4190 = vadd.f32 %v4114, %v4189
        %4191 = vmatmul.f32.gmra.mxu0 %v4084
        %v4192 = vpop.f32.mrf.mxu0
        %v4193 = vadd.f32 %v4114, %v4192
        %4194 = vmatmul.f32.gmra.mxu0 %v4085
        %v4195 = vpop.f32.mrf.mxu0
        %v4196 = vadd.f32 %v4114, %v4195
        %4197 = vmatmul.f32.gmra.mxu0 %v4086
        %v4198 = vpop.f32.mrf.mxu0
        %v4199 = vadd.f32 %v4114, %v4198
        %4200 = vmatmul.f32.gmra.mxu0 %v4087
        %v4201 = vpop.f32.mrf.mxu0
        %v4202 = vadd.f32 %v4114, %v4201
        %4203 = vmatmul.f32.gmra.mxu0 %v4088
        %v4204 = vpop.f32.mrf.mxu0
        %v4205 = vadd.f32 %v4114, %v4204
        %4206 = vmatmul.f32.gmra.mxu0 %v4089
        %v4207 = vpop.f32.mrf.mxu0
        %v4208 = vadd.f32 %v4114, %v4207
        %4209 = vmatmul.f32.gmra.mxu0 %v4090
        %v4210 = vpop.f32.mrf.mxu0
        %v4211 = vadd.f32 %v4114, %v4210
        %4212 = vmatmul.f32.gmra.mxu0 %v4091
        %v4213 = vpop.f32.mrf.mxu0
        %v4214 = vadd.f32 %v4114, %v4213
        %4215 = vmatmul.f32.gmra.mxu0 %v4092
        %v4216 = vpop.f32.mrf.mxu0
        %v4217 = vadd.f32 %v4114, %v4216
        %4218 = vmatmul.f32.gmra.mxu0 %v4093
        %v4219 = vpop.f32.mrf.mxu0
        %v4220 = vadd.f32 %v4114, %v4219
        %4221 = vmatmul.f32.gmra.mxu0 %v4094
        %v4222 = vpop.f32.mrf.mxu0
        %v4223 = vadd.f32 %v4114, %v4222
        %4224 = vmatmul.f32.gmra.mxu0 %v4095
        %v4225 = vpop.f32.mrf.mxu0
        %v4226 = vadd.f32 %v4114, %v4225
        %4227 = vdwg.mxu0
        %v4228 = vmul.f32 %v4133, 2.0
        %v4229 = vmul.f32 %v4136, 2.0
        %v4230 = vmul.f32 %v4139, 2.0
        %v4231 = vmul.f32 %v4142, 2.0
        %v4232 = vmul.f32 %v4145, 2.0
        %v4233 = vmul.f32 %v4148, 2.0
        %v4234 = vmul.f32 %v4151, 2.0
        %v4235 = vmul.f32 %v4154, 2.0
        %v4236 = vmul.f32 %v4157, 2.0
        %v4237 = vmul.f32 %v4160, 2.0
        %v4238 = vmul.f32 %v4163, 2.0
        %v4239 = vmul.f32 %v4166, 2.0
        %v4240 = vmul.f32 %v4169, 2.0
        %v4241 = vmul.f32 %v4172, 2.0
        %v4242 = vmul.f32 %v4175, 2.0
        %v4243 = vmul.f32 %v4178, 2.0
        %v4244 = vmul.f32 %v4181, 2.0
        %v4245 = vmul.f32 %v4184, 2.0
        %v4246 = vmul.f32 %v4187, 2.0
        %v4247 = vmul.f32 %v4190, 2.0
        %v4248 = vmul.f32 %v4193, 2.0
        %v4249 = vmul.f32 %v4196, 2.0
        %v4250 = vmul.f32 %v4199, 2.0
        %v4251 = vmul.f32 %v4202, 2.0
        %v4252 = vmul.f32 %v4205, 2.0
        %v4253 = vmul.f32 %v4208, 2.0
        %v4254 = vmul.f32 %v4211, 2.0
        %v4255 = vmul.f32 %v4214, 2.0
        %v4256 = vmul.f32 %v4217, 2.0
        %v4257 = vmul.f32 %v4220, 2.0
        %v4258 = vmul.f32 %v4223, 2.0
        %v4259 = vmul.f32 %v4226, 2.0
        %v4260 = vxor.u32 %v4228, 2147483648
        %v4261 = vxor.u32 %v4229, 2147483648
        %v4262 = vxor.u32 %v4230, 2147483648
        %v4263 = vxor.u32 %v4231, 2147483648
        %v4264 = vxor.u32 %v4232, 2147483648
        %v4265 = vxor.u32 %v4233, 2147483648
        %v4266 = vxor.u32 %v4234, 2147483648
        %v4267 = vxor.u32 %v4235, 2147483648
        %v4268 = vxor.u32 %v4236, 2147483648
        %v4269 = vxor.u32 %v4237, 2147483648
        %v4270 = vxor.u32 %v4238, 2147483648
        %v4271 = vxor.u32 %v4239, 2147483648
        %v4272 = vxor.u32 %v4240, 2147483648
        %v4273 = vxor.u32 %v4241, 2147483648
        %v4274 = vxor.u32 %v4242, 2147483648
        %v4275 = vxor.u32 %v4243, 2147483648
        %v4276 = vxor.u32 %v4244, 2147483648
        %v4277 = vxor.u32 %v4245, 2147483648
        %v4278 = vxor.u32 %v4246, 2147483648
        %v4279 = vxor.u32 %v4247, 2147483648
        %v4280 = vxor.u32 %v4248, 2147483648
        %v4281 = vxor.u32 %v4249, 2147483648
        %v4282 = vxor.u32 %v4250, 2147483648
        %v4283 = vxor.u32 %v4251, 2147483648
        %v4284 = vxor.u32 %v4252, 2147483648
        %v4285 = vxor.u32 %v4253, 2147483648
        %v4286 = vxor.u32 %v4254, 2147483648
        %v4287 = vxor.u32 %v4255, 2147483648
        %v4288 = vxor.u32 %v4256, 2147483648
        %v4289 = vxor.u32 %v4257, 2147483648
        %v4290 = vxor.u32 %v4258, 2147483648
        %v4291 = vxor.u32 %v4259, 2147483648
        %v4292 = vmul.f32 %v4260, 1.442695
        %v4293 = vpow.pop %v4292
        %v4294 = vmul.f32 %v4261, 1.442695
        %v4295 = vpow.pop %v4294
        %v4296 = vmul.f32 %v4262, 1.442695
        %v4297 = vpow.pop %v4296
        %v4298 = vmul.f32 %v4263, 1.442695
        %v4299 = vpow.pop %v4298
        %v4300 = vmul.f32 %v4264, 1.442695
        %v4301 = vpow.pop %v4300
        %v4302 = vmul.f32 %v4265, 1.442695
        %v4303 = vpow.pop %v4302
        %v4304 = vmul.f32 %v4266, 1.442695
        %v4305 = vpow.pop %v4304
        %v4306 = vmul.f32 %v4267, 1.442695
        %v4307 = vpow.pop %v4306
        %v4308 = vmul.f32 %v4268, 1.442695
        %v4309 = vpow.pop %v4308
        %v4310 = vmul.f32 %v4269, 1.442695
        %v4311 = vpow.pop %v4310
        %v4312 = vmul.f32 %v4270, 1.442695
        %v4313 = vpow.pop %v4312
        %v4314 = vmul.f32 %v4271, 1.442695
        %v4315 = vpow.pop %v4314
        %v4316 = vmul.f32 %v4272, 1.442695
        %v4317 = vpow.pop %v4316
        %v4318 = vmul.f32 %v4273, 1.442695
        %v4319 = vpow.pop %v4318
        %v4320 = vmul.f32 %v4274, 1.442695
        %v4321 = vpow.pop %v4320
        %v4322 = vmul.f32 %v4275, 1.442695
        %v4323 = vpow.pop %v4322
        %v4324 = vmul.f32 %v4276, 1.442695
        %v4325 = vpow.pop %v4324
        %v4326 = vmul.f32 %v4277, 1.442695
        %v4327 = vpow.pop %v4326
        %v4328 = vmul.f32 %v4278, 1.442695
        %v4329 = vpow.pop %v4328
        %v4330 = vmul.f32 %v4279, 1.442695
        %v4331 = vpow.pop %v4330
        %v4332 = vmul.f32 %v4280, 1.442695
        %v4333 = vpow.pop %v4332
        %v4334 = vmul.f32 %v4281, 1.442695
        %v4335 = vpow.pop %v4334
        %v4336 = vmul.f32 %v4282, 1.442695
        %v4337 = vpow.pop %v4336
        %v4338 = vmul.f32 %v4283, 1.442695
        %v4339 = vpow.pop %v4338
        %v4340 = vmul.f32 %v4284, 1.442695
        %v4341 = vpow.pop %v4340
        %v4342 = vmul.f32 %v4285, 1.442695
        %v4343 = vpow.pop %v4342
        %v4344 = vmul.f32 %v4286, 1.442695
        %v4345 = vpow.pop %v4344
        %v4346 = vmul.f32 %v4287, 1.442695
        %v4347 = vpow.pop %v4346
        %v4348 = vmul.f32 %v4288, 1.442695
        %v4349 = vpow.pop %v4348
        %v4350 = vmul.f32 %v4289, 1.442695
        %v4351 = vpow.pop %v4350
        %v4352 = vmul.f32 %v4290, 1.442695
        %v4353 = vpow.pop %v4352
        %v4354 = vmul.f32 %v4291, 1.442695
        %v4355 = vpow.pop %v4354
        %v4356 = vadd.f32 %v4293, 1.0
        %v4357 = vadd.f32 %v4295, 1.0
        %v4358 = vadd.f32 %v4297, 1.0
        %v4359 = vadd.f32 %v4299, 1.0
        %v4360 = vadd.f32 %v4301, 1.0
        %v4361 = vadd.f32 %v4303, 1.0
        %v4362 = vadd.f32 %v4305, 1.0
        %v4363 = vadd.f32 %v4307, 1.0
        %v4364 = vadd.f32 %v4309, 1.0
        %v4365 = vadd.f32 %v4311, 1.0
        %v4366 = vadd.f32 %v4313, 1.0
        %v4367 = vadd.f32 %v4315, 1.0
        %v4368 = vadd.f32 %v4317, 1.0
        %v4369 = vadd.f32 %v4319, 1.0
        %v4370 = vadd.f32 %v4321, 1.0
        %v4371 = vadd.f32 %v4323, 1.0
        %v4372 = vadd.f32 %v4325, 1.0
        %v4373 = vadd.f32 %v4327, 1.0
        %v4374 = vadd.f32 %v4329, 1.0
        %v4375 = vadd.f32 %v4331, 1.0
        %v4376 = vadd.f32 %v4333, 1.0
        %v4377 = vadd.f32 %v4335, 1.0
        %v4378 = vadd.f32 %v4337, 1.0
        %v4379 = vadd.f32 %v4339, 1.0
        %v4380 = vadd.f32 %v4341, 1.0
        %v4381 = vadd.f32 %v4343, 1.0
        %v4382 = vadd.f32 %v4345, 1.0
        %v4383 = vadd.f32 %v4347, 1.0
        %v4384 = vadd.f32 %v4349, 1.0
        %v4385 = vadd.f32 %v4351, 1.0
        %v4386 = vadd.f32 %v4353, 1.0
        %v4387 = vadd.f32 %v4355, 1.0
        %v4388 = vrcp.pop %v4356
        %v4389 = vmul.f32 %v4356, %v4388
        %v4390 = vsub.f32 1.0, %v4389
        %v4391 = vmul.f32 %v4388, %v4390
        %v4392 = vadd.f32 %v4388, %v4391
        %vm4393 = vweird.f32 %v4356
        %vm4394 = vweird.f32 %v4388
        %vm4395 = vmor %vm4393, %vm4394
        %v4396 = vsel %vm4395, %v4388, %v4392
        %v4397 = vand.u32 2147483647, %v4356
        %vm4398 = vcmp.eq.f32.partialorder %v4397, 8.507059e+37
        %v4399 = vand.u32 %v4356, 2147483648
        %v4400 = vor.u32 1.1754944e-38, %v4399
        %v4401 = vsel %vm4398, %v4400, %v4396
        %v4402 = vmul.f32 1.0, %v4401
        %v4403 = vrcp.pop %v4357
        %v4404 = vmul.f32 %v4357, %v4403
        %v4405 = vsub.f32 1.0, %v4404
        %v4406 = vmul.f32 %v4403, %v4405
        %v4407 = vadd.f32 %v4403, %v4406
        %vm4408 = vweird.f32 %v4357
        %vm4409 = vweird.f32 %v4403
        %vm4410 = vmor %vm4408, %vm4409
        %v4411 = vsel %vm4410, %v4403, %v4407
        %v4412 = vand.u32 2147483647, %v4357
        %vm4413 = vcmp.eq.f32.partialorder %v4412, 8.507059e+37
        %v4414 = vand.u32 %v4357, 2147483648
        %v4415 = vor.u32 1.1754944e-38, %v4414
        %v4416 = vsel %vm4413, %v4415, %v4411
        %v4417 = vmul.f32 1.0, %v4416
        %v4418 = vrcp.pop %v4358
        %v4419 = vmul.f32 %v4358, %v4418
        %v4420 = vsub.f32 1.0, %v4419
        %v4421 = vmul.f32 %v4418, %v4420
        %v4422 = vadd.f32 %v4418, %v4421
        %vm4423 = vweird.f32 %v4358
        %vm4424 = vweird.f32 %v4418
        %vm4425 = vmor %vm4423, %vm4424
        %v4426 = vsel %vm4425, %v4418, %v4422
        %v4427 = vand.u32 2147483647, %v4358
        %vm4428 = vcmp.eq.f32.partialorder %v4427, 8.507059e+37
        %v4429 = vand.u32 %v4358, 2147483648
        %v4430 = vor.u32 1.1754944e-38, %v4429
        %v4431 = vsel %vm4428, %v4430, %v4426
        %v4432 = vmul.f32 1.0, %v4431
        %v4433 = vrcp.pop %v4359
        %v4434 = vmul.f32 %v4359, %v4433
        %v4435 = vsub.f32 1.0, %v4434
        %v4436 = vmul.f32 %v4433, %v4435
        %v4437 = vadd.f32 %v4433, %v4436
        %vm4438 = vweird.f32 %v4359
        %vm4439 = vweird.f32 %v4433
        %vm4440 = vmor %vm4438, %vm4439
        %v4441 = vsel %vm4440, %v4433, %v4437
        %v4442 = vand.u32 2147483647, %v4359
        %vm4443 = vcmp.eq.f32.partialorder %v4442, 8.507059e+37
        %v4444 = vand.u32 %v4359, 2147483648
        %v4445 = vor.u32 1.1754944e-38, %v4444
        %v4446 = vsel %vm4443, %v4445, %v4441
        %v4447 = vmul.f32 1.0, %v4446
        %v4448 = vrcp.pop %v4360
        %v4449 = vmul.f32 %v4360, %v4448
        %v4450 = vsub.f32 1.0, %v4449
        %v4451 = vmul.f32 %v4448, %v4450
        %v4452 = vadd.f32 %v4448, %v4451
        %vm4453 = vweird.f32 %v4360
        %vm4454 = vweird.f32 %v4448
        %vm4455 = vmor %vm4453, %vm4454
        %v4456 = vsel %vm4455, %v4448, %v4452
        %v4457 = vand.u32 2147483647, %v4360
        %vm4458 = vcmp.eq.f32.partialorder %v4457, 8.507059e+37
        %v4459 = vand.u32 %v4360, 2147483648
        %v4460 = vor.u32 1.1754944e-38, %v4459
        %v4461 = vsel %vm4458, %v4460, %v4456
        %v4462 = vmul.f32 1.0, %v4461
        %v4463 = vrcp.pop %v4361
        %v4464 = vmul.f32 %v4361, %v4463
        %v4465 = vsub.f32 1.0, %v4464
        %v4466 = vmul.f32 %v4463, %v4465
        %v4467 = vadd.f32 %v4463, %v4466
        %vm4468 = vweird.f32 %v4361
        %vm4469 = vweird.f32 %v4463
        %vm4470 = vmor %vm4468, %vm4469
        %v4471 = vsel %vm4470, %v4463, %v4467
        %v4472 = vand.u32 2147483647, %v4361
        %vm4473 = vcmp.eq.f32.partialorder %v4472, 8.507059e+37
        %v4474 = vand.u32 %v4361, 2147483648
        %v4475 = vor.u32 1.1754944e-38, %v4474
        %v4476 = vsel %vm4473, %v4475, %v4471
        %v4477 = vmul.f32 1.0, %v4476
        %v4478 = vrcp.pop %v4362
        %v4479 = vmul.f32 %v4362, %v4478
        %v4480 = vsub.f32 1.0, %v4479
        %v4481 = vmul.f32 %v4478, %v4480
        %v4482 = vadd.f32 %v4478, %v4481
        %vm4483 = vweird.f32 %v4362
        %vm4484 = vweird.f32 %v4478
        %vm4485 = vmor %vm4483, %vm4484
        %v4486 = vsel %vm4485, %v4478, %v4482
        %v4487 = vand.u32 2147483647, %v4362
        %vm4488 = vcmp.eq.f32.partialorder %v4487, 8.507059e+37
        %v4489 = vand.u32 %v4362, 2147483648
        %v4490 = vor.u32 1.1754944e-38, %v4489
        %v4491 = vsel %vm4488, %v4490, %v4486
        %v4492 = vmul.f32 1.0, %v4491
        %v4493 = vrcp.pop %v4363
        %v4494 = vmul.f32 %v4363, %v4493
        %v4495 = vsub.f32 1.0, %v4494
        %v4496 = vmul.f32 %v4493, %v4495
        %v4497 = vadd.f32 %v4493, %v4496
        %vm4498 = vweird.f32 %v4363
        %vm4499 = vweird.f32 %v4493
        %vm4500 = vmor %vm4498, %vm4499
        %v4501 = vsel %vm4500, %v4493, %v4497
        %v4502 = vand.u32 2147483647, %v4363
        %vm4503 = vcmp.eq.f32.partialorder %v4502, 8.507059e+37
        %v4504 = vand.u32 %v4363, 2147483648
        %v4505 = vor.u32 1.1754944e-38, %v4504
        %v4506 = vsel %vm4503, %v4505, %v4501
        %v4507 = vmul.f32 1.0, %v4506
        %v4508 = vrcp.pop %v4364
        %v4509 = vmul.f32 %v4364, %v4508
        %v4510 = vsub.f32 1.0, %v4509
        %v4511 = vmul.f32 %v4508, %v4510
        %v4512 = vadd.f32 %v4508, %v4511
        %vm4513 = vweird.f32 %v4364
        %vm4514 = vweird.f32 %v4508
        %vm4515 = vmor %vm4513, %vm4514
        %v4516 = vsel %vm4515, %v4508, %v4512
        %v4517 = vand.u32 2147483647, %v4364
        %vm4518 = vcmp.eq.f32.partialorder %v4517, 8.507059e+37
        %v4519 = vand.u32 %v4364, 2147483648
        %v4520 = vor.u32 1.1754944e-38, %v4519
        %v4521 = vsel %vm4518, %v4520, %v4516
        %v4522 = vmul.f32 1.0, %v4521
        %v4523 = vrcp.pop %v4365
        %v4524 = vmul.f32 %v4365, %v4523
        %v4525 = vsub.f32 1.0, %v4524
        %v4526 = vmul.f32 %v4523, %v4525
        %v4527 = vadd.f32 %v4523, %v4526
        %vm4528 = vweird.f32 %v4365
        %vm4529 = vweird.f32 %v4523
        %vm4530 = vmor %vm4528, %vm4529
        %v4531 = vsel %vm4530, %v4523, %v4527
        %v4532 = vand.u32 2147483647, %v4365
        %vm4533 = vcmp.eq.f32.partialorder %v4532, 8.507059e+37
        %v4534 = vand.u32 %v4365, 2147483648
        %v4535 = vor.u32 1.1754944e-38, %v4534
        %v4536 = vsel %vm4533, %v4535, %v4531
        %v4537 = vmul.f32 1.0, %v4536
        %v4538 = vrcp.pop %v4366
        %v4539 = vmul.f32 %v4366, %v4538
        %v4540 = vsub.f32 1.0, %v4539
        %v4541 = vmul.f32 %v4538, %v4540
        %v4542 = vadd.f32 %v4538, %v4541
        %vm4543 = vweird.f32 %v4366
        %vm4544 = vweird.f32 %v4538
        %vm4545 = vmor %vm4543, %vm4544
        %v4546 = vsel %vm4545, %v4538, %v4542
        %v4547 = vand.u32 2147483647, %v4366
        %vm4548 = vcmp.eq.f32.partialorder %v4547, 8.507059e+37
        %v4549 = vand.u32 %v4366, 2147483648
        %v4550 = vor.u32 1.1754944e-38, %v4549
        %v4551 = vsel %vm4548, %v4550, %v4546
        %v4552 = vmul.f32 1.0, %v4551
        %v4553 = vrcp.pop %v4367
        %v4554 = vmul.f32 %v4367, %v4553
        %v4555 = vsub.f32 1.0, %v4554
        %v4556 = vmul.f32 %v4553, %v4555
        %v4557 = vadd.f32 %v4553, %v4556
        %vm4558 = vweird.f32 %v4367
        %vm4559 = vweird.f32 %v4553
        %vm4560 = vmor %vm4558, %vm4559
        %v4561 = vsel %vm4560, %v4553, %v4557
        %v4562 = vand.u32 2147483647, %v4367
        %vm4563 = vcmp.eq.f32.partialorder %v4562, 8.507059e+37
        %v4564 = vand.u32 %v4367, 2147483648
        %v4565 = vor.u32 1.1754944e-38, %v4564
        %v4566 = vsel %vm4563, %v4565, %v4561
        %v4567 = vmul.f32 1.0, %v4566
        %v4568 = vrcp.pop %v4368
        %v4569 = vmul.f32 %v4368, %v4568
        %v4570 = vsub.f32 1.0, %v4569
        %v4571 = vmul.f32 %v4568, %v4570
        %v4572 = vadd.f32 %v4568, %v4571
        %vm4573 = vweird.f32 %v4368
        %vm4574 = vweird.f32 %v4568
        %vm4575 = vmor %vm4573, %vm4574
        %v4576 = vsel %vm4575, %v4568, %v4572
        %v4577 = vand.u32 2147483647, %v4368
        %vm4578 = vcmp.eq.f32.partialorder %v4577, 8.507059e+37
        %v4579 = vand.u32 %v4368, 2147483648
        %v4580 = vor.u32 1.1754944e-38, %v4579
        %v4581 = vsel %vm4578, %v4580, %v4576
        %v4582 = vmul.f32 1.0, %v4581
        %v4583 = vrcp.pop %v4369
        %v4584 = vmul.f32 %v4369, %v4583
        %v4585 = vsub.f32 1.0, %v4584
        %v4586 = vmul.f32 %v4583, %v4585
        %v4587 = vadd.f32 %v4583, %v4586
        %vm4588 = vweird.f32 %v4369
        %vm4589 = vweird.f32 %v4583
        %vm4590 = vmor %vm4588, %vm4589
        %v4591 = vsel %vm4590, %v4583, %v4587
        %v4592 = vand.u32 2147483647, %v4369
        %vm4593 = vcmp.eq.f32.partialorder %v4592, 8.507059e+37
        %v4594 = vand.u32 %v4369, 2147483648
        %v4595 = vor.u32 1.1754944e-38, %v4594
        %v4596 = vsel %vm4593, %v4595, %v4591
        %v4597 = vmul.f32 1.0, %v4596
        %v4598 = vrcp.pop %v4370
        %v4599 = vmul.f32 %v4370, %v4598
        %v4600 = vsub.f32 1.0, %v4599
        %v4601 = vmul.f32 %v4598, %v4600
        %v4602 = vadd.f32 %v4598, %v4601
        %vm4603 = vweird.f32 %v4370
        %vm4604 = vweird.f32 %v4598
        %vm4605 = vmor %vm4603, %vm4604
        %v4606 = vsel %vm4605, %v4598, %v4602
        %v4607 = vand.u32 2147483647, %v4370
        %vm4608 = vcmp.eq.f32.partialorder %v4607, 8.507059e+37
        %v4609 = vand.u32 %v4370, 2147483648
        %v4610 = vor.u32 1.1754944e-38, %v4609
        %v4611 = vsel %vm4608, %v4610, %v4606
        %v4612 = vmul.f32 1.0, %v4611
        %v4613 = vrcp.pop %v4371
        %v4614 = vmul.f32 %v4371, %v4613
        %v4615 = vsub.f32 1.0, %v4614
        %v4616 = vmul.f32 %v4613, %v4615
        %v4617 = vadd.f32 %v4613, %v4616
        %vm4618 = vweird.f32 %v4371
        %vm4619 = vweird.f32 %v4613
        %vm4620 = vmor %vm4618, %vm4619
        %v4621 = vsel %vm4620, %v4613, %v4617
        %v4622 = vand.u32 2147483647, %v4371
        %vm4623 = vcmp.eq.f32.partialorder %v4622, 8.507059e+37
        %v4624 = vand.u32 %v4371, 2147483648
        %v4625 = vor.u32 1.1754944e-38, %v4624
        %v4626 = vsel %vm4623, %v4625, %v4621
        %v4627 = vmul.f32 1.0, %v4626
        %v4628 = vrcp.pop %v4372
        %v4629 = vmul.f32 %v4372, %v4628
        %v4630 = vsub.f32 1.0, %v4629
        %v4631 = vmul.f32 %v4628, %v4630
        %v4632 = vadd.f32 %v4628, %v4631
        %vm4633 = vweird.f32 %v4372
        %vm4634 = vweird.f32 %v4628
        %vm4635 = vmor %vm4633, %vm4634
        %v4636 = vsel %vm4635, %v4628, %v4632
        %v4637 = vand.u32 2147483647, %v4372
        %vm4638 = vcmp.eq.f32.partialorder %v4637, 8.507059e+37
        %v4639 = vand.u32 %v4372, 2147483648
        %v4640 = vor.u32 1.1754944e-38, %v4639
        %v4641 = vsel %vm4638, %v4640, %v4636
        %v4642 = vmul.f32 1.0, %v4641
        %v4643 = vrcp.pop %v4373
        %v4644 = vmul.f32 %v4373, %v4643
        %v4645 = vsub.f32 1.0, %v4644
        %v4646 = vmul.f32 %v4643, %v4645
        %v4647 = vadd.f32 %v4643, %v4646
        %vm4648 = vweird.f32 %v4373
        %vm4649 = vweird.f32 %v4643
        %vm4650 = vmor %vm4648, %vm4649
        %v4651 = vsel %vm4650, %v4643, %v4647
        %v4652 = vand.u32 2147483647, %v4373
        %vm4653 = vcmp.eq.f32.partialorder %v4652, 8.507059e+37
        %v4654 = vand.u32 %v4373, 2147483648
        %v4655 = vor.u32 1.1754944e-38, %v4654
        %v4656 = vsel %vm4653, %v4655, %v4651
        %v4657 = vmul.f32 1.0, %v4656
        %v4658 = vrcp.pop %v4374
        %v4659 = vmul.f32 %v4374, %v4658
        %v4660 = vsub.f32 1.0, %v4659
        %v4661 = vmul.f32 %v4658, %v4660
        %v4662 = vadd.f32 %v4658, %v4661
        %vm4663 = vweird.f32 %v4374
        %vm4664 = vweird.f32 %v4658
        %vm4665 = vmor %vm4663, %vm4664
        %v4666 = vsel %vm4665, %v4658, %v4662
        %v4667 = vand.u32 2147483647, %v4374
        %vm4668 = vcmp.eq.f32.partialorder %v4667, 8.507059e+37
        %v4669 = vand.u32 %v4374, 2147483648
        %v4670 = vor.u32 1.1754944e-38, %v4669
        %v4671 = vsel %vm4668, %v4670, %v4666
        %v4672 = vmul.f32 1.0, %v4671
        %v4673 = vrcp.pop %v4375
        %v4674 = vmul.f32 %v4375, %v4673
        %v4675 = vsub.f32 1.0, %v4674
        %v4676 = vmul.f32 %v4673, %v4675
        %v4677 = vadd.f32 %v4673, %v4676
        %vm4678 = vweird.f32 %v4375
        %vm4679 = vweird.f32 %v4673
        %vm4680 = vmor %vm4678, %vm4679
        %v4681 = vsel %vm4680, %v4673, %v4677
        %v4682 = vand.u32 2147483647, %v4375
        %vm4683 = vcmp.eq.f32.partialorder %v4682, 8.507059e+37
        %v4684 = vand.u32 %v4375, 2147483648
        %v4685 = vor.u32 1.1754944e-38, %v4684
        %v4686 = vsel %vm4683, %v4685, %v4681
        %v4687 = vmul.f32 1.0, %v4686
        %v4688 = vrcp.pop %v4376
        %v4689 = vmul.f32 %v4376, %v4688
        %v4690 = vsub.f32 1.0, %v4689
        %v4691 = vmul.f32 %v4688, %v4690
        %v4692 = vadd.f32 %v4688, %v4691
        %vm4693 = vweird.f32 %v4376
        %vm4694 = vweird.f32 %v4688
        %vm4695 = vmor %vm4693, %vm4694
        %v4696 = vsel %vm4695, %v4688, %v4692
        %v4697 = vand.u32 2147483647, %v4376
        %vm4698 = vcmp.eq.f32.partialorder %v4697, 8.507059e+37
        %v4699 = vand.u32 %v4376, 2147483648
        %v4700 = vor.u32 1.1754944e-38, %v4699
        %v4701 = vsel %vm4698, %v4700, %v4696
        %v4702 = vmul.f32 1.0, %v4701
        %v4703 = vrcp.pop %v4377
        %v4704 = vmul.f32 %v4377, %v4703
        %v4705 = vsub.f32 1.0, %v4704
        %v4706 = vmul.f32 %v4703, %v4705
        %v4707 = vadd.f32 %v4703, %v4706
        %vm4708 = vweird.f32 %v4377
        %vm4709 = vweird.f32 %v4703
        %vm4710 = vmor %vm4708, %vm4709
        %v4711 = vsel %vm4710, %v4703, %v4707
        %v4712 = vand.u32 2147483647, %v4377
        %vm4713 = vcmp.eq.f32.partialorder %v4712, 8.507059e+37
        %v4714 = vand.u32 %v4377, 2147483648
        %v4715 = vor.u32 1.1754944e-38, %v4714
        %v4716 = vsel %vm4713, %v4715, %v4711
        %v4717 = vmul.f32 1.0, %v4716
        %v4718 = vrcp.pop %v4378
        %v4719 = vmul.f32 %v4378, %v4718
        %v4720 = vsub.f32 1.0, %v4719
        %v4721 = vmul.f32 %v4718, %v4720
        %v4722 = vadd.f32 %v4718, %v4721
        %vm4723 = vweird.f32 %v4378
        %vm4724 = vweird.f32 %v4718
        %vm4725 = vmor %vm4723, %vm4724
        %v4726 = vsel %vm4725, %v4718, %v4722
        %v4727 = vand.u32 2147483647, %v4378
        %vm4728 = vcmp.eq.f32.partialorder %v4727, 8.507059e+37
        %v4729 = vand.u32 %v4378, 2147483648
        %v4730 = vor.u32 1.1754944e-38, %v4729
        %v4731 = vsel %vm4728, %v4730, %v4726
        %v4732 = vmul.f32 1.0, %v4731
        %v4733 = vrcp.pop %v4379
        %v4734 = vmul.f32 %v4379, %v4733
        %v4735 = vsub.f32 1.0, %v4734
        %v4736 = vmul.f32 %v4733, %v4735
        %v4737 = vadd.f32 %v4733, %v4736
        %vm4738 = vweird.f32 %v4379
        %vm4739 = vweird.f32 %v4733
        %vm4740 = vmor %vm4738, %vm4739
        %v4741 = vsel %vm4740, %v4733, %v4737
        %v4742 = vand.u32 2147483647, %v4379
        %vm4743 = vcmp.eq.f32.partialorder %v4742, 8.507059e+37
        %v4744 = vand.u32 %v4379, 2147483648
        %v4745 = vor.u32 1.1754944e-38, %v4744
        %v4746 = vsel %vm4743, %v4745, %v4741
        %v4747 = vmul.f32 1.0, %v4746
        %v4748 = vrcp.pop %v4380
        %v4749 = vmul.f32 %v4380, %v4748
        %v4750 = vsub.f32 1.0, %v4749
        %v4751 = vmul.f32 %v4748, %v4750
        %v4752 = vadd.f32 %v4748, %v4751
        %vm4753 = vweird.f32 %v4380
        %vm4754 = vweird.f32 %v4748
        %vm4755 = vmor %vm4753, %vm4754
        %v4756 = vsel %vm4755, %v4748, %v4752
        %v4757 = vand.u32 2147483647, %v4380
        %vm4758 = vcmp.eq.f32.partialorder %v4757, 8.507059e+37
        %v4759 = vand.u32 %v4380, 2147483648
        %v4760 = vor.u32 1.1754944e-38, %v4759
        %v4761 = vsel %vm4758, %v4760, %v4756
        %v4762 = vmul.f32 1.0, %v4761
        %v4763 = vrcp.pop %v4381
        %v4764 = vmul.f32 %v4381, %v4763
        %v4765 = vsub.f32 1.0, %v4764
        %v4766 = vmul.f32 %v4763, %v4765
        %v4767 = vadd.f32 %v4763, %v4766
        %vm4768 = vweird.f32 %v4381
        %vm4769 = vweird.f32 %v4763
        %vm4770 = vmor %vm4768, %vm4769
        %v4771 = vsel %vm4770, %v4763, %v4767
        %v4772 = vand.u32 2147483647, %v4381
        %vm4773 = vcmp.eq.f32.partialorder %v4772, 8.507059e+37
        %v4774 = vand.u32 %v4381, 2147483648
        %v4775 = vor.u32 1.1754944e-38, %v4774
        %v4776 = vsel %vm4773, %v4775, %v4771
        %v4777 = vmul.f32 1.0, %v4776
        %v4778 = vrcp.pop %v4382
        %v4779 = vmul.f32 %v4382, %v4778
        %v4780 = vsub.f32 1.0, %v4779
        %v4781 = vmul.f32 %v4778, %v4780
        %v4782 = vadd.f32 %v4778, %v4781
        %vm4783 = vweird.f32 %v4382
        %vm4784 = vweird.f32 %v4778
        %vm4785 = vmor %vm4783, %vm4784
        %v4786 = vsel %vm4785, %v4778, %v4782
        %v4787 = vand.u32 2147483647, %v4382
        %vm4788 = vcmp.eq.f32.partialorder %v4787, 8.507059e+37
        %v4789 = vand.u32 %v4382, 2147483648
        %v4790 = vor.u32 1.1754944e-38, %v4789
        %v4791 = vsel %vm4788, %v4790, %v4786
        %v4792 = vmul.f32 1.0, %v4791
        %v4793 = vrcp.pop %v4383
        %v4794 = vmul.f32 %v4383, %v4793
        %v4795 = vsub.f32 1.0, %v4794
        %v4796 = vmul.f32 %v4793, %v4795
        %v4797 = vadd.f32 %v4793, %v4796
        %vm4798 = vweird.f32 %v4383
        %vm4799 = vweird.f32 %v4793
        %vm4800 = vmor %vm4798, %vm4799
        %v4801 = vsel %vm4800, %v4793, %v4797
        %v4802 = vand.u32 2147483647, %v4383
        %vm4803 = vcmp.eq.f32.partialorder %v4802, 8.507059e+37
        %v4804 = vand.u32 %v4383, 2147483648
        %v4805 = vor.u32 1.1754944e-38, %v4804
        %v4806 = vsel %vm4803, %v4805, %v4801
        %v4807 = vmul.f32 1.0, %v4806
        %v4808 = vrcp.pop %v4384
        %v4809 = vmul.f32 %v4384, %v4808
        %v4810 = vsub.f32 1.0, %v4809
        %v4811 = vmul.f32 %v4808, %v4810
        %v4812 = vadd.f32 %v4808, %v4811
        %vm4813 = vweird.f32 %v4384
        %vm4814 = vweird.f32 %v4808
        %vm4815 = vmor %vm4813, %vm4814
        %v4816 = vsel %vm4815, %v4808, %v4812
        %v4817 = vand.u32 2147483647, %v4384
        %vm4818 = vcmp.eq.f32.partialorder %v4817, 8.507059e+37
        %v4819 = vand.u32 %v4384, 2147483648
        %v4820 = vor.u32 1.1754944e-38, %v4819
        %v4821 = vsel %vm4818, %v4820, %v4816
        %v4822 = vmul.f32 1.0, %v4821
        %v4823 = vrcp.pop %v4385
        %v4824 = vmul.f32 %v4385, %v4823
        %v4825 = vsub.f32 1.0, %v4824
        %v4826 = vmul.f32 %v4823, %v4825
        %v4827 = vadd.f32 %v4823, %v4826
        %vm4828 = vweird.f32 %v4385
        %vm4829 = vweird.f32 %v4823
        %vm4830 = vmor %vm4828, %vm4829
        %v4831 = vsel %vm4830, %v4823, %v4827
        %v4832 = vand.u32 2147483647, %v4385
        %vm4833 = vcmp.eq.f32.partialorder %v4832, 8.507059e+37
        %v4834 = vand.u32 %v4385, 2147483648
        %v4835 = vor.u32 1.1754944e-38, %v4834
        %v4836 = vsel %vm4833, %v4835, %v4831
        %v4837 = vmul.f32 1.0, %v4836
        %v4838 = vrcp.pop %v4386
        %v4839 = vmul.f32 %v4386, %v4838
        %v4840 = vsub.f32 1.0, %v4839
        %v4841 = vmul.f32 %v4838, %v4840
        %v4842 = vadd.f32 %v4838, %v4841
        %vm4843 = vweird.f32 %v4386
        %vm4844 = vweird.f32 %v4838
        %vm4845 = vmor %vm4843, %vm4844
        %v4846 = vsel %vm4845, %v4838, %v4842
        %v4847 = vand.u32 2147483647, %v4386
        %vm4848 = vcmp.eq.f32.partialorder %v4847, 8.507059e+37
        %v4849 = vand.u32 %v4386, 2147483648
        %v4850 = vor.u32 1.1754944e-38, %v4849
        %v4851 = vsel %vm4848, %v4850, %v4846
        %v4852 = vmul.f32 1.0, %v4851
        %v4853 = vrcp.pop %v4387
        %v4854 = vmul.f32 %v4387, %v4853
        %v4855 = vsub.f32 1.0, %v4854
        %v4856 = vmul.f32 %v4853, %v4855
        %v4857 = vadd.f32 %v4853, %v4856
        %vm4858 = vweird.f32 %v4387
        %vm4859 = vweird.f32 %v4853
        %vm4860 = vmor %vm4858, %vm4859
        %v4861 = vsel %vm4860, %v4853, %v4857
        %v4862 = vand.u32 2147483647, %v4387
        %vm4863 = vcmp.eq.f32.partialorder %v4862, 8.507059e+37
        %v4864 = vand.u32 %v4387, 2147483648
        %v4865 = vor.u32 1.1754944e-38, %v4864
        %v4866 = vsel %vm4863, %v4865, %v4861
        %v4867 = vmul.f32 1.0, %v4866
        %4868 = vst [vmem:[%s224] sm:$0xff] %v1220
        %4869 = vst [vmem:[%s224 + $0x18] sm:$0xff] %v1235
        %4870 = vst [vmem:[%s224 + $0x30] sm:$0xff] %v1250
        %4871 = vst [vmem:[%s224 + $0x48] sm:$0xff] %v1265
        %4872 = vst [vmem:[%s224 + $0x60] sm:$0xff] %v1280
        %4873 = vst [vmem:[%s224 + $0x78] sm:$0xff] %v1295
        %4874 = vst [vmem:[%s224 + $0x90] sm:$0xff] %v1310
        %4875 = vst [vmem:[%s224 + $0xa8] sm:$0xff] %v1325
        %4876 = vst [vmem:[%s224 + $0xc0] sm:$0xff] %v1340
        %4877 = vst [vmem:[%s224 + $0xd8] sm:$0xff] %v1355
        %4878 = vst [vmem:[%s224 + $0xf0] sm:$0xff] %v1370
        %4879 = vst [vmem:[%s224 + $0x108] sm:$0xff] %v1385
        %4880 = vst [vmem:[%s224 + $0x120] sm:$0xff] %v1400
        %4881 = vst [vmem:[%s224 + $0x138] sm:$0xff] %v1415
        %4882 = vst [vmem:[%s224 + $0x150] sm:$0xff] %v1430
        %4883 = vst [vmem:[%s224 + $0x168] sm:$0xff] %v1445
        %4884 = vst [vmem:[%s224 + $0x180] sm:$0xff] %v1460
        %4885 = vst [vmem:[%s224 + $0x198] sm:$0xff] %v1475
        %4886 = vst [vmem:[%s224 + $0x1b0] sm:$0xff] %v1490
        %4887 = vst [vmem:[%s224 + $0x1c8] sm:$0xff] %v1505
        %4888 = vst [vmem:[%s224 + $0x1e0] sm:$0xff] %v1520
        %4889 = vst [vmem:[%s224 + $0x1f8] sm:$0xff] %v1535
        %4890 = vst [vmem:[%s224 + $0x210] sm:$0xff] %v1550
        %4891 = vst [vmem:[%s224 + $0x228] sm:$0xff] %v1565
        %4892 = vst [vmem:[%s224 + $0x240] sm:$0xff] %v1580
        %4893 = vst [vmem:[%s224 + $0x258] sm:$0xff] %v1595
        %4894 = vst [vmem:[%s224 + $0x270] sm:$0xff] %v1610
        %4895 = vst [vmem:[%s224 + $0x288] sm:$0xff] %v1625
        %4896 = vst [vmem:[%s224 + $0x2a0] sm:$0xff] %v1640
        %4897 = vst [vmem:[%s224 + $0x2b8] sm:$0xff] %v1655
        %4898 = vst [vmem:[%s224 + $0x2d0] sm:$0xff] %v1670
        %4899 = vst [vmem:[%s224 + $0x2e8] sm:$0xff] %v1685
        %4900 = vst [vmem:[%s224 + $0x8] sm:$0xff] %v4402
        %4901 = vst [vmem:[%s224 + $0x20] sm:$0xff] %v4417
        %4902 = vst [vmem:[%s224 + $0x38] sm:$0xff] %v4432
        %4903 = vst [vmem:[%s224 + $0x50] sm:$0xff] %v4447
        %4904 = vst [vmem:[%s224 + $0x68] sm:$0xff] %v4462
        %4905 = vst [vmem:[%s224 + $0x80] sm:$0xff] %v4477
        %4906 = vst [vmem:[%s224 + $0x98] sm:$0xff] %v4492
        %4907 = vst [vmem:[%s224 + $0xb0] sm:$0xff] %v4507
        %4908 = vst [vmem:[%s224 + $0xc8] sm:$0xff] %v4522
        %4909 = vst [vmem:[%s224 + $0xe0] sm:$0xff] %v4537
        %4910 = vst [vmem:[%s224 + $0xf8] sm:$0xff] %v4552
        %4911 = vst [vmem:[%s224 + $0x110] sm:$0xff] %v4567
        %4912 = vst [vmem:[%s224 + $0x128] sm:$0xff] %v4582
        %4913 = vst [vmem:[%s224 + $0x140] sm:$0xff] %v4597
        %4914 = vst [vmem:[%s224 + $0x158] sm:$0xff] %v4612
        %4915 = vst [vmem:[%s224 + $0x170] sm:$0xff] %v4627
        %4916 = vst [vmem:[%s224 + $0x188] sm:$0xff] %v4642
        %4917 = vst [vmem:[%s224 + $0x1a0] sm:$0xff] %v4657
        %4918 = vst [vmem:[%s224 + $0x1b8] sm:$0xff] %v4672
        %4919 = vst [vmem:[%s224 + $0x1d0] sm:$0xff] %v4687
        %4920 = vst [vmem:[%s224 + $0x1e8] sm:$0xff] %v4702
        %4921 = vst [vmem:[%s224 + $0x200] sm:$0xff] %v4717
        %4922 = vst [vmem:[%s224 + $0x218] sm:$0xff] %v4732
        %4923 = vst [vmem:[%s224 + $0x230] sm:$0xff] %v4747
        %4924 = vst [vmem:[%s224 + $0x248] sm:$0xff] %v4762
        %4925 = vst [vmem:[%s224 + $0x260] sm:$0xff] %v4777
        %4926 = vst [vmem:[%s224 + $0x278] sm:$0xff] %v4792
        %4927 = vst [vmem:[%s224 + $0x290] sm:$0xff] %v4807
        %4928 = vst [vmem:[%s224 + $0x2a8] sm:$0xff] %v4822
        %4929 = vst [vmem:[%s224 + $0x2c0] sm:$0xff] %v4837
        %4930 = vst [vmem:[%s224 + $0x2d8] sm:$0xff] %v4852
        %4931 = vst [vmem:[%s224 + $0x2f0] sm:$0xff] %v4867
        %4932 = vst [vmem:[%s224 + $0x10] sm:$0xff] %v2484
        %4933 = vst [vmem:[%s224 + $0x28] sm:$0xff] %v2499
        %4934 = vst [vmem:[%s224 + $0x40] sm:$0xff] %v2514
        %4935 = vst [vmem:[%s224 + $0x58] sm:$0xff] %v2529
        %4936 = vst [vmem:[%s224 + $0x70] sm:$0xff] %v2544
        %4937 = vst [vmem:[%s224 + $0x88] sm:$0xff] %v2559
        %4938 = vst [vmem:[%s224 + $0xa0] sm:$0xff] %v2574
        %4939 = vst [vmem:[%s224 + $0xb8] sm:$0xff] %v2589
        %4940 = vst [vmem:[%s224 + $0xd0] sm:$0xff] %v2604
        %4941 = vst [vmem:[%s224 + $0xe8] sm:$0xff] %v2619
        %4942 = vst [vmem:[%s224 + $0x100] sm:$0xff] %v2634
        %4943 = vst [vmem:[%s224 + $0x118] sm:$0xff] %v2649
        %4944 = vst [vmem:[%s224 + $0x130] sm:$0xff] %v2664
        %4945 = vst [vmem:[%s224 + $0x148] sm:$0xff] %v2679
        %4946 = vst [vmem:[%s224 + $0x160] sm:$0xff] %v2694
        %4947 = vst [vmem:[%s224 + $0x178] sm:$0xff] %v2709
        %4948 = vst [vmem:[%s224 + $0x190] sm:$0xff] %v2724
        %4949 = vst [vmem:[%s224 + $0x1a8] sm:$0xff] %v2739
        %4950 = vst [vmem:[%s224 + $0x1c0] sm:$0xff] %v2754
        %4951 = vst [vmem:[%s224 + $0x1d8] sm:$0xff] %v2769
        %4952 = vst [vmem:[%s224 + $0x1f0] sm:$0xff] %v2784
        %4953 = vst [vmem:[%s224 + $0x208] sm:$0xff] %v2799
        %4954 = vst [vmem:[%s224 + $0x220] sm:$0xff] %v2814
        %4955 = vst [vmem:[%s224 + $0x238] sm:$0xff] %v2829
        %4956 = vst [vmem:[%s224 + $0x250] sm:$0xff] %v2844
        %4957 = vst [vmem:[%s224 + $0x268] sm:$0xff] %v2859
        %4958 = vst [vmem:[%s224 + $0x280] sm:$0xff] %v2874
        %4959 = vst [vmem:[%s224 + $0x298] sm:$0xff] %v2889
        %4960 = vst [vmem:[%s224 + $0x2b0] sm:$0xff] %v2904
        %4961 = vst [vmem:[%s224 + $0x2c8] sm:$0xff] %v2919
        %4962 = vst [vmem:[%s224 + $0x2e0] sm:$0xff] %v2934
        %4963 = vst [vmem:[%s224 + $0x2f8] sm:$0xff] %v2949
        %s4964 = sand.u32 %s97, 1
        %s4965 = scalar_lea.sflag [#allocation4], %s4964
        %s4966 = sand.u32 %s97, 1
        %s4967 = smul.addr %s4966, 768
        %s4968 = scalar_lea.vmem [#allocation8], %s4967
        // Predicated region
        $region45: #{tpu_custom_call.1} parent=31 // pred_check
          %p4969 = pneg %p107
        $region46: #{tpu_custom_call.1} parent=31 // pred_check_branch
          %4971 = sbr.rel (%p4969) target = $region48
        $region47: #{tpu_custom_call.1} parent=31 // pred_region
          %s4972 = smul.u32 32, %s21
          %4974 = vsyncadd %s4965, 0
          %s4975 = smul.addr %s4972, 3
          %s4976 = smul.addr %s4975, 8
          %s4977 = scalar_lea.hbm %s3, %s4976
          %s4978 = sshll.u32 %s4968, 4
          %s4979 = int_to_ptr.vmem [resolvable:$true] %s4978
          %s4980 = sshll.u32 %s4977, 4
          %s4981 = int_to_ptr.hbm [resolvable:$true] %s4980
          %4986 = dma.vmem_to_hbm [thread:$0]  %s4979, 12288, %s4981, %s4965, 384, 384, 24
        $region48: #{tpu_custom_call.1} parent=31 // pred_fallthru
          _
      $region32: #{tpu_custom_call.1} parent=5 // pred_fallthru
        _
      %p4987 = scmp.le.s32.totalorder 2, %s16
      // Predicated region
      $region49: #{tpu_custom_call.1} parent=5 // pred_check
        %p4988 = pneg %p4987
      $region50: #{tpu_custom_call.1} parent=5 // pred_check_branch
        %4990 = sbr.rel (%p4988) target = $region52
      $region51: #{tpu_custom_call.1} parent=5 // pred_region
        %s4991 = ssub.s32 %s16, 2
        // Predicated region
        $region53: #{tpu_custom_call.1} parent=51 // pred_check
          %p4992 = pneg %p113
        $region54: #{tpu_custom_call.1} parent=51 // pred_check_branch
          %4994 = sbr.rel (%p4992) target = $region56
        $region55: #{tpu_custom_call.1} parent=51 // pred_region
          %s4995 = sand.u32 %s98, 1
          %s4996 = scalar_lea.sflag [#allocation4], %s4995
          %s4997 = sand.u32 %s98, 1
          %s4998 = smul.addr %s4997, 768
          %s4999 = scalar_lea.vmem [#allocation8], %s4998
          %5001 = dma.done %s4996, 12288
        $region56: #{tpu_custom_call.1} parent=51 // pred_fallthru
          _
      $region52: #{tpu_custom_call.1} parent=5 // pred_fallthru
        _
    $region6: #{tpu_custom_call.1} parent=1 // loop_footer
      %s20 = sadd.s32 1, %s16
    $region7: #{tpu_custom_call.1} parent=1 // loop_footer_branch
      %15 = sbr.rel target = $region3
    $region8: #{tpu_custom_call.1} parent=1 // loop_exit
      _
    %5002 = vsyncpa [#allocation3], 1
    %s5003 = scalar_lea.sflag [#allocation3], 1
    %5004 = vsyncpa %s5003, 1
    %5005 = vsyncpa [#allocation6], 1
    %5006 = vsyncpa [#allocation4], 1
    %s5007 = scalar_lea.sflag [#allocation4], 1
    %5008 = vsyncpa %s5007, 1

</llo_original>
